<compile_context>
chip_gen: v7x
topology: tpu7x:2x2x1
jax: 0.10.0
libtpu: 0.0.40
codegen_flags: <defaults>
</compile_context>

<pallas_src>
import functools

import jax
import jax.numpy as jnp
from jax import lax
from jax.experimental import pallas as pl
from jax.experimental.pallas import tpu as pltpu

LANES = 128          # output/lane padding target
MAX_TM = 512         # max row-tile (keeps tiles near HBM roofline, small VMEM)

_COMPILER_PARAMS = pltpu.CompilerParams(
    dimension_semantics=("parallel",),
    vmem_limit_bytes=32 * 1024 * 1024,
)


def _round_up(x, m):
    return (x + m - 1) // m * m


def _pick_row_tile(m):
    """Row-tile size (multiple of 8, <= MAX_TM) and padded M."""
    tm = min(MAX_TM, _round_up(m, 8))
    m_pad = _round_up(m, tm)
    return tm, m_pad


def _pad_rows(x, m_pad):
    m = x.shape[0]
    if m_pad == m:
        return x
    return jnp.pad(x, ((0, m_pad - m), (0, 0)))


def _pad_cols(x, n_pad):
    n = x.shape[-1]
    if n_pad == n:
        return x
    return jnp.pad(x, ((0, 0), (0, n_pad - n)))


# ----------------------------- Pallas kernels ------------------------------

def _conv_pool_kernel(t00_ref, t01_ref, t10_ref, t11_ref, w_ref, b_ref, o_ref):
    """Fused conv(as matmul on im2col taps) + 2x2 maxpool + bias + ReLU.

    Each tap tXY is the im2col patch matrix for pool-window position (X, Y).
    relu(max_i(conv_i) + b) == max_i(relu(conv_i + b)) since bias is shared
    across the window and ReLU is monotone.
    """
    w = w_ref[...]
    y = jnp.maximum(
        jnp.maximum(
            jnp.dot(t00_ref[...], w, preferred_element_type=jnp.float32),
            jnp.dot(t01_ref[...], w, preferred_element_type=jnp.float32)),
        jnp.maximum(
            jnp.dot(t10_ref[...], w, preferred_element_type=jnp.float32),
            jnp.dot(t11_ref[...], w, preferred_element_type=jnp.float32)))
    y = jnp.maximum(y + b_ref[...], 0.0)                      # f32 epilogue
    o_ref[...] = y.astype(o_ref.dtype)


def _fc_fused_kernel(x_ref, w1_ref, b1_ref, w2_ref, b2_ref, w3_ref, b3_ref,
                     o_ref, *, softmax, valid_out):
    """Fused fc1->ReLU->fc2->ReLU->fc3(+softmax). bf16 MXU inputs, f32 math."""
    h1 = jnp.dot(x_ref[...], w1_ref[...], preferred_element_type=jnp.float32)
    h1 = jnp.maximum(h1 + b1_ref[...], 0.0)
    h2 = jnp.dot(h1.astype(jnp.bfloat16), w2_ref[...],
                 preferred_element_type=jnp.float32)
    h2 = jnp.maximum(h2 + b2_ref[...], 0.0)
    y = jnp.dot(h2.astype(jnp.bfloat16), w3_ref[...],
                preferred_element_type=jnp.float32)
    y = y + b3_ref[...]
    if softmax:
        # Mask lane-padding columns so they don't pollute the row sums.
        col = lax.broadcasted_iota(jnp.int32, y.shape, 1)
        y = jnp.where(col < valid_out, y, -jnp.inf)
        m = jnp.max(y, axis=-1, keepdims=True)
        e = jnp.exp(y - m)
        y = e * pl.reciprocal(jnp.sum(e, axis=-1, keepdims=True), approx=True)
    o_ref[...] = y.astype(o_ref.dtype)


# ------------------------------- conv layer ---------------------------------

def conv3x3_relu_pool(x_nhwc, w_oihw, b):
    """Conv2d(3x3, pad=1) + ReLU + MaxPool(2,2), fused into one Pallas call."""
    n, h, w, cin = x_nhwc.shape
    cout = w_oihw.shape[0]
    ho, wo = h // 2, w // 2
    k = 9 * cin

    # im2col at full resolution, then split into the 4 pool-window taps.
    xp = jnp.pad(x_nhwc, ((0, 0), (1, 1), (1, 1), (0, 0)))
    cols = [xp[:, ky:ky + h, kx:kx + w, :] for ky in range(3) for kx in range(3)]
    patches = jnp.concatenate(cols, axis=-1)                  # (N, H, W, 9*Cin)

    m = n * ho * wo
    tm, m_pad = _pick_row_tile(m)
    taps = []
    for dy in range(2):
        for dx in range(2):
            t = patches[:, dy::2, dx::2, :].reshape(m, k)
            taps.append(_pad_rows(t.astype(jnp.bfloat16), m_pad))

    # Weight: OIHW -> (ky, kx, cin) x cout, lane-padded to 128, bf16 for MXU.
    w_mat = jnp.transpose(w_oihw, (2, 3, 1, 0)).reshape(k, cout)
    w_mat = _pad_cols(w_mat, LANES).astype(jnp.bfloat16)
    b_pad = _pad_cols(b.reshape(1, cout).astype(jnp.float32), LANES)

    out = pl.pallas_call(
        _conv_pool_kernel,
        out_shape=jax.ShapeDtypeStruct((m_pad, LANES), jnp.bfloat16),
        grid=(m_pad // tm,),
        in_specs=[pl.BlockSpec((tm, k), lambda i: (i, 0)) for _ in range(4)]
                 + [pl.BlockSpec((k, LANES), lambda i: (0, 0)),
                    pl.BlockSpec((1, LANES), lambda i: (0, 0))],
        out_specs=pl.BlockSpec((tm, LANES), lambda i: (i, 0)),
        compiler_params=_COMPILER_PARAMS,
    )(*taps, w_mat, b_pad)

    return out[:m, :cout].reshape(n, ho, wo, cout)


# --------------------------------- FC head ----------------------------------

def fc_head(x, p, apply_softmax):
    """Fused fc1/fc2/fc3 (+softmax).  x: (N, 784) flattened in PyTorch order."""
    n, k_in = x.shape
    tm, m_pad = _pick_row_tile(n)
    x_p = _pad_rows(x.astype(jnp.bfloat16), m_pad)

    # PyTorch weights are (out, in): transpose, zero-pad rows/cols to 128 lanes.
    w1 = _pad_cols(p["fc1_w"].T, LANES).astype(jnp.bfloat16)           # (784,128)
    w2 = jnp.pad(p["fc2_w"].T, ((0, LANES - 120), (0, LANES - 84))
                 ).astype(jnp.bfloat16)                                # (128,128)
    w3 = jnp.pad(p["fc3_w"].T, ((0, LANES - 84), (0, LANES - 10))
                 ).astype(jnp.bfloat16)                                # (128,128)
    b1 = _pad_cols(p["fc1_b"].reshape(1, -1).astype(jnp.float32), LANES)
    b2 = _pad_cols(p["fc2_b"].reshape(1, -1).astype(jnp.float32), LANES)
    b3 = _pad_cols(p["fc3_b"].reshape(1, -1).astype(jnp.float32), LANES)

    kernel = functools.partial(_fc_fused_kernel, softmax=apply_softmax,
                               valid_out=10)
    out = pl.pallas_call(
        kernel,
        out_shape=jax.ShapeDtypeStruct((m_pad, LANES), jnp.float32),
        grid=(m_pad // tm,),
        in_specs=[
            pl.BlockSpec((tm, k_in), lambda i: (i, 0)),
            pl.BlockSpec((k_in, LANES), lambda i: (0, 0)),
            pl.BlockSpec((1, LANES), lambda i: (0, 0)),
            pl.BlockSpec((LANES, LANES), lambda i: (0, 0)),
            pl.BlockSpec((1, LANES), lambda i: (0, 0)),
            pl.BlockSpec((LANES, LANES), lambda i: (0, 0)),
            pl.BlockSpec((1, LANES), lambda i: (0, 0)),
        ],
        out_specs=pl.BlockSpec((tm, LANES), lambda i: (i, 0)),
        compiler_params=_COMPILER_PARAMS,
    )(x_p, w1, b1, w2, b2, w3, b3)

    return out[:n, :10]


# ------------------------------- the model ---------------------------------

def init_params(key):
    ks = jax.random.split(key, 10)
    s = 0.05
    return {
        "conv1_w": jax.random.normal(ks[0], (6, 1, 3, 3), jnp.float32) * s,
        "conv1_b": jax.random.normal(ks[1], (6,), jnp.float32) * s,
        "conv2_w": jax.random.normal(ks[2], (16, 6, 3, 3), jnp.float32) * s,
        "conv2_b": jax.random.normal(ks[3], (16,), jnp.float32) * s,
        "fc1_w": jax.random.normal(ks[4], (120, 16 * 7 * 7), jnp.float32) * s,
        "fc1_b": jax.random.normal(ks[5], (120,), jnp.float32) * s,
        "fc2_w": jax.random.normal(ks[6], (84, 120), jnp.float32) * s,
        "fc2_b": jax.random.normal(ks[7], (84,), jnp.float32) * s,
        "fc3_w": jax.random.normal(ks[8], (10, 84), jnp.float32) * s,
        "fc3_b": jax.random.normal(ks[9], (10,), jnp.float32) * s,
    }


@functools.partial(jax.jit, static_argnames=("apply_softmax",))
def convnn_forward(params, x_nchw, apply_softmax=False):
    """Forward pass matching ConvNN.forward. Input is NCHW like PyTorch."""
    n = x_nchw.shape[0]
    x = jnp.transpose(x_nchw, (0, 2, 3, 1))                    # NCHW -> NHWC

    # conv1 + relu + pool : (N,28,28,1) -> (N,14,14,6)   [one Pallas call]
    x = conv3x3_relu_pool(x, params["conv1_w"], params["conv1_b"])
    # conv2 + relu + pool : (N,14,14,6) -> (N,7,7,16)    [one Pallas call]
    x = conv3x3_relu_pool(x, params["conv2_w"], params["conv2_b"])

    # flatten in PyTorch's C,H,W order (matches x.view(-1, 16*7*7))
    x = jnp.transpose(x, (0, 3, 1, 2)).reshape(n, 16 * 7 * 7)

    # fc1+relu -> dropout(identity) -> fc2+relu -> dropout(identity) -> fc3
    # (+softmax), all fused in one Pallas call.
    return fc_head(x, params, apply_softmax)


if __name__ == "__main__":
    key = jax.random.PRNGKey(0)
    pkey, xkey = jax.random.split(key)
    params = init_params(pkey)

    # fc1 expects 16*7*7 features => 28x28 single-channel input (MNIST-like).
    x = jax.random.normal(xkey, (2, 1, 28, 28), jnp.float32)

    logits = convnn_forward(params, x, apply_softmax=False)
    probs = convnn_forward(params, x, apply_softmax=True)
    jax.block_until_ready(logits)
    jax.block_until_ready(probs)

    assert logits.shape == (2, 10)
    assert probs.shape == (2, 10)
    print("KERNEL_OK")
</pallas_src>

<mosaic_0001>
module attributes {stable_mosaic.version = 11 : i64} {
  func.func @_conv_pool_kernel(%arg0: i32, %arg1: memref<392x9xbf16, #tpu.memory_space<vmem>>, %arg2: memref<392x9xbf16, #tpu.memory_space<vmem>>, %arg3: memref<392x9xbf16, #tpu.memory_space<vmem>>, %arg4: memref<392x9xbf16, #tpu.memory_space<vmem>>, %arg5: memref<9x128xbf16, #tpu.memory_space<vmem>>, %arg6: memref<1x128xf32, #tpu.memory_space<vmem>>, %arg7: memref<392x128xbf16, #tpu.memory_space<vmem>>) attributes {dimension_semantics = [#tpu.dimension_semantics<parallel>], iteration_bounds = array<i64: 1>, scalar_prefetch = 0 : i64, scratch_operands = 0 : i64, tpu.core_type = #tpu.core_type<tc>, window_params = [{transform_indices = @transform_0, window_bounds = array<i64: 392, 9>}, {transform_indices = @transform_1, window_bounds = array<i64: 392, 9>}, {transform_indices = @transform_2, window_bounds = array<i64: 392, 9>}, {transform_indices = @transform_3, window_bounds = array<i64: 392, 9>}, {pipeline_mode = #tpu.pipeline_mode<synchronous>, transform_indices = @transform_4, window_bounds = array<i64: 9, 128>}, {pipeline_mode = #tpu.pipeline_mode<synchronous>, transform_indices = @transform_5, window_bounds = array<i64: 1, 128>}, {transform_indices = @transform_6, window_bounds = array<i64: 392, 128>}]} {
    %c0 = arith.constant 0 : index
    %c0_0 = arith.constant 0 : index
    %0 = vector.load %arg5[%c0, %c0_0] : memref<9x128xbf16, #tpu.memory_space<vmem>>, vector<9x128xbf16>
    %c0_1 = arith.constant 0 : index
    %c0_2 = arith.constant 0 : index
    %1 = vector.load %arg1[%c0_1, %c0_2] : memref<392x9xbf16, #tpu.memory_space<vmem>>, vector<392x9xbf16>
    %cst = arith.constant dense<0.000000e+00> : vector<392x128xf32>
    %2 = tpu.matmul %1, %0, %cst {dimension_numbers = #tpu.dot_dimension_numbers<[1], [0], [0], [1], [0, 0, 1, 1], [], []>} : vector<392x9xbf16>, vector<9x128xbf16>, vector<392x128xf32> -> vector<392x128xf32>
    %c0_3 = arith.constant 0 : index
    %c0_4 = arith.constant 0 : index
    %3 = vector.load %arg2[%c0_3, %c0_4] : memref<392x9xbf16, #tpu.memory_space<vmem>>, vector<392x9xbf16>
    %cst_5 = arith.constant dense<0.000000e+00> : vector<392x128xf32>
    %4 = tpu.matmul %3, %0, %cst_5 {dimension_numbers = #tpu.dot_dimension_numbers<[1], [0], [0], [1], [0, 0, 1, 1], [], []>} : vector<392x9xbf16>, vector<9x128xbf16>, vector<392x128xf32> -> vector<392x128xf32>
    %5 = arith.maximumf %2, %4 : vector<392x128xf32>
    %c0_6 = arith.constant 0 : index
    %c0_7 = arith.constant 0 : index
    %6 = vector.load %arg3[%c0_6, %c0_7] : memref<392x9xbf16, #tpu.memory_space<vmem>>, vector<392x9xbf16>
    %cst_8 = arith.constant dense<0.000000e+00> : vector<392x128xf32>
    %7 = tpu.matmul %6, %0, %cst_8 {dimension_numbers = #tpu.dot_dimension_numbers<[1], [0], [0], [1], [0, 0, 1, 1], [], []>} : vector<392x9xbf16>, vector<9x128xbf16>, vector<392x128xf32> -> vector<392x128xf32>
    %c0_9 = arith.constant 0 : index
    %c0_10 = arith.constant 0 : index
    %8 = vector.load %arg4[%c0_9, %c0_10] : memref<392x9xbf16, #tpu.memory_space<vmem>>, vector<392x9xbf16>
    %cst_11 = arith.constant dense<0.000000e+00> : vector<392x128xf32>
    %9 = tpu.matmul %8, %0, %cst_11 {dimension_numbers = #tpu.dot_dimension_numbers<[1], [0], [0], [1], [0, 0, 1, 1], [], []>} : vector<392x9xbf16>, vector<9x128xbf16>, vector<392x128xf32> -> vector<392x128xf32>
    %10 = arith.maximumf %7, %9 : vector<392x128xf32>
    %11 = arith.maximumf %5, %10 : vector<392x128xf32>
    %c0_12 = arith.constant 0 : index
    %c0_13 = arith.constant 0 : index
    %12 = vector.load %arg6[%c0_12, %c0_13] : memref<1x128xf32, #tpu.memory_space<vmem>>, vector<1x128xf32>
    %13 = vector.broadcast %12 : vector<1x128xf32> to vector<392x128xf32>
    %14 = arith.addf %11, %13 : vector<392x128xf32>
    %cst_14 = arith.constant 0.000000e+00 : f32
    %15 = vector.broadcast %cst_14 : f32 to vector<392x128xf32>
    %16 = arith.maximumf %14, %15 : vector<392x128xf32>
    %17 = arith.truncf %16 : vector<392x128xf32> to vector<392x128xbf16>
    %c0_15 = arith.constant 0 : index
    %c0_16 = arith.constant 0 : index
    %18 = vector.load %arg7[%c0_15, %c0_16] : memref<392x128xbf16, #tpu.memory_space<vmem>>, vector<392x128xbf16>
    tpu.vector_store %arg7[%c0_15, %c0_16], %17 {strides = array<i32>} : memref<392x128xbf16, #tpu.memory_space<vmem>>, vector<392x128xbf16>,
    return
  }
  func.func @transform_0(%arg0: i32) -> (i32, i32) {
    %c0_i32 = arith.constant 0 : i32
    %c0_i32_0 = arith.constant 0 : i32
    return %arg0, %c0_i32 : i32, i32
  }
  func.func @transform_1(%arg0: i32) -> (i32, i32) {
    %c0_i32 = arith.constant 0 : i32
    %c0_i32_0 = arith.constant 0 : i32
    return %arg0, %c0_i32 : i32, i32
  }
  func.func @transform_2(%arg0: i32) -> (i32, i32) {
    %c0_i32 = arith.constant 0 : i32
    %c0_i32_0 = arith.constant 0 : i32
    return %arg0, %c0_i32 : i32, i32
  }
  func.func @transform_3(%arg0: i32) -> (i32, i32) {
    %c0_i32 = arith.constant 0 : i32
    %c0_i32_0 = arith.constant 0 : i32
    return %arg0, %c0_i32 : i32, i32
  }
  func.func @transform_4(%arg0: i32) -> (i32, i32) {
    %c0_i32 = arith.constant 0 : i32
    %c0_i32_0 = arith.constant 0 : i32
    %c0_i32_1 = arith.constant 0 : i32
    return %c0_i32, %c0_i32_0 : i32, i32
  }
  func.func @transform_5(%arg0: i32) -> (i32, i32) {
    %c0_i32 = arith.constant 0 : i32
    %c0_i32_0 = arith.constant 0 : i32
    %c0_i32_1 = arith.constant 0 : i32
    return %c0_i32, %c0_i32_0 : i32, i32
  }
  func.func @transform_6(%arg0: i32) -> (i32, i32) {
    %c0_i32 = arith.constant 0 : i32
    %c0_i32_0 = arith.constant 0 : i32
    return %arg0, %c0_i32 : i32, i32
  }
}

module attributes {stable_mosaic.version = 11 : i64} {
  func.func @_conv_pool_kernel(%arg0: i32, %arg1: memref<104x54xbf16, #tpu.memory_space<vmem>>, %arg2: memref<104x54xbf16, #tpu.memory_space<vmem>>, %arg3: memref<104x54xbf16, #tpu.memory_space<vmem>>, %arg4: memref<104x54xbf16, #tpu.memory_space<vmem>>, %arg5: memref<54x128xbf16, #tpu.memory_space<vmem>>, %arg6: memref<1x128xf32, #tpu.memory_space<vmem>>, %arg7: memref<104x128xbf16, #tpu.memory_space<vmem>>) attributes {dimension_semantics = [#tpu.dimension_semantics<parallel>], iteration_bounds = array<i64: 1>, scalar_prefetch = 0 : i64, scratch_operands = 0 : i64, tpu.core_type = #tpu.core_type<tc>, window_params = [{transform_indices = @transform_0, window_bounds = array<i64: 104, 54>}, {transform_indices = @transform_1, window_bounds = array<i64: 104, 54>}, {transform_indices = @transform_2, window_bounds = array<i64: 104, 54>}, {transform_indices = @transform_3, window_bounds = array<i64: 104, 54>}, {pipeline_mode = #tpu.pipeline_mode<synchronous>, transform_indices = @transform_4, window_bounds = array<i64: 54, 128>}, {pipeline_mode = #tpu.pipeline_mode<synchronous>, transform_indices = @transform_5, window_bounds = array<i64: 1, 128>}, {transform_indices = @transform_6, window_bounds = array<i64: 104, 128>}]} {
    %c0 = arith.constant 0 : index
    %c0_0 = arith.constant 0 : index
    %0 = vector.load %arg5[%c0, %c0_0] : memref<54x128xbf16, #tpu.memory_space<vmem>>, vector<54x128xbf16>
    %c0_1 = arith.constant 0 : index
    %c0_2 = arith.constant 0 : index
    %1 = vector.load %arg1[%c0_1, %c0_2] : memref<104x54xbf16, #tpu.memory_space<vmem>>, vector<104x54xbf16>
    %cst = arith.constant dense<0.000000e+00> : vector<104x128xf32>
    %2 = tpu.matmul %1, %0, %cst {dimension_numbers = #tpu.dot_dimension_numbers<[1], [0], [0], [1], [0, 0, 1, 1], [], []>} : vector<104x54xbf16>, vector<54x128xbf16>, vector<104x128xf32> -> vector<104x128xf32>
    %c0_3 = arith.constant 0 : index
    %c0_4 = arith.constant 0 : index
    %3 = vector.load %arg2[%c0_3, %c0_4] : memref<104x54xbf16, #tpu.memory_space<vmem>>, vector<104x54xbf16>
    %cst_5 = arith.constant dense<0.000000e+00> : vector<104x128xf32>
    %4 = tpu.matmul %3, %0, %cst_5 {dimension_numbers = #tpu.dot_dimension_numbers<[1], [0], [0], [1], [0, 0, 1, 1], [], []>} : vector<104x54xbf16>, vector<54x128xbf16>, vector<104x128xf32> -> vector<104x128xf32>
    %5 = arith.maximumf %2, %4 : vector<104x128xf32>
    %c0_6 = arith.constant 0 : index
    %c0_7 = arith.constant 0 : index
    %6 = vector.load %arg3[%c0_6, %c0_7] : memref<104x54xbf16, #tpu.memory_space<vmem>>, vector<104x54xbf16>
    %cst_8 = arith.constant dense<0.000000e+00> : vector<104x128xf32>
    %7 = tpu.matmul %6, %0, %cst_8 {dimension_numbers = #tpu.dot_dimension_numbers<[1], [0], [0], [1], [0, 0, 1, 1], [], []>} : vector<104x54xbf16>, vector<54x128xbf16>, vector<104x128xf32> -> vector<104x128xf32>
    %c0_9 = arith.constant 0 : index
    %c0_10 = arith.constant 0 : index
    %8 = vector.load %arg4[%c0_9, %c0_10] : memref<104x54xbf16, #tpu.memory_space<vmem>>, vector<104x54xbf16>
    %cst_11 = arith.constant dense<0.000000e+00> : vector<104x128xf32>
    %9 = tpu.matmul %8, %0, %cst_11 {dimension_numbers = #tpu.dot_dimension_numbers<[1], [0], [0], [1], [0, 0, 1, 1], [], []>} : vector<104x54xbf16>, vector<54x128xbf16>, vector<104x128xf32> -> vector<104x128xf32>
    %10 = arith.maximumf %7, %9 : vector<104x128xf32>
    %11 = arith.maximumf %5, %10 : vector<104x128xf32>
    %c0_12 = arith.constant 0 : index
    %c0_13 = arith.constant 0 : index
    %12 = vector.load %arg6[%c0_12, %c0_13] : memref<1x128xf32, #tpu.memory_space<vmem>>, vector<1x128xf32>
    %13 = vector.broadcast %12 : vector<1x128xf32> to vector<104x128xf32>
    %14 = arith.addf %11, %13 : vector<104x128xf32>
    %cst_14 = arith.constant 0.000000e+00 : f32
    %15 = vector.broadcast %cst_14 : f32 to vector<104x128xf32>
    %16 = arith.maximumf %14, %15 : vector<104x128xf32>
    %17 = arith.truncf %16 : vector<104x128xf32> to vector<104x128xbf16>
    %c0_15 = arith.constant 0 : index
    %c0_16 = arith.constant 0 : index
    %18 = vector.load %arg7[%c0_15, %c0_16] : memref<104x128xbf16, #tpu.memory_space<vmem>>, vector<104x128xbf16>
    tpu.vector_store %arg7[%c0_15, %c0_16], %17 {strides = array<i32>} : memref<104x128xbf16, #tpu.memory_space<vmem>>, vector<104x128xbf16>,
    return
  }
  func.func @transform_0(%arg0: i32) -> (i32, i32) {
    %c0_i32 = arith.constant 0 : i32
    %c0_i32_0 = arith.constant 0 : i32
    return %arg0, %c0_i32 : i32, i32
  }
  func.func @transform_1(%arg0: i32) -> (i32, i32) {
    %c0_i32 = arith.constant 0 : i32
    %c0_i32_0 = arith.constant 0 : i32
    return %arg0, %c0_i32 : i32, i32
  }
  func.func @transform_2(%arg0: i32) -> (i32, i32) {
    %c0_i32 = arith.constant 0 : i32
    %c0_i32_0 = arith.constant 0 : i32
    return %arg0, %c0_i32 : i32, i32
  }
  func.func @transform_3(%arg0: i32) -> (i32, i32) {
    %c0_i32 = arith.constant 0 : i32
    %c0_i32_0 = arith.constant 0 : i32
    return %arg0, %c0_i32 : i32, i32
  }
  func.func @transform_4(%arg0: i32) -> (i32, i32) {
    %c0_i32 = arith.constant 0 : i32
    %c0_i32_0 = arith.constant 0 : i32
    %c0_i32_1 = arith.constant 0 : i32
    return %c0_i32, %c0_i32_0 : i32, i32
  }
  func.func @transform_5(%arg0: i32) -> (i32, i32) {
    %c0_i32 = arith.constant 0 : i32
    %c0_i32_0 = arith.constant 0 : i32
    %c0_i32_1 = arith.constant 0 : i32
    return %c0_i32, %c0_i32_0 : i32, i32
  }
  func.func @transform_6(%arg0: i32) -> (i32, i32) {
    %c0_i32 = arith.constant 0 : i32
    %c0_i32_0 = arith.constant 0 : i32
    return %arg0, %c0_i32 : i32, i32
  }
}

module attributes {stable_mosaic.version = 11 : i64} {
  func.func @_fc_fused_kernel(%arg0: i32, %arg1: memref<8x784xbf16, #tpu.memory_space<vmem>>, %arg2: memref<784x128xbf16, #tpu.memory_space<vmem>>, %arg3: memref<1x128xf32, #tpu.memory_space<vmem>>, %arg4: memref<128x128xbf16, #tpu.memory_space<vmem>>, %arg5: memref<1x128xf32, #tpu.memory_space<vmem>>, %arg6: memref<128x128xbf16, #tpu.memory_space<vmem>>, %arg7: memref<1x128xf32, #tpu.memory_space<vmem>>, %arg8: memref<8x128xf32, #tpu.memory_space<vmem>>) attributes {dimension_semantics = [#tpu.dimension_semantics<parallel>], iteration_bounds = array<i64: 1>, scalar_prefetch = 0 : i64, scratch_operands = 0 : i64, tpu.core_type = #tpu.core_type<tc>, window_params = [{transform_indices = @transform_0, window_bounds = array<i64: 8, 784>}, {pipeline_mode = #tpu.pipeline_mode<synchronous>, transform_indices = @transform_1, window_bounds = array<i64: 784, 128>}, {pipeline_mode = #tpu.pipeline_mode<synchronous>, transform_indices = @transform_2, window_bounds = array<i64: 1, 128>}, {pipeline_mode = #tpu.pipeline_mode<synchronous>, transform_indices = @transform_3, window_bounds = array<i64: 128, 128>}, {pipeline_mode = #tpu.pipeline_mode<synchronous>, transform_indices = @transform_4, window_bounds = array<i64: 1, 128>}, {pipeline_mode = #tpu.pipeline_mode<synchronous>, transform_indices = @transform_5, window_bounds = array<i64: 128, 128>}, {pipeline_mode = #tpu.pipeline_mode<synchronous>, transform_indices = @transform_6, window_bounds = array<i64: 1, 128>}, {transform_indices = @transform_7, window_bounds = array<i64: 8, 128>}]} {
    %c0 = arith.constant 0 : index
    %c0_0 = arith.constant 0 : index
    %0 = vector.load %arg1[%c0, %c0_0] : memref<8x784xbf16, #tpu.memory_space<vmem>>, vector<8x784xbf16>
    %c0_1 = arith.constant 0 : index
    %c0_2 = arith.constant 0 : index
    %1 = vector.load %arg2[%c0_1, %c0_2] : memref<784x128xbf16, #tpu.memory_space<vmem>>, vector<784x128xbf16>
    %cst = arith.constant dense<0.000000e+00> : vector<8x128xf32>
    %2 = tpu.matmul %0, %1, %cst {dimension_numbers = #tpu.dot_dimension_numbers<[1], [0], [0], [1], [0, 0, 1, 1], [], []>} : vector<8x784xbf16>, vector<784x128xbf16>, vector<8x128xf32> -> vector<8x128xf32>
    %c0_3 = arith.constant 0 : index
    %c0_4 = arith.constant 0 : index
    %3 = vector.load %arg3[%c0_3, %c0_4] : memref<1x128xf32, #tpu.memory_space<vmem>>, vector<1x128xf32>
    %4 = vector.broadcast %3 : vector<1x128xf32> to vector<8x128xf32>
    %5 = arith.addf %2, %4 : vector<8x128xf32>
    %cst_5 = arith.constant 0.000000e+00 : f32
    %6 = vector.broadcast %cst_5 : f32 to vector<8x128xf32>
    %7 = arith.maximumf %5, %6 : vector<8x128xf32>
    %8 = arith.truncf %7 : vector<8x128xf32> to vector<8x128xbf16>
    %c0_6 = arith.constant 0 : index
    %c0_7 = arith.constant 0 : index
    %9 = vector.load %arg4[%c0_6, %c0_7] : memref<128x128xbf16, #tpu.memory_space<vmem>>, vector<128x128xbf16>
    %cst_8 = arith.constant dense<0.000000e+00> : vector<8x128xf32>
    %10 = tpu.matmul %8, %9, %cst_8 {dimension_numbers = #tpu.dot_dimension_numbers<[1], [0], [0], [1], [0, 0, 1, 1], [], []>} : vector<8x128xbf16>, vector<128x128xbf16>, vector<8x128xf32> -> vector<8x128xf32>
    %c0_9 = arith.constant 0 : index
    %c0_10 = arith.constant 0 : index
    %11 = vector.load %arg5[%c0_9, %c0_10] : memref<1x128xf32, #tpu.memory_space<vmem>>, vector<1x128xf32>
    %12 = vector.broadcast %11 : vector<1x128xf32> to vector<8x128xf32>
    %13 = arith.addf %10, %12 : vector<8x128xf32>
    %cst_11 = arith.constant 0.000000e+00 : f32
    %14 = vector.broadcast %cst_11 : f32 to vector<8x128xf32>
    %15 = arith.maximumf %13, %14 : vector<8x128xf32>
    %16 = arith.truncf %15 : vector<8x128xf32> to vector<8x128xbf16>
    %c0_12 = arith.constant 0 : index
    %c0_13 = arith.constant 0 : index
    %17 = vector.load %arg6[%c0_12, %c0_13] : memref<128x128xbf16, #tpu.memory_space<vmem>>, vector<128x128xbf16>
    %cst_14 = arith.constant dense<0.000000e+00> : vector<8x128xf32>
    %18 = tpu.matmul %16, %17, %cst_14 {dimension_numbers = #tpu.dot_dimension_numbers<[1], [0], [0], [1], [0, 0, 1, 1], [], []>} : vector<8x128xbf16>, vector<128x128xbf16>, vector<8x128xf32> -> vector<8x128xf32>
    %c0_15 = arith.constant 0 : index
    %c0_16 = arith.constant 0 : index
    %19 = vector.load %arg7[%c0_15, %c0_16] : memref<1x128xf32, #tpu.memory_space<vmem>>, vector<1x128xf32>
    %20 = vector.broadcast %19 : vector<1x128xf32> to vector<8x128xf32>
    %21 = arith.addf %18, %20 : vector<8x128xf32>
    %c0_17 = arith.constant 0 : index
    %c0_18 = arith.constant 0 : index
    %22 = vector.load %arg8[%c0_17, %c0_18] : memref<8x128xf32, #tpu.memory_space<vmem>>, vector<8x128xf32>
    tpu.vector_store %arg8[%c0_17, %c0_18], %21 {strides = array<i32>} : memref<8x128xf32, #tpu.memory_space<vmem>>, vector<8x128xf32>,
    return
  }
  func.func @transform_0(%arg0: i32) -> (i32, i32) {
    %c0_i32 = arith.constant 0 : i32
    %c0_i32_0 = arith.constant 0 : i32
    return %arg0, %c0_i32 : i32, i32
  }
  func.func @transform_1(%arg0: i32) -> (i32, i32) {
    %c0_i32 = arith.constant 0 : i32
    %c0_i32_0 = arith.constant 0 : i32
    %c0_i32_1 = arith.constant 0 : i32
    return %c0_i32, %c0_i32_0 : i32, i32
  }
  func.func @transform_2(%arg0: i32) -> (i32, i32) {
    %c0_i32 = arith.constant 0 : i32
    %c0_i32_0 = arith.constant 0 : i32
    %c0_i32_1 = arith.constant 0 : i32
    return %c0_i32, %c0_i32_0 : i32, i32
  }
  func.func @transform_3(%arg0: i32) -> (i32, i32) {
    %c0_i32 = arith.constant 0 : i32
    %c0_i32_0 = arith.constant 0 : i32
    %c0_i32_1 = arith.constant 0 : i32
    return %c0_i32, %c0_i32_0 : i32, i32
  }
  func.func @transform_4(%arg0: i32) -> (i32, i32) {
    %c0_i32 = arith.constant 0 : i32
    %c0_i32_0 = arith.constant 0 : i32
    %c0_i32_1 = arith.constant 0 : i32
    return %c0_i32, %c0_i32_0 : i32, i32
  }
  func.func @transform_5(%arg0: i32) -> (i32, i32) {
    %c0_i32 = arith.constant 0 : i32
    %c0_i32_0 = arith.constant 0 : i32
    %c0_i32_1 = arith.constant 0 : i32
    return %c0_i32, %c0_i32_0 : i32, i32
  }
  func.func @transform_6(%arg0: i32) -> (i32, i32) {
    %c0_i32 = arith.constant 0 : i32
    %c0_i32_0 = arith.constant 0 : i32
    %c0_i32_1 = arith.constant 0 : i32
    return %c0_i32, %c0_i32_0 : i32, i32
  }
  func.func @transform_7(%arg0: i32) -> (i32, i32) {
    %c0_i32 = arith.constant 0 : i32
    %c0_i32_0 = arith.constant 0 : i32
    return %arg0, %c0_i32 : i32, i32
  }
}

</mosaic_0001>

<llo_original>
// kernel: convnn_forward.3
$region0: #{convnn_forward.3}
  #allocation0 [shape = 'u32[]', space=smem, size = 0x4, offset = 0x4, fixed_abs, tag = 'smem constant byte address 0x4 - core index']
  #allocation1 [shape = 'u32[144,128]{1,0:T(1,128)}', space=vmem, size = 0x12000, scoped, tag = 'internal scratch']
  %s0 = inlined_call_operand.vmem [shape: bf16[392,9], index: 0, kind: input, shape index: {}]
  %s1 = inlined_call_operand.vmem [shape: bf16[392,9], index: 1, kind: input, shape index: {}]
  %s2 = inlined_call_operand.vmem [shape: bf16[392,9], index: 2, kind: input, shape index: {}]
  %s3 = inlined_call_operand.vmem [shape: bf16[392,9], index: 3, kind: input, shape index: {}]
  %s4 = inlined_call_operand.vmem [shape: bf16[9,128], index: 4, kind: input, shape index: {}]
  %s5 = inlined_call_operand.vmem [shape: f32[1,128], index: 5, kind: input, shape index: {}]
  %s6 = inlined_call_operand.vmem [shape: bf16[392,128], index: 6, kind: output, shape index: {}]
  %s7 = sld [smem:[#allocation0]]
  $region34: #{convnn_forward.3} parent=0
    _
  %s9 = ssub.s32 1, %s7
  %s10 = scalar_select 0, %s9, %s7
  // Predicated region
  $region2: #{convnn_forward.3} parent=0 // pred_check
    _
  $region3: #{convnn_forward.3} parent=0 // pred_check_branch
    %12 = sbr.rel (0) target = $region5
  $region4: #{convnn_forward.3} parent=0 // pred_region
    _
  $region5: #{convnn_forward.3} parent=0 // pred_fallthru
    _
  // Predicated region
  $region6: #{convnn_forward.3} parent=0 // pred_check
    _
  $region7: #{convnn_forward.3} parent=0 // pred_check_branch
    %14 = sbr.rel (0) target = $region9
  $region8: #{convnn_forward.3} parent=0 // pred_region
    _
  $region9: #{convnn_forward.3} parent=0 // pred_fallthru
    _
  // Predicated region
  $region10: #{convnn_forward.3} parent=0 // pred_check
    _
  $region11: #{convnn_forward.3} parent=0 // pred_check_branch
    %16 = sbr.rel (0) target = $region13
  $region12: #{convnn_forward.3} parent=0 // pred_region
    _
  $region13: #{convnn_forward.3} parent=0 // pred_fallthru
    _
  // Predicated region
  $region14: #{convnn_forward.3} parent=0 // pred_check
    _
  $region15: #{convnn_forward.3} parent=0 // pred_check_branch
    %18 = sbr.rel (0) target = $region17
  $region16: #{convnn_forward.3} parent=0 // pred_region
    _
  $region17: #{convnn_forward.3} parent=0 // pred_fallthru
    _
  // Predicated region
  $region18: #{convnn_forward.3} parent=0 // pred_check
    _
  $region19: #{convnn_forward.3} parent=0 // pred_check_branch
    %20 = sbr.rel (0) target = $region21
  $region20: #{convnn_forward.3} parent=0 // pred_region
    _
  $region21: #{convnn_forward.3} parent=0 // pred_fallthru
    _
  // Predicated region
  $region22: #{convnn_forward.3} parent=0 // pred_check
    _
  $region23: #{convnn_forward.3} parent=0 // pred_check_branch
    %22 = sbr.rel (0) target = $region25
  $region24: #{convnn_forward.3} parent=0 // pred_region
    _
  $region25: #{convnn_forward.3} parent=0 // pred_fallthru
    _
  %v24 = vld [vmem:[%s4] sm:$0xf]
  %v25 = vld [vmem:[%s4 + $0x4] sm:$0x1]
  %v26 = vld [vmem:[%s0] sm:$0xf]
  %v27 = vld [vmem:[%s0 + $0x4] sm:$0xf]
  %v28 = vld [vmem:[%s0 + $0x8] sm:$0xf]
  %v29 = vld [vmem:[%s0 + $0xc] sm:$0xf]
  %v30 = vld [vmem:[%s0 + $0x10] sm:$0xf]
  %v31 = vld [vmem:[%s0 + $0x14] sm:$0xf]
  %v32 = vld [vmem:[%s0 + $0x18] sm:$0xf]
  %v33 = vld [vmem:[%s0 + $0x1c] sm:$0xf]
  %v34 = vld [vmem:[%s0 + $0x20] sm:$0xf]
  %v35 = vld [vmem:[%s0 + $0x24] sm:$0xf]
  %v36 = vld [vmem:[%s0 + $0x28] sm:$0xf]
  %v37 = vld [vmem:[%s0 + $0x2c] sm:$0xf]
  %v38 = vld [vmem:[%s0 + $0x30] sm:$0xf]
  %v39 = vld [vmem:[%s0 + $0x34] sm:$0xf]
  %v40 = vld [vmem:[%s0 + $0x38] sm:$0xf]
  %v41 = vld [vmem:[%s0 + $0x3c] sm:$0xf]
  %v42 = vld [vmem:[%s0 + $0x40] sm:$0xf]
  %v43 = vld [vmem:[%s0 + $0x44] sm:$0xf]
  %v44 = vld [vmem:[%s0 + $0x48] sm:$0xf]
  %v45 = vld [vmem:[%s0 + $0x4c] sm:$0xf]
  %v46 = vld [vmem:[%s0 + $0x50] sm:$0xf]
  %v47 = vld [vmem:[%s0 + $0x54] sm:$0xf]
  %v48 = vld [vmem:[%s0 + $0x58] sm:$0xf]
  %v49 = vld [vmem:[%s0 + $0x5c] sm:$0xf]
  %v50 = vld [vmem:[%s0 + $0x60] sm:$0xf]
  %v51 = vld [vmem:[%s0 + $0x64] sm:$0xf]
  %v52 = vld [vmem:[%s0 + $0x68] sm:$0xf]
  %v53 = vld [vmem:[%s0 + $0x6c] sm:$0xf]
  %v54 = vld [vmem:[%s0 + $0x70] sm:$0xf]
  %v55 = vld [vmem:[%s0 + $0x74] sm:$0xf]
  %v56 = vld [vmem:[%s0 + $0x78] sm:$0xf]
  %v57 = vld [vmem:[%s0 + $0x7c] sm:$0xf]
  %v58 = vld [vmem:[%s0 + $0x80] sm:$0xf]
  %v59 = vld [vmem:[%s0 + $0x84] sm:$0xf]
  %v60 = vld [vmem:[%s0 + $0x88] sm:$0xf]
  %v61 = vld [vmem:[%s0 + $0x8c] sm:$0xf]
  %v62 = vld [vmem:[%s0 + $0x90] sm:$0xf]
  %v63 = vld [vmem:[%s0 + $0x94] sm:$0xf]
  %v64 = vld [vmem:[%s0 + $0x98] sm:$0xf]
  %v65 = vld [vmem:[%s0 + $0x9c] sm:$0xf]
  %v66 = vld [vmem:[%s0 + $0xa0] sm:$0xf]
  %v67 = vld [vmem:[%s0 + $0xa4] sm:$0xf]
  %v68 = vld [vmem:[%s0 + $0xa8] sm:$0xf]
  %v69 = vld [vmem:[%s0 + $0xac] sm:$0xf]
  %v70 = vld [vmem:[%s0 + $0xb0] sm:$0xf]
  %v71 = vld [vmem:[%s0 + $0xb4] sm:$0xf]
  %v72 = vld [vmem:[%s0 + $0xb8] sm:$0xf]
  %v73 = vld [vmem:[%s0 + $0xbc] sm:$0xf]
  %v74 = vld [vmem:[%s0 + $0xc0] sm:$0xf]
  %v124 = vunpack.c.l.b16 %v26
  %v125 = vunpack.c.l.b16 %v27
  %v126 = vunpack.c.l.b16 %v28
  %v127 = vunpack.c.l.b16 %v29
  %v128 = vunpack.c.l.b16 %v30
  %v129 = vunpack.c.l.b16 %v31
  %v130 = vunpack.c.l.b16 %v32
  %v131 = vunpack.c.l.b16 %v33
  %v132 = vunpack.c.l.b16 %v34
  %v133 = vunpack.c.l.b16 %v35
  %v134 = vunpack.c.l.b16 %v36
  %v135 = vunpack.c.l.b16 %v37
  %v136 = vunpack.c.l.b16 %v38
  %v137 = vunpack.c.l.b16 %v39
  %v138 = vunpack.c.l.b16 %v40
  %v139 = vunpack.c.l.b16 %v41
  %v140 = vunpack.c.l.b16 %v42
  %v141 = vunpack.c.l.b16 %v43
  %v142 = vunpack.c.l.b16 %v44
  %v143 = vunpack.c.l.b16 %v45
  %v144 = vunpack.c.l.b16 %v46
  %v145 = vunpack.c.l.b16 %v47
  %v146 = vunpack.c.l.b16 %v48
  %v147 = vunpack.c.l.b16 %v49
  %v148 = vunpack.c.l.b16 %v50
  %v149 = vunpack.c.l.b16 %v51
  %v150 = vunpack.c.l.b16 %v52
  %v151 = vunpack.c.l.b16 %v53
  %v152 = vunpack.c.l.b16 %v54
  %v153 = vunpack.c.l.b16 %v55
  %v154 = vunpack.c.l.b16 %v56
  %v155 = vunpack.c.l.b16 %v57
  %v156 = vunpack.c.l.b16 %v58
  %v157 = vunpack.c.l.b16 %v59
  %v158 = vunpack.c.l.b16 %v60
  %v159 = vunpack.c.l.b16 %v61
  %v160 = vunpack.c.l.b16 %v62
  %v161 = vunpack.c.l.b16 %v63
  %v162 = vunpack.c.l.b16 %v64
  %v163 = vunpack.c.l.b16 %v65
  %v164 = vunpack.c.l.b16 %v66
  %v165 = vunpack.c.l.b16 %v67
  %v166 = vunpack.c.l.b16 %v68
  %v167 = vunpack.c.l.b16 %v69
  %v168 = vunpack.c.l.b16 %v70
  %v169 = vunpack.c.l.b16 %v71
  %v170 = vunpack.c.l.b16 %v72
  %v171 = vunpack.c.l.b16 %v73
  %v172 = vunpack.c.l.b16 %v74
  %v173 = vpack.c.b16 %v125, %v124
  %v174 = vpack.c.b16 %v127, %v126
  %v175 = vpack.c.b16 %v129, %v128
  %v176 = vpack.c.b16 %v131, %v130
  %v177 = vpack.c.b16 %v133, %v132
  %v178 = vpack.c.b16 %v135, %v134
  %v179 = vpack.c.b16 %v137, %v136
  %v180 = vpack.c.b16 %v139, %v138
  %v181 = vpack.c.b16 %v141, %v140
  %v182 = vpack.c.b16 %v143, %v142
  %v183 = vpack.c.b16 %v145, %v144
  %v184 = vpack.c.b16 %v147, %v146
  %v185 = vpack.c.b16 %v149, %v148
  %v186 = vpack.c.b16 %v151, %v150
  %v187 = vpack.c.b16 %v153, %v152
  %v188 = vpack.c.b16 %v155, %v154
  %v189 = vpack.c.b16 %v157, %v156
  %v190 = vpack.c.b16 %v159, %v158
  %v191 = vpack.c.b16 %v161, %v160
  %v192 = vpack.c.b16 %v163, %v162
  %v193 = vpack.c.b16 %v165, %v164
  %v194 = vpack.c.b16 %v167, %v166
  %v195 = vpack.c.b16 %v169, %v168
  %v196 = vpack.c.b16 %v171, %v170
  %v197 = vpack.c.b16 %v172, %v172
  %v200 = vunpack.c.l.b16 %v24
  %v201 = vunpack.c.l.b16 %v25
  %v202 = vpack.c.b16 %v201, %v200
  %vm203 = vcmask 72704
  %v205 = vsel %vm203, %v173, 0
  %v208 = vsel %vm203, %v174, 0
  %v211 = vsel %vm203, %v175, 0
  %v214 = vsel %vm203, %v176, 0
  %v217 = vsel %vm203, %v177, 0
  %v220 = vsel %vm203, %v178, 0
  %v223 = vsel %vm203, %v179, 0
  %v226 = vsel %vm203, %v180, 0
  %v229 = vsel %vm203, %v181, 0
  %v232 = vsel %vm203, %v182, 0
  %v235 = vsel %vm203, %v183, 0
  %v238 = vsel %vm203, %v184, 0
  %v241 = vsel %vm203, %v185, 0
  %v244 = vsel %vm203, %v186, 0
  %v247 = vsel %vm203, %v187, 0
  %v250 = vsel %vm203, %v188, 0
  %v253 = vsel %vm203, %v189, 0
  %v256 = vsel %vm203, %v190, 0
  %v259 = vsel %vm203, %v191, 0
  %v262 = vsel %vm203, %v192, 0
  %v265 = vsel %vm203, %v193, 0
  %v268 = vsel %vm203, %v194, 0
  %v271 = vsel %vm203, %v195, 0
  %v274 = vsel %vm203, %v196, 0
  %v277 = vsel %vm203, %v197, 0
  %vm279 = vcmask 1043456
  %vm280 = vcmask 1044480
  %v281 = vsel %vm279, 4294967295, 65535
  %v282 = vsel %vm280, %v281, 0
  %v284 = vand.u32 %v202, %v282
  %286 = vmatprep.subr.bf16.mxu0 0
  %287 = vmatpush1.bf16.msra.mxu0 %v284
  %288 = vmatprep.subr.bf16.mxu0 0
  %289 = vmatpush1.bf16.msra.mxu0 0
  %290 = vmatprep.subr.bf16.mxu0 0
  %291 = vmatpush1.bf16.msra.mxu0 0
  %292 = vmatprep.subr.bf16.mxu0 0
  %293 = vmatpush1.bf16.msra.mxu0 0
  %294 = vmatprep.subr.bf16.mxu0 0
  %295 = vmatpush1.bf16.msra.mxu0 0
  %296 = vmatprep.subr.bf16.mxu0 0
  %297 = vmatpush1.bf16.msra.mxu0 0
  %298 = vmatprep.subr.bf16.mxu0 0
  %299 = vmatpush1.bf16.msra.mxu0 0
  %300 = vmatprep.subr.bf16.mxu0 0
  %301 = vmatpush1.bf16.msra.mxu0 0
  %302 = vmatprep.subr.bf16.mxu0 0
  %303 = vmatpush1.bf16.msra.mxu0 0
  %304 = vmatprep.subr.bf16.mxu0 0
  %305 = vmatpush1.bf16.msra.mxu0 0
  %306 = vmatprep.subr.bf16.mxu0 0
  %307 = vmatpush1.bf16.msra.mxu0 0
  %308 = vmatprep.subr.bf16.mxu0 0
  %309 = vmatpush1.bf16.msra.mxu0 0
  %310 = vmatprep.subr.bf16.mxu0 0
  %311 = vmatpush1.bf16.msra.mxu0 0
  %312 = vmatprep.subr.bf16.mxu0 0
  %313 = vmatpush1.bf16.msra.mxu0 0
  %314 = vmatprep.subr.bf16.mxu0 0
  %315 = vmatpush1.bf16.msra.mxu0 0
  %316 = vmatprep.subr.bf16.mxu0 0
  %317 = vmatpush1.bf16.msra.mxu0 0
  %318 = vmatprep.mubr.bf16.mxu0 0
  %319 = vmatmul.mubr.bf16.gmra.mrb[0].mxu0 %v205
  %v320 = vpop.f32.mrb[0].mxu0
  %v321 = vadd.f32 0.0, %v320
  %v322 = vpop.f32.mrb[0].mxu0
  %v323 = vpop.f32.mrb[0].mxu0
  %v324 = vadd.f32 0.0, %v323
  %v325 = vpop.f32.mrb[0].mxu0
  %326 = vmatprep.mubr.bf16.mxu0 0
  %327 = vmatmul.mubr.bf16.gmra.mrb[0].mxu0 %v208
  %v328 = vpop.f32.mrb[0].mxu0
  %v329 = vadd.f32 0.0, %v328
  %v330 = vpop.f32.mrb[0].mxu0
  %v331 = vpop.f32.mrb[0].mxu0
  %v332 = vadd.f32 0.0, %v331
  %v333 = vpop.f32.mrb[0].mxu0
  %334 = vmatprep.mubr.bf16.mxu0 0
  %335 = vmatmul.mubr.bf16.gmra.mrb[0].mxu0 %v211
  %v336 = vpop.f32.mrb[0].mxu0
  %v337 = vadd.f32 0.0, %v336
  %v338 = vpop.f32.mrb[0].mxu0
  %v339 = vpop.f32.mrb[0].mxu0
  %v340 = vadd.f32 0.0, %v339
  %v341 = vpop.f32.mrb[0].mxu0
  %342 = vmatprep.mubr.bf16.mxu0 0
  %343 = vmatmul.mubr.bf16.gmra.mrb[0].mxu0 %v214
  %v344 = vpop.f32.mrb[0].mxu0
  %v345 = vadd.f32 0.0, %v344
  %v346 = vpop.f32.mrb[0].mxu0
  %v347 = vpop.f32.mrb[0].mxu0
  %v348 = vadd.f32 0.0, %v347
  %v349 = vpop.f32.mrb[0].mxu0
  %350 = vmatprep.mubr.bf16.mxu0 0
  %351 = vmatmul.mubr.bf16.gmra.mrb[0].mxu0 %v217
  %v352 = vpop.f32.mrb[0].mxu0
  %v353 = vadd.f32 0.0, %v352
  %v354 = vpop.f32.mrb[0].mxu0
  %v355 = vpop.f32.mrb[0].mxu0
  %v356 = vadd.f32 0.0, %v355
  %v357 = vpop.f32.mrb[0].mxu0
  %358 = vmatprep.mubr.bf16.mxu0 0
  %359 = vmatmul.mubr.bf16.gmra.mrb[0].mxu0 %v220
  %v360 = vpop.f32.mrb[0].mxu0
  %v361 = vadd.f32 0.0, %v360
  %v362 = vpop.f32.mrb[0].mxu0
  %v363 = vpop.f32.mrb[0].mxu0
  %v364 = vadd.f32 0.0, %v363
  %v365 = vpop.f32.mrb[0].mxu0
  %366 = vmatprep.mubr.bf16.mxu0 0
  %367 = vmatmul.mubr.bf16.gmra.mrb[0].mxu0 %v223
  %v368 = vpop.f32.mrb[0].mxu0
  %v369 = vadd.f32 0.0, %v368
  %v370 = vpop.f32.mrb[0].mxu0
  %v371 = vpop.f32.mrb[0].mxu0
  %v372 = vadd.f32 0.0, %v371
  %v373 = vpop.f32.mrb[0].mxu0
  %374 = vmatprep.mubr.bf16.mxu0 0
  %375 = vmatmul.mubr.bf16.gmra.mrb[0].mxu0 %v226
  %v376 = vpop.f32.mrb[0].mxu0
  %v377 = vadd.f32 0.0, %v376
  %v378 = vpop.f32.mrb[0].mxu0
  %v379 = vpop.f32.mrb[0].mxu0
  %v380 = vadd.f32 0.0, %v379
  %v381 = vpop.f32.mrb[0].mxu0
  %382 = vmatprep.mubr.bf16.mxu0 0
  %383 = vmatmul.mubr.bf16.gmra.mrb[0].mxu0 %v229
  %v384 = vpop.f32.mrb[0].mxu0
  %v385 = vadd.f32 0.0, %v384
  %v386 = vpop.f32.mrb[0].mxu0
  %v387 = vpop.f32.mrb[0].mxu0
  %v388 = vadd.f32 0.0, %v387
  %v389 = vpop.f32.mrb[0].mxu0
  %390 = vmatprep.mubr.bf16.mxu0 0
  %391 = vmatmul.mubr.bf16.gmra.mrb[0].mxu0 %v232
  %v392 = vpop.f32.mrb[0].mxu0
  %v393 = vadd.f32 0.0, %v392
  %v394 = vpop.f32.mrb[0].mxu0
  %v395 = vpop.f32.mrb[0].mxu0
  %v396 = vadd.f32 0.0, %v395
  %v397 = vpop.f32.mrb[0].mxu0
  %398 = vmatprep.mubr.bf16.mxu0 0
  %399 = vmatmul.mubr.bf16.gmra.mrb[0].mxu0 %v235
  %v400 = vpop.f32.mrb[0].mxu0
  %v401 = vadd.f32 0.0, %v400
  %v402 = vpop.f32.mrb[0].mxu0
  %v403 = vpop.f32.mrb[0].mxu0
  %v404 = vadd.f32 0.0, %v403
  %v405 = vpop.f32.mrb[0].mxu0
  %406 = vmatprep.mubr.bf16.mxu0 0
  %407 = vmatmul.mubr.bf16.gmra.mrb[0].mxu0 %v238
  %v408 = vpop.f32.mrb[0].mxu0
  %v409 = vadd.f32 0.0, %v408
  %v410 = vpop.f32.mrb[0].mxu0
  %v411 = vpop.f32.mrb[0].mxu0
  %v412 = vadd.f32 0.0, %v411
  %v413 = vpop.f32.mrb[0].mxu0
  %414 = vmatprep.mubr.bf16.mxu0 0
  %415 = vmatmul.mubr.bf16.gmra.mrb[0].mxu0 %v241
  %v416 = vpop.f32.mrb[0].mxu0
  %v417 = vadd.f32 0.0, %v416
  %v418 = vpop.f32.mrb[0].mxu0
  %v419 = vpop.f32.mrb[0].mxu0
  %v420 = vadd.f32 0.0, %v419
  %v421 = vpop.f32.mrb[0].mxu0
  %422 = vmatprep.mubr.bf16.mxu0 0
  %423 = vmatmul.mubr.bf16.gmra.mrb[0].mxu0 %v244
  %v424 = vpop.f32.mrb[0].mxu0
  %v425 = vadd.f32 0.0, %v424
  %v426 = vpop.f32.mrb[0].mxu0
  %v427 = vpop.f32.mrb[0].mxu0
  %v428 = vadd.f32 0.0, %v427
  %v429 = vpop.f32.mrb[0].mxu0
  %430 = vmatprep.mubr.bf16.mxu0 0
  %431 = vmatmul.mubr.bf16.gmra.mrb[0].mxu0 %v247
  %v432 = vpop.f32.mrb[0].mxu0
  %v433 = vadd.f32 0.0, %v432
  %v434 = vpop.f32.mrb[0].mxu0
  %v435 = vpop.f32.mrb[0].mxu0
  %v436 = vadd.f32 0.0, %v435
  %v437 = vpop.f32.mrb[0].mxu0
  %438 = vmatprep.mubr.bf16.mxu0 0
  %439 = vmatmul.mubr.bf16.gmra.mrb[0].mxu0 %v250
  %v440 = vpop.f32.mrb[0].mxu0
  %v441 = vadd.f32 0.0, %v440
  %v442 = vpop.f32.mrb[0].mxu0
  %v443 = vpop.f32.mrb[0].mxu0
  %v444 = vadd.f32 0.0, %v443
  %v445 = vpop.f32.mrb[0].mxu0
  %446 = vmatprep.mubr.bf16.mxu0 0
  %447 = vmatmul.mubr.bf16.gmra.mrb[0].mxu0 %v253
  %v448 = vpop.f32.mrb[0].mxu0
  %v449 = vadd.f32 0.0, %v448
  %v450 = vpop.f32.mrb[0].mxu0
  %v451 = vpop.f32.mrb[0].mxu0
  %v452 = vadd.f32 0.0, %v451
  %v453 = vpop.f32.mrb[0].mxu0
  %454 = vmatprep.mubr.bf16.mxu0 0
  %455 = vmatmul.mubr.bf16.gmra.mrb[0].mxu0 %v256
  %v456 = vpop.f32.mrb[0].mxu0
  %v457 = vadd.f32 0.0, %v456
  %v458 = vpop.f32.mrb[0].mxu0
  %v459 = vpop.f32.mrb[0].mxu0
  %v460 = vadd.f32 0.0, %v459
  %v461 = vpop.f32.mrb[0].mxu0
  %462 = vmatprep.mubr.bf16.mxu0 0
  %463 = vmatmul.mubr.bf16.gmra.mrb[0].mxu0 %v259
  %v464 = vpop.f32.mrb[0].mxu0
  %v465 = vadd.f32 0.0, %v464
  %v466 = vpop.f32.mrb[0].mxu0
  %v467 = vpop.f32.mrb[0].mxu0
  %v468 = vadd.f32 0.0, %v467
  %v469 = vpop.f32.mrb[0].mxu0
  %470 = vmatprep.mubr.bf16.mxu0 0
  %471 = vmatmul.mubr.bf16.gmra.mrb[0].mxu0 %v262
  %v472 = vpop.f32.mrb[0].mxu0
  %v473 = vadd.f32 0.0, %v472
  %v474 = vpop.f32.mrb[0].mxu0
  %v475 = vpop.f32.mrb[0].mxu0
  %v476 = vadd.f32 0.0, %v475
  %v477 = vpop.f32.mrb[0].mxu0
  %478 = vmatprep.mubr.bf16.mxu0 0
  %479 = vmatmul.mubr.bf16.gmra.mrb[0].mxu0 %v265
  %v480 = vpop.f32.mrb[0].mxu0
  %v481 = vadd.f32 0.0, %v480
  %v482 = vpop.f32.mrb[0].mxu0
  %v483 = vpop.f32.mrb[0].mxu0
  %v484 = vadd.f32 0.0, %v483
  %v485 = vpop.f32.mrb[0].mxu0
  %486 = vmatprep.mubr.bf16.mxu0 0
  %487 = vmatmul.mubr.bf16.gmra.mrb[0].mxu0 %v268
  %v488 = vpop.f32.mrb[0].mxu0
  %v489 = vadd.f32 0.0, %v488
  %v490 = vpop.f32.mrb[0].mxu0
  %v491 = vpop.f32.mrb[0].mxu0
  %v492 = vadd.f32 0.0, %v491
  %v493 = vpop.f32.mrb[0].mxu0
  %494 = vmatprep.mubr.bf16.mxu0 0
  %495 = vmatmul.mubr.bf16.gmra.mrb[0].mxu0 %v271
  %v496 = vpop.f32.mrb[0].mxu0
  %v497 = vadd.f32 0.0, %v496
  %v498 = vpop.f32.mrb[0].mxu0
  %v499 = vpop.f32.mrb[0].mxu0
  %v500 = vadd.f32 0.0, %v499
  %v501 = vpop.f32.mrb[0].mxu0
  %502 = vmatprep.mubr.bf16.mxu0 0
  %503 = vmatmul.mubr.bf16.gmra.mrb[0].mxu0 %v274
  %v504 = vpop.f32.mrb[0].mxu0
  %v505 = vadd.f32 0.0, %v504
  %v506 = vpop.f32.mrb[0].mxu0
  %v507 = vpop.f32.mrb[0].mxu0
  %v508 = vadd.f32 0.0, %v507
  %v509 = vpop.f32.mrb[0].mxu0
  %510 = vmatprep.mubr.bf16.mxu0 0
  %511 = vmatmul.mubr.bf16.gmra.mrb[0].mxu0 %v277
  %v512 = vpop.f32.mrb[0].mxu0
  %v513 = vadd.f32 0.0, %v512
  %v514 = vpop.f32.mrb[0].mxu0
  %v515 = vpop.f32.mrb[0].mxu0
  %v516 = vpop.f32.mrb[0].mxu0
  %517 = vdwg.mxu0
  %v518 = vld [vmem:[%s1] sm:$0xf]
  %v519 = vld [vmem:[%s1 + $0x4] sm:$0xf]
  %v520 = vld [vmem:[%s1 + $0x8] sm:$0xf]
  %v521 = vld [vmem:[%s1 + $0xc] sm:$0xf]
  %v522 = vld [vmem:[%s1 + $0x10] sm:$0xf]
  %v523 = vld [vmem:[%s1 + $0x14] sm:$0xf]
  %v524 = vld [vmem:[%s1 + $0x18] sm:$0xf]
  %v525 = vld [vmem:[%s1 + $0x1c] sm:$0xf]
  %v526 = vld [vmem:[%s1 + $0x20] sm:$0xf]
  %v527 = vld [vmem:[%s1 + $0x24] sm:$0xf]
  %v528 = vld [vmem:[%s1 + $0x28] sm:$0xf]
  %v529 = vld [vmem:[%s1 + $0x2c] sm:$0xf]
  %v530 = vld [vmem:[%s1 + $0x30] sm:$0xf]
  %v531 = vld [vmem:[%s1 + $0x34] sm:$0xf]
  %v532 = vld [vmem:[%s1 + $0x38] sm:$0xf]
  %v533 = vld [vmem:[%s1 + $0x3c] sm:$0xf]
  %v534 = vld [vmem:[%s1 + $0x40] sm:$0xf]
  %v535 = vld [vmem:[%s1 + $0x44] sm:$0xf]
  %v536 = vld [vmem:[%s1 + $0x48] sm:$0xf]
  %v537 = vld [vmem:[%s1 + $0x4c] sm:$0xf]
  %v538 = vld [vmem:[%s1 + $0x50] sm:$0xf]
  %v539 = vld [vmem:[%s1 + $0x54] sm:$0xf]
  %v540 = vld [vmem:[%s1 + $0x58] sm:$0xf]
  %v541 = vld [vmem:[%s1 + $0x5c] sm:$0xf]
  %v542 = vld [vmem:[%s1 + $0x60] sm:$0xf]
  %v543 = vld [vmem:[%s1 + $0x64] sm:$0xf]
  %v544 = vld [vmem:[%s1 + $0x68] sm:$0xf]
  %v545 = vld [vmem:[%s1 + $0x6c] sm:$0xf]
  %v546 = vld [vmem:[%s1 + $0x70] sm:$0xf]
  %v547 = vld [vmem:[%s1 + $0x74] sm:$0xf]
  %v548 = vld [vmem:[%s1 + $0x78] sm:$0xf]
  %v549 = vld [vmem:[%s1 + $0x7c] sm:$0xf]
  %v550 = vld [vmem:[%s1 + $0x80] sm:$0xf]
  %v551 = vld [vmem:[%s1 + $0x84] sm:$0xf]
  %v552 = vld [vmem:[%s1 + $0x88] sm:$0xf]
  %v553 = vld [vmem:[%s1 + $0x8c] sm:$0xf]
  %v554 = vld [vmem:[%s1 + $0x90] sm:$0xf]
  %v555 = vld [vmem:[%s1 + $0x94] sm:$0xf]
  %v556 = vld [vmem:[%s1 + $0x98] sm:$0xf]
  %v557 = vld [vmem:[%s1 + $0x9c] sm:$0xf]
  %v558 = vld [vmem:[%s1 + $0xa0] sm:$0xf]
  %v559 = vld [vmem:[%s1 + $0xa4] sm:$0xf]
  %v560 = vld [vmem:[%s1 + $0xa8] sm:$0xf]
  %v561 = vld [vmem:[%s1 + $0xac] sm:$0xf]
  %v562 = vld [vmem:[%s1 + $0xb0] sm:$0xf]
  %v563 = vld [vmem:[%s1 + $0xb4] sm:$0xf]
  %v564 = vld [vmem:[%s1 + $0xb8] sm:$0xf]
  %v565 = vld [vmem:[%s1 + $0xbc] sm:$0xf]
  %v566 = vld [vmem:[%s1 + $0xc0] sm:$0xf]
  %v616 = vunpack.c.l.b16 %v518
  %v617 = vunpack.c.l.b16 %v519
  %v618 = vunpack.c.l.b16 %v520
  %v619 = vunpack.c.l.b16 %v521
  %v620 = vunpack.c.l.b16 %v522
  %v621 = vunpack.c.l.b16 %v523
  %v622 = vunpack.c.l.b16 %v524
  %v623 = vunpack.c.l.b16 %v525
  %v624 = vunpack.c.l.b16 %v526
  %v625 = vunpack.c.l.b16 %v527
  %v626 = vunpack.c.l.b16 %v528
  %v627 = vunpack.c.l.b16 %v529
  %v628 = vunpack.c.l.b16 %v530
  %v629 = vunpack.c.l.b16 %v531
  %v630 = vunpack.c.l.b16 %v532
  %v631 = vunpack.c.l.b16 %v533
  %v632 = vunpack.c.l.b16 %v534
  %v633 = vunpack.c.l.b16 %v535
  %v634 = vunpack.c.l.b16 %v536
  %v635 = vunpack.c.l.b16 %v537
  %v636 = vunpack.c.l.b16 %v538
  %v637 = vunpack.c.l.b16 %v539
  %v638 = vunpack.c.l.b16 %v540
  %v639 = vunpack.c.l.b16 %v541
  %v640 = vunpack.c.l.b16 %v542
  %v641 = vunpack.c.l.b16 %v543
  %v642 = vunpack.c.l.b16 %v544
  %v643 = vunpack.c.l.b16 %v545
  %v644 = vunpack.c.l.b16 %v546
  %v645 = vunpack.c.l.b16 %v547
  %v646 = vunpack.c.l.b16 %v548
  %v647 = vunpack.c.l.b16 %v549
  %v648 = vunpack.c.l.b16 %v550
  %v649 = vunpack.c.l.b16 %v551
  %v650 = vunpack.c.l.b16 %v552
  %v651 = vunpack.c.l.b16 %v553
  %v652 = vunpack.c.l.b16 %v554
  %v653 = vunpack.c.l.b16 %v555
  %v654 = vunpack.c.l.b16 %v556
  %v655 = vunpack.c.l.b16 %v557
  %v656 = vunpack.c.l.b16 %v558
  %v657 = vunpack.c.l.b16 %v559
  %v658 = vunpack.c.l.b16 %v560
  %v659 = vunpack.c.l.b16 %v561
  %v660 = vunpack.c.l.b16 %v562
  %v661 = vunpack.c.l.b16 %v563
  %v662 = vunpack.c.l.b16 %v564
  %v663 = vunpack.c.l.b16 %v565
  %v664 = vunpack.c.l.b16 %v566
  %v665 = vpack.c.b16 %v617, %v616
  %v666 = vpack.c.b16 %v619, %v618
  %v667 = vpack.c.b16 %v621, %v620
  %v668 = vpack.c.b16 %v623, %v622
  %v669 = vpack.c.b16 %v625, %v624
  %v670 = vpack.c.b16 %v627, %v626
  %v671 = vpack.c.b16 %v629, %v628
  %v672 = vpack.c.b16 %v631, %v630
  %v673 = vpack.c.b16 %v633, %v632
  %v674 = vpack.c.b16 %v635, %v634
  %v675 = vpack.c.b16 %v637, %v636
  %v676 = vpack.c.b16 %v639, %v638
  %v677 = vpack.c.b16 %v641, %v640
  %v678 = vpack.c.b16 %v643, %v642
  %v679 = vpack.c.b16 %v645, %v644
  %v680 = vpack.c.b16 %v647, %v646
  %v681 = vpack.c.b16 %v649, %v648
  %v682 = vpack.c.b16 %v651, %v650
  %v683 = vpack.c.b16 %v653, %v652
  %v684 = vpack.c.b16 %v655, %v654
  %v685 = vpack.c.b16 %v657, %v656
  %v686 = vpack.c.b16 %v659, %v658
  %v687 = vpack.c.b16 %v661, %v660
  %v688 = vpack.c.b16 %v663, %v662
  %v689 = vpack.c.b16 %v664, %v664
  %v691 = vsel %vm203, %v665, 0
  %v694 = vsel %vm203, %v666, 0
  %v697 = vsel %vm203, %v667, 0
  %v700 = vsel %vm203, %v668, 0
  %v703 = vsel %vm203, %v669, 0
  %v706 = vsel %vm203, %v670, 0
  %v709 = vsel %vm203, %v671, 0
  %v712 = vsel %vm203, %v672, 0
  %v715 = vsel %vm203, %v673, 0
  %v718 = vsel %vm203, %v674, 0
  %v721 = vsel %vm203, %v675, 0
  %v724 = vsel %vm203, %v676, 0
  %v727 = vsel %vm203, %v677, 0
  %v730 = vsel %vm203, %v678, 0
  %v733 = vsel %vm203, %v679, 0
  %v736 = vsel %vm203, %v680, 0
  %v739 = vsel %vm203, %v681, 0
  %v742 = vsel %vm203, %v682, 0
  %v745 = vsel %vm203, %v683, 0
  %v748 = vsel %vm203, %v684, 0
  %v751 = vsel %vm203, %v685, 0
  %v754 = vsel %vm203, %v686, 0
  %v757 = vsel %vm203, %v687, 0
  %v760 = vsel %vm203, %v688, 0
  %v763 = vsel %vm203, %v689, 0
  %765 = vmatprep.subr.bf16.mxu0 0
  %766 = vmatpush1.bf16.msra.mxu0 %v284
  %767 = vmatprep.subr.bf16.mxu0 0
  %768 = vmatpush1.bf16.msra.mxu0 0
  %769 = vmatprep.subr.bf16.mxu0 0
  %770 = vmatpush1.bf16.msra.mxu0 0
  %771 = vmatprep.subr.bf16.mxu0 0
  %772 = vmatpush1.bf16.msra.mxu0 0
  %773 = vmatprep.subr.bf16.mxu0 0
  %774 = vmatpush1.bf16.msra.mxu0 0
  %775 = vmatprep.subr.bf16.mxu0 0
  %776 = vmatpush1.bf16.msra.mxu0 0
  %777 = vmatprep.subr.bf16.mxu0 0
  %778 = vmatpush1.bf16.msra.mxu0 0
  %779 = vmatprep.subr.bf16.mxu0 0
  %780 = vmatpush1.bf16.msra.mxu0 0
  %781 = vmatprep.subr.bf16.mxu0 0
  %782 = vmatpush1.bf16.msra.mxu0 0
  %783 = vmatprep.subr.bf16.mxu0 0
  %784 = vmatpush1.bf16.msra.mxu0 0
  %785 = vmatprep.subr.bf16.mxu0 0
  %786 = vmatpush1.bf16.msra.mxu0 0
  %787 = vmatprep.subr.bf16.mxu0 0
  %788 = vmatpush1.bf16.msra.mxu0 0
  %789 = vmatprep.subr.bf16.mxu0 0
  %790 = vmatpush1.bf16.msra.mxu0 0
  %791 = vmatprep.subr.bf16.mxu0 0
  %792 = vmatpush1.bf16.msra.mxu0 0
  %793 = vmatprep.subr.bf16.mxu0 0
  %794 = vmatpush1.bf16.msra.mxu0 0
  %795 = vmatprep.subr.bf16.mxu0 0
  %796 = vmatpush1.bf16.msra.mxu0 0
  %797 = vmatprep.mubr.bf16.mxu0 0
  %798 = vmatmul.mubr.bf16.gmra.mrb[0].mxu0 %v691
  %v799 = vpop.f32.mrb[0].mxu0
  %v800 = vadd.f32 0.0, %v799
  %v801 = vpop.f32.mrb[0].mxu0
  %v802 = vpop.f32.mrb[0].mxu0
  %v803 = vadd.f32 0.0, %v802
  %v804 = vpop.f32.mrb[0].mxu0
  %805 = vmatprep.mubr.bf16.mxu0 0
  %806 = vmatmul.mubr.bf16.gmra.mrb[0].mxu0 %v694
  %v807 = vpop.f32.mrb[0].mxu0
  %v808 = vadd.f32 0.0, %v807
  %v809 = vpop.f32.mrb[0].mxu0
  %v810 = vpop.f32.mrb[0].mxu0
  %v811 = vadd.f32 0.0, %v810
  %v812 = vpop.f32.mrb[0].mxu0
  %813 = vmatprep.mubr.bf16.mxu0 0
  %814 = vmatmul.mubr.bf16.gmra.mrb[0].mxu0 %v697
  %v815 = vpop.f32.mrb[0].mxu0
  %v816 = vadd.f32 0.0, %v815
  %v817 = vpop.f32.mrb[0].mxu0
  %v818 = vpop.f32.mrb[0].mxu0
  %v819 = vadd.f32 0.0, %v818
  %v820 = vpop.f32.mrb[0].mxu0
  %821 = vmatprep.mubr.bf16.mxu0 0
  %822 = vmatmul.mubr.bf16.gmra.mrb[0].mxu0 %v700
  %v823 = vpop.f32.mrb[0].mxu0
  %v824 = vadd.f32 0.0, %v823
  %v825 = vpop.f32.mrb[0].mxu0
  %v826 = vpop.f32.mrb[0].mxu0
  %v827 = vadd.f32 0.0, %v826
  %v828 = vpop.f32.mrb[0].mxu0
  %829 = vmatprep.mubr.bf16.mxu0 0
  %830 = vmatmul.mubr.bf16.gmra.mrb[0].mxu0 %v703
  %v831 = vpop.f32.mrb[0].mxu0
  %v832 = vadd.f32 0.0, %v831
  %v833 = vpop.f32.mrb[0].mxu0
  %v834 = vpop.f32.mrb[0].mxu0
  %v835 = vadd.f32 0.0, %v834
  %v836 = vpop.f32.mrb[0].mxu0
  %837 = vmatprep.mubr.bf16.mxu0 0
  %838 = vmatmul.mubr.bf16.gmra.mrb[0].mxu0 %v706
  %v839 = vpop.f32.mrb[0].mxu0
  %v840 = vadd.f32 0.0, %v839
  %v841 = vpop.f32.mrb[0].mxu0
  %v842 = vpop.f32.mrb[0].mxu0
  %v843 = vadd.f32 0.0, %v842
  %v844 = vpop.f32.mrb[0].mxu0
  %845 = vmatprep.mubr.bf16.mxu0 0
  %846 = vmatmul.mubr.bf16.gmra.mrb[0].mxu0 %v709
  %v847 = vpop.f32.mrb[0].mxu0
  %v848 = vadd.f32 0.0, %v847
  %v849 = vpop.f32.mrb[0].mxu0
  %v850 = vpop.f32.mrb[0].mxu0
  %v851 = vadd.f32 0.0, %v850
  %v852 = vpop.f32.mrb[0].mxu0
  %853 = vmatprep.mubr.bf16.mxu0 0
  %854 = vmatmul.mubr.bf16.gmra.mrb[0].mxu0 %v712
  %v855 = vpop.f32.mrb[0].mxu0
  %v856 = vadd.f32 0.0, %v855
  %v857 = vpop.f32.mrb[0].mxu0
  %v858 = vpop.f32.mrb[0].mxu0
  %v859 = vadd.f32 0.0, %v858
  %v860 = vpop.f32.mrb[0].mxu0
  %861 = vmatprep.mubr.bf16.mxu0 0
  %862 = vmatmul.mubr.bf16.gmra.mrb[0].mxu0 %v715
  %v863 = vpop.f32.mrb[0].mxu0
  %v864 = vadd.f32 0.0, %v863
  %v865 = vpop.f32.mrb[0].mxu0
  %v866 = vpop.f32.mrb[0].mxu0
  %v867 = vadd.f32 0.0, %v866
  %v868 = vpop.f32.mrb[0].mxu0
  %869 = vmatprep.mubr.bf16.mxu0 0
  %870 = vmatmul.mubr.bf16.gmra.mrb[0].mxu0 %v718
  %v871 = vpop.f32.mrb[0].mxu0
  %v872 = vadd.f32 0.0, %v871
  %v873 = vpop.f32.mrb[0].mxu0
  %v874 = vpop.f32.mrb[0].mxu0
  %v875 = vadd.f32 0.0, %v874
  %v876 = vpop.f32.mrb[0].mxu0
  %877 = vmatprep.mubr.bf16.mxu0 0
  %878 = vmatmul.mubr.bf16.gmra.mrb[0].mxu0 %v721
  %v879 = vpop.f32.mrb[0].mxu0
  %v880 = vadd.f32 0.0, %v879
  %v881 = vpop.f32.mrb[0].mxu0
  %v882 = vpop.f32.mrb[0].mxu0
  %v883 = vadd.f32 0.0, %v882
  %v884 = vpop.f32.mrb[0].mxu0
  %885 = vmatprep.mubr.bf16.mxu0 0
  %886 = vmatmul.mubr.bf16.gmra.mrb[0].mxu0 %v724
  %v887 = vpop.f32.mrb[0].mxu0
  %v888 = vadd.f32 0.0, %v887
  %v889 = vpop.f32.mrb[0].mxu0
  %v890 = vpop.f32.mrb[0].mxu0
  %v891 = vadd.f32 0.0, %v890
  %v892 = vpop.f32.mrb[0].mxu0
  %893 = vmatprep.mubr.bf16.mxu0 0
  %894 = vmatmul.mubr.bf16.gmra.mrb[0].mxu0 %v727
  %v895 = vpop.f32.mrb[0].mxu0
  %v896 = vadd.f32 0.0, %v895
  %v897 = vpop.f32.mrb[0].mxu0
  %v898 = vpop.f32.mrb[0].mxu0
  %v899 = vadd.f32 0.0, %v898
  %v900 = vpop.f32.mrb[0].mxu0
  %901 = vmatprep.mubr.bf16.mxu0 0
  %902 = vmatmul.mubr.bf16.gmra.mrb[0].mxu0 %v730
  %v903 = vpop.f32.mrb[0].mxu0
  %v904 = vadd.f32 0.0, %v903
  %v905 = vpop.f32.mrb[0].mxu0
  %v906 = vpop.f32.mrb[0].mxu0
  %v907 = vadd.f32 0.0, %v906
  %v908 = vpop.f32.mrb[0].mxu0
  %909 = vmatprep.mubr.bf16.mxu0 0
  %910 = vmatmul.mubr.bf16.gmra.mrb[0].mxu0 %v733
  %v911 = vpop.f32.mrb[0].mxu0
  %v912 = vadd.f32 0.0, %v911
  %v913 = vpop.f32.mrb[0].mxu0
  %v914 = vpop.f32.mrb[0].mxu0
  %v915 = vadd.f32 0.0, %v914
  %v916 = vpop.f32.mrb[0].mxu0
  %917 = vmatprep.mubr.bf16.mxu0 0
  %918 = vmatmul.mubr.bf16.gmra.mrb[0].mxu0 %v736
  %v919 = vpop.f32.mrb[0].mxu0
  %v920 = vadd.f32 0.0, %v919
  %v921 = vpop.f32.mrb[0].mxu0
  %v922 = vpop.f32.mrb[0].mxu0
  %v923 = vadd.f32 0.0, %v922
  %v924 = vpop.f32.mrb[0].mxu0
  %925 = vmatprep.mubr.bf16.mxu0 0
  %926 = vmatmul.mubr.bf16.gmra.mrb[0].mxu0 %v739
  %v927 = vpop.f32.mrb[0].mxu0
  %v928 = vadd.f32 0.0, %v927
  %v929 = vpop.f32.mrb[0].mxu0
  %v930 = vpop.f32.mrb[0].mxu0
  %v931 = vadd.f32 0.0, %v930
  %v932 = vpop.f32.mrb[0].mxu0
  %933 = vmatprep.mubr.bf16.mxu0 0
  %934 = vmatmul.mubr.bf16.gmra.mrb[0].mxu0 %v742
  %v935 = vpop.f32.mrb[0].mxu0
  %v936 = vadd.f32 0.0, %v935
  %v937 = vpop.f32.mrb[0].mxu0
  %v938 = vpop.f32.mrb[0].mxu0
  %v939 = vadd.f32 0.0, %v938
  %v940 = vpop.f32.mrb[0].mxu0
  %941 = vmatprep.mubr.bf16.mxu0 0
  %942 = vmatmul.mubr.bf16.gmra.mrb[0].mxu0 %v745
  %v943 = vpop.f32.mrb[0].mxu0
  %v944 = vadd.f32 0.0, %v943
  %v945 = vpop.f32.mrb[0].mxu0
  %v946 = vpop.f32.mrb[0].mxu0
  %v947 = vadd.f32 0.0, %v946
  %v948 = vpop.f32.mrb[0].mxu0
  %949 = vmatprep.mubr.bf16.mxu0 0
  %950 = vmatmul.mubr.bf16.gmra.mrb[0].mxu0 %v748
  %v951 = vpop.f32.mrb[0].mxu0
  %v952 = vadd.f32 0.0, %v951
  %v953 = vpop.f32.mrb[0].mxu0
  %v954 = vpop.f32.mrb[0].mxu0
  %v955 = vadd.f32 0.0, %v954
  %v956 = vpop.f32.mrb[0].mxu0
  %957 = vmatprep.mubr.bf16.mxu0 0
  %958 = vmatmul.mubr.bf16.gmra.mrb[0].mxu0 %v751
  %v959 = vpop.f32.mrb[0].mxu0
  %v960 = vadd.f32 0.0, %v959
  %v961 = vpop.f32.mrb[0].mxu0
  %v962 = vpop.f32.mrb[0].mxu0
  %v963 = vadd.f32 0.0, %v962
  %v964 = vpop.f32.mrb[0].mxu0
  %965 = vmatprep.mubr.bf16.mxu0 0
  %966 = vmatmul.mubr.bf16.gmra.mrb[0].mxu0 %v754
  %v967 = vpop.f32.mrb[0].mxu0
  %v968 = vadd.f32 0.0, %v967
  %v969 = vpop.f32.mrb[0].mxu0
  %v970 = vpop.f32.mrb[0].mxu0
  %v971 = vadd.f32 0.0, %v970
  %v972 = vpop.f32.mrb[0].mxu0
  %973 = vmatprep.mubr.bf16.mxu0 0
  %974 = vmatmul.mubr.bf16.gmra.mrb[0].mxu0 %v757
  %v975 = vpop.f32.mrb[0].mxu0
  %v976 = vadd.f32 0.0, %v975
  %v977 = vpop.f32.mrb[0].mxu0
  %v978 = vpop.f32.mrb[0].mxu0
  %v979 = vadd.f32 0.0, %v978
  %v980 = vpop.f32.mrb[0].mxu0
  %981 = vmatprep.mubr.bf16.mxu0 0
  %982 = vmatmul.mubr.bf16.gmra.mrb[0].mxu0 %v760
  %v983 = vpop.f32.mrb[0].mxu0
  %v984 = vadd.f32 0.0, %v983
  %v985 = vpop.f32.mrb[0].mxu0
  %v986 = vpop.f32.mrb[0].mxu0
  %v987 = vadd.f32 0.0, %v986
  %v988 = vpop.f32.mrb[0].mxu0
  %989 = vmatprep.mubr.bf16.mxu0 0
  %990 = vmatmul.mubr.bf16.gmra.mrb[0].mxu0 %v763
  %v991 = vpop.f32.mrb[0].mxu0
  %v992 = vadd.f32 0.0, %v991
  %v993 = vpop.f32.mrb[0].mxu0
  %v994 = vpop.f32.mrb[0].mxu0
  %v995 = vpop.f32.mrb[0].mxu0
  %996 = vdwg.mxu0
  %v997 = vmax.f32 %v321, %v800
  %v998 = vmax.f32 %v324, %v803
  %v999 = vmax.f32 %v329, %v808
  %v1000 = vmax.f32 %v332, %v811
  %v1001 = vmax.f32 %v337, %v816
  %v1002 = vmax.f32 %v340, %v819
  %v1003 = vmax.f32 %v345, %v824
  %v1004 = vmax.f32 %v348, %v827
  %v1005 = vmax.f32 %v353, %v832
  %v1006 = vmax.f32 %v356, %v835
  %v1007 = vmax.f32 %v361, %v840
  %v1008 = vmax.f32 %v364, %v843
  %v1009 = vmax.f32 %v369, %v848
  %v1010 = vmax.f32 %v372, %v851
  %v1011 = vmax.f32 %v377, %v856
  %v1012 = vmax.f32 %v380, %v859
  %v1013 = vmax.f32 %v385, %v864
  %v1014 = vmax.f32 %v388, %v867
  %v1015 = vmax.f32 %v393, %v872
  %v1016 = vmax.f32 %v396, %v875
  %v1017 = vmax.f32 %v401, %v880
  %v1018 = vmax.f32 %v404, %v883
  %v1019 = vmax.f32 %v409, %v888
  %v1020 = vmax.f32 %v412, %v891
  %v1021 = vmax.f32 %v417, %v896
  %v1022 = vmax.f32 %v420, %v899
  %v1023 = vmax.f32 %v425, %v904
  %v1024 = vmax.f32 %v428, %v907
  %v1025 = vmax.f32 %v433, %v912
  %v1026 = vmax.f32 %v436, %v915
  %v1027 = vmax.f32 %v441, %v920
  %v1028 = vmax.f32 %v444, %v923
  %v1029 = vmax.f32 %v449, %v928
  %v1030 = vmax.f32 %v452, %v931
  %v1031 = vmax.f32 %v457, %v936
  %v1032 = vmax.f32 %v460, %v939
  %v1033 = vmax.f32 %v465, %v944
  %v1034 = vmax.f32 %v468, %v947
  %v1035 = vmax.f32 %v473, %v952
  %v1036 = vmax.f32 %v476, %v955
  %v1037 = vmax.f32 %v481, %v960
  %v1038 = vmax.f32 %v484, %v963
  %v1039 = vmax.f32 %v489, %v968
  %v1040 = vmax.f32 %v492, %v971
  %v1041 = vmax.f32 %v497, %v976
  %v1042 = vmax.f32 %v500, %v979
  %v1043 = vmax.f32 %v505, %v984
  %v1044 = vmax.f32 %v508, %v987
  %v1045 = vmax.f32 %v513, %v992
  %v1046 = vld [vmem:[%s2] sm:$0xf]
  %v1047 = vld [vmem:[%s2 + $0x4] sm:$0xf]
  %v1048 = vld [vmem:[%s2 + $0x8] sm:$0xf]
  %v1049 = vld [vmem:[%s2 + $0xc] sm:$0xf]
  %v1050 = vld [vmem:[%s2 + $0x10] sm:$0xf]
  %v1051 = vld [vmem:[%s2 + $0x14] sm:$0xf]
  %v1052 = vld [vmem:[%s2 + $0x18] sm:$0xf]
  %v1053 = vld [vmem:[%s2 + $0x1c] sm:$0xf]
  %v1054 = vld [vmem:[%s2 + $0x20] sm:$0xf]
  %v1055 = vld [vmem:[%s2 + $0x24] sm:$0xf]
  %v1056 = vld [vmem:[%s2 + $0x28] sm:$0xf]
  %v1057 = vld [vmem:[%s2 + $0x2c] sm:$0xf]
  %v1058 = vld [vmem:[%s2 + $0x30] sm:$0xf]
  %v1059 = vld [vmem:[%s2 + $0x34] sm:$0xf]
  %v1060 = vld [vmem:[%s2 + $0x38] sm:$0xf]
  %v1061 = vld [vmem:[%s2 + $0x3c] sm:$0xf]
  %v1062 = vld [vmem:[%s2 + $0x40] sm:$0xf]
  %v1063 = vld [vmem:[%s2 + $0x44] sm:$0xf]
  %v1064 = vld [vmem:[%s2 + $0x48] sm:$0xf]
  %v1065 = vld [vmem:[%s2 + $0x4c] sm:$0xf]
  %v1066 = vld [vmem:[%s2 + $0x50] sm:$0xf]
  %v1067 = vld [vmem:[%s2 + $0x54] sm:$0xf]
  %v1068 = vld [vmem:[%s2 + $0x58] sm:$0xf]
  %v1069 = vld [vmem:[%s2 + $0x5c] sm:$0xf]
  %v1070 = vld [vmem:[%s2 + $0x60] sm:$0xf]
  %v1071 = vld [vmem:[%s2 + $0x64] sm:$0xf]
  %v1072 = vld [vmem:[%s2 + $0x68] sm:$0xf]
  %v1073 = vld [vmem:[%s2 + $0x6c] sm:$0xf]
  %v1074 = vld [vmem:[%s2 + $0x70] sm:$0xf]
  %v1075 = vld [vmem:[%s2 + $0x74] sm:$0xf]
  %v1076 = vld [vmem:[%s2 + $0x78] sm:$0xf]
  %v1077 = vld [vmem:[%s2 + $0x7c] sm:$0xf]
  %v1078 = vld [vmem:[%s2 + $0x80] sm:$0xf]
  %v1079 = vld [vmem:[%s2 + $0x84] sm:$0xf]
  %v1080 = vld [vmem:[%s2 + $0x88] sm:$0xf]
  %v1081 = vld [vmem:[%s2 + $0x8c] sm:$0xf]
  %v1082 = vld [vmem:[%s2 + $0x90] sm:$0xf]
  %v1083 = vld [vmem:[%s2 + $0x94] sm:$0xf]
  %v1084 = vld [vmem:[%s2 + $0x98] sm:$0xf]
  %v1085 = vld [vmem:[%s2 + $0x9c] sm:$0xf]
  %v1086 = vld [vmem:[%s2 + $0xa0] sm:$0xf]
  %v1087 = vld [vmem:[%s2 + $0xa4] sm:$0xf]
  %v1088 = vld [vmem:[%s2 + $0xa8] sm:$0xf]
  %v1089 = vld [vmem:[%s2 + $0xac] sm:$0xf]
  %v1090 = vld [vmem:[%s2 + $0xb0] sm:$0xf]
  %v1091 = vld [vmem:[%s2 + $0xb4] sm:$0xf]
  %v1092 = vld [vmem:[%s2 + $0xb8] sm:$0xf]
  %v1093 = vld [vmem:[%s2 + $0xbc] sm:$0xf]
  %v1094 = vld [vmem:[%s2 + $0xc0] sm:$0xf]
  %v1144 = vunpack.c.l.b16 %v1046
  %v1145 = vunpack.c.l.b16 %v1047
  %v1146 = vunpack.c.l.b16 %v1048
  %v1147 = vunpack.c.l.b16 %v1049
  %v1148 = vunpack.c.l.b16 %v1050
  %v1149 = vunpack.c.l.b16 %v1051
  %v1150 = vunpack.c.l.b16 %v1052
  %v1151 = vunpack.c.l.b16 %v1053
  %v1152 = vunpack.c.l.b16 %v1054
  %v1153 = vunpack.c.l.b16 %v1055
  %v1154 = vunpack.c.l.b16 %v1056
  %v1155 = vunpack.c.l.b16 %v1057
  %v1156 = vunpack.c.l.b16 %v1058
  %v1157 = vunpack.c.l.b16 %v1059
  %v1158 = vunpack.c.l.b16 %v1060
  %v1159 = vunpack.c.l.b16 %v1061
  %v1160 = vunpack.c.l.b16 %v1062
  %v1161 = vunpack.c.l.b16 %v1063
  %v1162 = vunpack.c.l.b16 %v1064
  %v1163 = vunpack.c.l.b16 %v1065
  %v1164 = vunpack.c.l.b16 %v1066
  %v1165 = vunpack.c.l.b16 %v1067
  %v1166 = vunpack.c.l.b16 %v1068
  %v1167 = vunpack.c.l.b16 %v1069
  %v1168 = vunpack.c.l.b16 %v1070
  %v1169 = vunpack.c.l.b16 %v1071
  %v1170 = vunpack.c.l.b16 %v1072
  %v1171 = vunpack.c.l.b16 %v1073
  %v1172 = vunpack.c.l.b16 %v1074
  %v1173 = vunpack.c.l.b16 %v1075
  %v1174 = vunpack.c.l.b16 %v1076
  %v1175 = vunpack.c.l.b16 %v1077
  %v1176 = vunpack.c.l.b16 %v1078
  %v1177 = vunpack.c.l.b16 %v1079
  %v1178 = vunpack.c.l.b16 %v1080
  %v1179 = vunpack.c.l.b16 %v1081
  %v1180 = vunpack.c.l.b16 %v1082
  %v1181 = vunpack.c.l.b16 %v1083
  %v1182 = vunpack.c.l.b16 %v1084
  %v1183 = vunpack.c.l.b16 %v1085
  %v1184 = vunpack.c.l.b16 %v1086
  %v1185 = vunpack.c.l.b16 %v1087
  %v1186 = vunpack.c.l.b16 %v1088
  %v1187 = vunpack.c.l.b16 %v1089
  %v1188 = vunpack.c.l.b16 %v1090
  %v1189 = vunpack.c.l.b16 %v1091
  %v1190 = vunpack.c.l.b16 %v1092
  %v1191 = vunpack.c.l.b16 %v1093
  %v1192 = vunpack.c.l.b16 %v1094
  %v1193 = vpack.c.b16 %v1145, %v1144
  %v1194 = vpack.c.b16 %v1147, %v1146
  %v1195 = vpack.c.b16 %v1149, %v1148
  %v1196 = vpack.c.b16 %v1151, %v1150
  %v1197 = vpack.c.b16 %v1153, %v1152
  %v1198 = vpack.c.b16 %v1155, %v1154
  %v1199 = vpack.c.b16 %v1157, %v1156
  %v1200 = vpack.c.b16 %v1159, %v1158
  %v1201 = vpack.c.b16 %v1161, %v1160
  %v1202 = vpack.c.b16 %v1163, %v1162
  %v1203 = vpack.c.b16 %v1165, %v1164
  %v1204 = vpack.c.b16 %v1167, %v1166
  %v1205 = vpack.c.b16 %v1169, %v1168
  %v1206 = vpack.c.b16 %v1171, %v1170
  %v1207 = vpack.c.b16 %v1173, %v1172
  %v1208 = vpack.c.b16 %v1175, %v1174
  %v1209 = vpack.c.b16 %v1177, %v1176
  %v1210 = vpack.c.b16 %v1179, %v1178
  %v1211 = vpack.c.b16 %v1181, %v1180
  %v1212 = vpack.c.b16 %v1183, %v1182
  %v1213 = vpack.c.b16 %v1185, %v1184
  %v1214 = vpack.c.b16 %v1187, %v1186
  %v1215 = vpack.c.b16 %v1189, %v1188
  %v1216 = vpack.c.b16 %v1191, %v1190
  %v1217 = vpack.c.b16 %v1192, %v1192
  %v1219 = vsel %vm203, %v1193, 0
  %v1222 = vsel %vm203, %v1194, 0
  %v1225 = vsel %vm203, %v1195, 0
  %v1228 = vsel %vm203, %v1196, 0
  %v1231 = vsel %vm203, %v1197, 0
  %v1234 = vsel %vm203, %v1198, 0
  %v1237 = vsel %vm203, %v1199, 0
  %v1240 = vsel %vm203, %v1200, 0
  %v1243 = vsel %vm203, %v1201, 0
  %v1246 = vsel %vm203, %v1202, 0
  %v1249 = vsel %vm203, %v1203, 0
  %v1252 = vsel %vm203, %v1204, 0
  %v1255 = vsel %vm203, %v1205, 0
  %v1258 = vsel %vm203, %v1206, 0
  %v1261 = vsel %vm203, %v1207, 0
  %v1264 = vsel %vm203, %v1208, 0
  %v1267 = vsel %vm203, %v1209, 0
  %v1270 = vsel %vm203, %v1210, 0
  %v1273 = vsel %vm203, %v1211, 0
  %v1276 = vsel %vm203, %v1212, 0
  %v1279 = vsel %vm203, %v1213, 0
  %v1282 = vsel %vm203, %v1214, 0
  %v1285 = vsel %vm203, %v1215, 0
  %v1288 = vsel %vm203, %v1216, 0
  %v1291 = vsel %vm203, %v1217, 0
  %1293 = vmatprep.subr.bf16.mxu0 0
  %1294 = vmatpush1.bf16.msra.mxu0 %v284
  %1295 = vmatprep.subr.bf16.mxu0 0
  %1296 = vmatpush1.bf16.msra.mxu0 0
  %1297 = vmatprep.subr.bf16.mxu0 0
  %1298 = vmatpush1.bf16.msra.mxu0 0
  %1299 = vmatprep.subr.bf16.mxu0 0
  %1300 = vmatpush1.bf16.msra.mxu0 0
  %1301 = vmatprep.subr.bf16.mxu0 0
  %1302 = vmatpush1.bf16.msra.mxu0 0
  %1303 = vmatprep.subr.bf16.mxu0 0
  %1304 = vmatpush1.bf16.msra.mxu0 0
  %1305 = vmatprep.subr.bf16.mxu0 0
  %1306 = vmatpush1.bf16.msra.mxu0 0
  %1307 = vmatprep.subr.bf16.mxu0 0
  %1308 = vmatpush1.bf16.msra.mxu0 0
  %1309 = vmatprep.subr.bf16.mxu0 0
  %1310 = vmatpush1.bf16.msra.mxu0 0
  %1311 = vmatprep.subr.bf16.mxu0 0
  %1312 = vmatpush1.bf16.msra.mxu0 0
  %1313 = vmatprep.subr.bf16.mxu0 0
  %1314 = vmatpush1.bf16.msra.mxu0 0
  %1315 = vmatprep.subr.bf16.mxu0 0
  %1316 = vmatpush1.bf16.msra.mxu0 0
  %1317 = vmatprep.subr.bf16.mxu0 0
  %1318 = vmatpush1.bf16.msra.mxu0 0
  %1319 = vmatprep.subr.bf16.mxu0 0
  %1320 = vmatpush1.bf16.msra.mxu0 0
  %1321 = vmatprep.subr.bf16.mxu0 0
  %1322 = vmatpush1.bf16.msra.mxu0 0
  %1323 = vmatprep.subr.bf16.mxu0 0
  %1324 = vmatpush1.bf16.msra.mxu0 0
  %1325 = vmatprep.mubr.bf16.mxu0 0
  %1326 = vmatmul.mubr.bf16.gmra.mrb[0].mxu0 %v1219
  %v1327 = vpop.f32.mrb[0].mxu0
  %v1328 = vadd.f32 0.0, %v1327
  %v1329 = vpop.f32.mrb[0].mxu0
  %v1330 = vpop.f32.mrb[0].mxu0
  %v1331 = vadd.f32 0.0, %v1330
  %v1332 = vpop.f32.mrb[0].mxu0
  %1333 = vmatprep.mubr.bf16.mxu0 0
  %1334 = vmatmul.mubr.bf16.gmra.mrb[0].mxu0 %v1222
  %v1335 = vpop.f32.mrb[0].mxu0
  %v1336 = vadd.f32 0.0, %v1335
  %v1337 = vpop.f32.mrb[0].mxu0
  %v1338 = vpop.f32.mrb[0].mxu0
  %v1339 = vadd.f32 0.0, %v1338
  %v1340 = vpop.f32.mrb[0].mxu0
  %1341 = vmatprep.mubr.bf16.mxu0 0
  %1342 = vmatmul.mubr.bf16.gmra.mrb[0].mxu0 %v1225
  %v1343 = vpop.f32.mrb[0].mxu0
  %v1344 = vadd.f32 0.0, %v1343
  %v1345 = vpop.f32.mrb[0].mxu0
  %v1346 = vpop.f32.mrb[0].mxu0
  %v1347 = vadd.f32 0.0, %v1346
  %v1348 = vpop.f32.mrb[0].mxu0
  %1349 = vmatprep.mubr.bf16.mxu0 0
  %1350 = vmatmul.mubr.bf16.gmra.mrb[0].mxu0 %v1228
  %v1351 = vpop.f32.mrb[0].mxu0
  %v1352 = vadd.f32 0.0, %v1351
  %v1353 = vpop.f32.mrb[0].mxu0
  %v1354 = vpop.f32.mrb[0].mxu0
  %v1355 = vadd.f32 0.0, %v1354
  %v1356 = vpop.f32.mrb[0].mxu0
  %1357 = vmatprep.mubr.bf16.mxu0 0
  %1358 = vmatmul.mubr.bf16.gmra.mrb[0].mxu0 %v1231
  %v1359 = vpop.f32.mrb[0].mxu0
  %v1360 = vadd.f32 0.0, %v1359
  %v1361 = vpop.f32.mrb[0].mxu0
  %v1362 = vpop.f32.mrb[0].mxu0
  %v1363 = vadd.f32 0.0, %v1362
  %v1364 = vpop.f32.mrb[0].mxu0
  %1365 = vmatprep.mubr.bf16.mxu0 0
  %1366 = vmatmul.mubr.bf16.gmra.mrb[0].mxu0 %v1234
  %v1367 = vpop.f32.mrb[0].mxu0
  %v1368 = vadd.f32 0.0, %v1367
  %v1369 = vpop.f32.mrb[0].mxu0
  %v1370 = vpop.f32.mrb[0].mxu0
  %v1371 = vadd.f32 0.0, %v1370
  %v1372 = vpop.f32.mrb[0].mxu0
  %1373 = vmatprep.mubr.bf16.mxu0 0
  %1374 = vmatmul.mubr.bf16.gmra.mrb[0].mxu0 %v1237
  %v1375 = vpop.f32.mrb[0].mxu0
  %v1376 = vadd.f32 0.0, %v1375
  %v1377 = vpop.f32.mrb[0].mxu0
  %v1378 = vpop.f32.mrb[0].mxu0
  %v1379 = vadd.f32 0.0, %v1378
  %v1380 = vpop.f32.mrb[0].mxu0
  %1381 = vmatprep.mubr.bf16.mxu0 0
  %1382 = vmatmul.mubr.bf16.gmra.mrb[0].mxu0 %v1240
  %v1383 = vpop.f32.mrb[0].mxu0
  %v1384 = vadd.f32 0.0, %v1383
  %v1385 = vpop.f32.mrb[0].mxu0
  %v1386 = vpop.f32.mrb[0].mxu0
  %v1387 = vadd.f32 0.0, %v1386
  %v1388 = vpop.f32.mrb[0].mxu0
  %1389 = vmatprep.mubr.bf16.mxu0 0
  %1390 = vmatmul.mubr.bf16.gmra.mrb[0].mxu0 %v1243
  %v1391 = vpop.f32.mrb[0].mxu0
  %v1392 = vadd.f32 0.0, %v1391
  %v1393 = vpop.f32.mrb[0].mxu0
  %v1394 = vpop.f32.mrb[0].mxu0
  %v1395 = vadd.f32 0.0, %v1394
  %v1396 = vpop.f32.mrb[0].mxu0
  %1397 = vmatprep.mubr.bf16.mxu0 0
  %1398 = vmatmul.mubr.bf16.gmra.mrb[0].mxu0 %v1246
  %v1399 = vpop.f32.mrb[0].mxu0
  %v1400 = vadd.f32 0.0, %v1399
  %v1401 = vpop.f32.mrb[0].mxu0
  %v1402 = vpop.f32.mrb[0].mxu0
  %v1403 = vadd.f32 0.0, %v1402
  %v1404 = vpop.f32.mrb[0].mxu0
  %1405 = vmatprep.mubr.bf16.mxu0 0
  %1406 = vmatmul.mubr.bf16.gmra.mrb[0].mxu0 %v1249
  %v1407 = vpop.f32.mrb[0].mxu0
  %v1408 = vadd.f32 0.0, %v1407
  %v1409 = vpop.f32.mrb[0].mxu0
  %v1410 = vpop.f32.mrb[0].mxu0
  %v1411 = vadd.f32 0.0, %v1410
  %v1412 = vpop.f32.mrb[0].mxu0
  %1413 = vmatprep.mubr.bf16.mxu0 0
  %1414 = vmatmul.mubr.bf16.gmra.mrb[0].mxu0 %v1252
  %v1415 = vpop.f32.mrb[0].mxu0
  %v1416 = vadd.f32 0.0, %v1415
  %v1417 = vpop.f32.mrb[0].mxu0
  %v1418 = vpop.f32.mrb[0].mxu0
  %v1419 = vadd.f32 0.0, %v1418
  %v1420 = vpop.f32.mrb[0].mxu0
  %1421 = vmatprep.mubr.bf16.mxu0 0
  %1422 = vmatmul.mubr.bf16.gmra.mrb[0].mxu0 %v1255
  %v1423 = vpop.f32.mrb[0].mxu0
  %v1424 = vadd.f32 0.0, %v1423
  %v1425 = vpop.f32.mrb[0].mxu0
  %v1426 = vpop.f32.mrb[0].mxu0
  %v1427 = vadd.f32 0.0, %v1426
  %v1428 = vpop.f32.mrb[0].mxu0
  %1429 = vmatprep.mubr.bf16.mxu0 0
  %1430 = vmatmul.mubr.bf16.gmra.mrb[0].mxu0 %v1258
  %v1431 = vpop.f32.mrb[0].mxu0
  %v1432 = vadd.f32 0.0, %v1431
  %v1433 = vpop.f32.mrb[0].mxu0
  %v1434 = vpop.f32.mrb[0].mxu0
  %v1435 = vadd.f32 0.0, %v1434
  %v1436 = vpop.f32.mrb[0].mxu0
  %1437 = vmatprep.mubr.bf16.mxu0 0
  %1438 = vmatmul.mubr.bf16.gmra.mrb[0].mxu0 %v1261
  %v1439 = vpop.f32.mrb[0].mxu0
  %v1440 = vadd.f32 0.0, %v1439
  %v1441 = vpop.f32.mrb[0].mxu0
  %v1442 = vpop.f32.mrb[0].mxu0
  %v1443 = vadd.f32 0.0, %v1442
  %v1444 = vpop.f32.mrb[0].mxu0
  %1445 = vmatprep.mubr.bf16.mxu0 0
  %1446 = vmatmul.mubr.bf16.gmra.mrb[0].mxu0 %v1264
  %v1447 = vpop.f32.mrb[0].mxu0
  %v1448 = vadd.f32 0.0, %v1447
  %v1449 = vpop.f32.mrb[0].mxu0
  %v1450 = vpop.f32.mrb[0].mxu0
  %v1451 = vadd.f32 0.0, %v1450
  %v1452 = vpop.f32.mrb[0].mxu0
  %1453 = vmatprep.mubr.bf16.mxu0 0
  %1454 = vmatmul.mubr.bf16.gmra.mrb[0].mxu0 %v1267
  %v1455 = vpop.f32.mrb[0].mxu0
  %v1456 = vadd.f32 0.0, %v1455
  %v1457 = vpop.f32.mrb[0].mxu0
  %v1458 = vpop.f32.mrb[0].mxu0
  %v1459 = vadd.f32 0.0, %v1458
  %v1460 = vpop.f32.mrb[0].mxu0
  %1461 = vmatprep.mubr.bf16.mxu0 0
  %1462 = vmatmul.mubr.bf16.gmra.mrb[0].mxu0 %v1270
  %v1463 = vpop.f32.mrb[0].mxu0
  %v1464 = vadd.f32 0.0, %v1463
  %v1465 = vpop.f32.mrb[0].mxu0
  %v1466 = vpop.f32.mrb[0].mxu0
  %v1467 = vadd.f32 0.0, %v1466
  %v1468 = vpop.f32.mrb[0].mxu0
  %1469 = vmatprep.mubr.bf16.mxu0 0
  %1470 = vmatmul.mubr.bf16.gmra.mrb[0].mxu0 %v1273
  %v1471 = vpop.f32.mrb[0].mxu0
  %v1472 = vadd.f32 0.0, %v1471
  %v1473 = vpop.f32.mrb[0].mxu0
  %v1474 = vpop.f32.mrb[0].mxu0
  %v1475 = vadd.f32 0.0, %v1474
  %v1476 = vpop.f32.mrb[0].mxu0
  %1477 = vmatprep.mubr.bf16.mxu0 0
  %1478 = vmatmul.mubr.bf16.gmra.mrb[0].mxu0 %v1276
  %v1479 = vpop.f32.mrb[0].mxu0
  %v1480 = vadd.f32 0.0, %v1479
  %v1481 = vpop.f32.mrb[0].mxu0
  %v1482 = vpop.f32.mrb[0].mxu0
  %v1483 = vadd.f32 0.0, %v1482
  %v1484 = vpop.f32.mrb[0].mxu0
  %1485 = vmatprep.mubr.bf16.mxu0 0
  %1486 = vmatmul.mubr.bf16.gmra.mrb[0].mxu0 %v1279
  %v1487 = vpop.f32.mrb[0].mxu0
  %v1488 = vadd.f32 0.0, %v1487
  %v1489 = vpop.f32.mrb[0].mxu0
  %v1490 = vpop.f32.mrb[0].mxu0
  %v1491 = vadd.f32 0.0, %v1490
  %v1492 = vpop.f32.mrb[0].mxu0
  %1493 = vmatprep.mubr.bf16.mxu0 0
  %1494 = vmatmul.mubr.bf16.gmra.mrb[0].mxu0 %v1282
  %v1495 = vpop.f32.mrb[0].mxu0
  %v1496 = vadd.f32 0.0, %v1495
  %v1497 = vpop.f32.mrb[0].mxu0
  %v1498 = vpop.f32.mrb[0].mxu0
  %v1499 = vadd.f32 0.0, %v1498
  %v1500 = vpop.f32.mrb[0].mxu0
  %1501 = vmatprep.mubr.bf16.mxu0 0
  %1502 = vmatmul.mubr.bf16.gmra.mrb[0].mxu0 %v1285
  %v1503 = vpop.f32.mrb[0].mxu0
  %v1504 = vadd.f32 0.0, %v1503
  %v1505 = vpop.f32.mrb[0].mxu0
  %v1506 = vpop.f32.mrb[0].mxu0
  %v1507 = vadd.f32 0.0, %v1506
  %v1508 = vpop.f32.mrb[0].mxu0
  %1509 = vmatprep.mubr.bf16.mxu0 0
  %1510 = vmatmul.mubr.bf16.gmra.mrb[0].mxu0 %v1288
  %v1511 = vpop.f32.mrb[0].mxu0
  %v1512 = vadd.f32 0.0, %v1511
  %v1513 = vpop.f32.mrb[0].mxu0
  %v1514 = vpop.f32.mrb[0].mxu0
  %v1515 = vadd.f32 0.0, %v1514
  %v1516 = vpop.f32.mrb[0].mxu0
  %1517 = vmatprep.mubr.bf16.mxu0 0
  %1518 = vmatmul.mubr.bf16.gmra.mrb[0].mxu0 %v1291
  %v1519 = vpop.f32.mrb[0].mxu0
  %v1520 = vadd.f32 0.0, %v1519
  %v1521 = vpop.f32.mrb[0].mxu0
  %v1522 = vpop.f32.mrb[0].mxu0
  %v1523 = vpop.f32.mrb[0].mxu0
  %1524 = vdwg.mxu0
  %v1525 = vld [vmem:[%s3] sm:$0xf]
  %v1526 = vld [vmem:[%s3 + $0x4] sm:$0xf]
  %v1527 = vld [vmem:[%s3 + $0x8] sm:$0xf]
  %v1528 = vld [vmem:[%s3 + $0xc] sm:$0xf]
  %v1529 = vld [vmem:[%s3 + $0x10] sm:$0xf]
  %v1530 = vld [vmem:[%s3 + $0x14] sm:$0xf]
  %v1531 = vld [vmem:[%s3 + $0x18] sm:$0xf]
  %v1532 = vld [vmem:[%s3 + $0x1c] sm:$0xf]
  %v1533 = vld [vmem:[%s3 + $0x20] sm:$0xf]
  %v1534 = vld [vmem:[%s3 + $0x24] sm:$0xf]
  %v1535 = vld [vmem:[%s3 + $0x28] sm:$0xf]
  %v1536 = vld [vmem:[%s3 + $0x2c] sm:$0xf]
  %v1537 = vld [vmem:[%s3 + $0x30] sm:$0xf]
  %v1538 = vld [vmem:[%s3 + $0x34] sm:$0xf]
  %v1539 = vld [vmem:[%s3 + $0x38] sm:$0xf]
  %v1540 = vld [vmem:[%s3 + $0x3c] sm:$0xf]
  %v1541 = vld [vmem:[%s3 + $0x40] sm:$0xf]
  %v1542 = vld [vmem:[%s3 + $0x44] sm:$0xf]
  %v1543 = vld [vmem:[%s3 + $0x48] sm:$0xf]
  %v1544 = vld [vmem:[%s3 + $0x4c] sm:$0xf]
  %v1545 = vld [vmem:[%s3 + $0x50] sm:$0xf]
  %v1546 = vld [vmem:[%s3 + $0x54] sm:$0xf]
  %v1547 = vld [vmem:[%s3 + $0x58] sm:$0xf]
  %v1548 = vld [vmem:[%s3 + $0x5c] sm:$0xf]
  %v1549 = vld [vmem:[%s3 + $0x60] sm:$0xf]
  %v1550 = vld [vmem:[%s3 + $0x64] sm:$0xf]
  %v1551 = vld [vmem:[%s3 + $0x68] sm:$0xf]
  %v1552 = vld [vmem:[%s3 + $0x6c] sm:$0xf]
  %v1553 = vld [vmem:[%s3 + $0x70] sm:$0xf]
  %v1554 = vld [vmem:[%s3 + $0x74] sm:$0xf]
  %v1555 = vld [vmem:[%s3 + $0x78] sm:$0xf]
  %v1556 = vld [vmem:[%s3 + $0x7c] sm:$0xf]
  %v1557 = vld [vmem:[%s3 + $0x80] sm:$0xf]
  %v1558 = vld [vmem:[%s3 + $0x84] sm:$0xf]
  %v1559 = vld [vmem:[%s3 + $0x88] sm:$0xf]
  %v1560 = vld [vmem:[%s3 + $0x8c] sm:$0xf]
  %v1561 = vld [vmem:[%s3 + $0x90] sm:$0xf]
  %v1562 = vld [vmem:[%s3 + $0x94] sm:$0xf]
  %v1563 = vld [vmem:[%s3 + $0x98] sm:$0xf]
  %v1564 = vld [vmem:[%s3 + $0x9c] sm:$0xf]
  %v1565 = vld [vmem:[%s3 + $0xa0] sm:$0xf]
  %v1566 = vld [vmem:[%s3 + $0xa4] sm:$0xf]
  %v1567 = vld [vmem:[%s3 + $0xa8] sm:$0xf]
  %v1568 = vld [vmem:[%s3 + $0xac] sm:$0xf]
  %v1569 = vld [vmem:[%s3 + $0xb0] sm:$0xf]
  %v1570 = vld [vmem:[%s3 + $0xb4] sm:$0xf]
  %v1571 = vld [vmem:[%s3 + $0xb8] sm:$0xf]
  %v1572 = vld [vmem:[%s3 + $0xbc] sm:$0xf]
  %v1573 = vld [vmem:[%s3 + $0xc0] sm:$0xf]
  %v1623 = vunpack.c.l.b16 %v1525
  %v1624 = vunpack.c.l.b16 %v1526
  %v1625 = vunpack.c.l.b16 %v1527
  %v1626 = vunpack.c.l.b16 %v1528
  %v1627 = vunpack.c.l.b16 %v1529
  %v1628 = vunpack.c.l.b16 %v1530
  %v1629 = vunpack.c.l.b16 %v1531
  %v1630 = vunpack.c.l.b16 %v1532
  %v1631 = vunpack.c.l.b16 %v1533
  %v1632 = vunpack.c.l.b16 %v1534
  %v1633 = vunpack.c.l.b16 %v1535
  %v1634 = vunpack.c.l.b16 %v1536
  %v1635 = vunpack.c.l.b16 %v1537
  %v1636 = vunpack.c.l.b16 %v1538
  %v1637 = vunpack.c.l.b16 %v1539
  %v1638 = vunpack.c.l.b16 %v1540
  %v1639 = vunpack.c.l.b16 %v1541
  %v1640 = vunpack.c.l.b16 %v1542
  %v1641 = vunpack.c.l.b16 %v1543
  %v1642 = vunpack.c.l.b16 %v1544
  %v1643 = vunpack.c.l.b16 %v1545
  %v1644 = vunpack.c.l.b16 %v1546
  %v1645 = vunpack.c.l.b16 %v1547
  %v1646 = vunpack.c.l.b16 %v1548
  %v1647 = vunpack.c.l.b16 %v1549
  %v1648 = vunpack.c.l.b16 %v1550
  %v1649 = vunpack.c.l.b16 %v1551
  %v1650 = vunpack.c.l.b16 %v1552
  %v1651 = vunpack.c.l.b16 %v1553
  %v1652 = vunpack.c.l.b16 %v1554
  %v1653 = vunpack.c.l.b16 %v1555
  %v1654 = vunpack.c.l.b16 %v1556
  %v1655 = vunpack.c.l.b16 %v1557
  %v1656 = vunpack.c.l.b16 %v1558
  %v1657 = vunpack.c.l.b16 %v1559
  %v1658 = vunpack.c.l.b16 %v1560
  %v1659 = vunpack.c.l.b16 %v1561
  %v1660 = vunpack.c.l.b16 %v1562
  %v1661 = vunpack.c.l.b16 %v1563
  %v1662 = vunpack.c.l.b16 %v1564
  %v1663 = vunpack.c.l.b16 %v1565
  %v1664 = vunpack.c.l.b16 %v1566
  %v1665 = vunpack.c.l.b16 %v1567
  %v1666 = vunpack.c.l.b16 %v1568
  %v1667 = vunpack.c.l.b16 %v1569
  %v1668 = vunpack.c.l.b16 %v1570
  %v1669 = vunpack.c.l.b16 %v1571
  %v1670 = vunpack.c.l.b16 %v1572
  %v1671 = vunpack.c.l.b16 %v1573
  %v1672 = vpack.c.b16 %v1624, %v1623
  %v1673 = vpack.c.b16 %v1626, %v1625
  %v1674 = vpack.c.b16 %v1628, %v1627
  %v1675 = vpack.c.b16 %v1630, %v1629
  %v1676 = vpack.c.b16 %v1632, %v1631
  %v1677 = vpack.c.b16 %v1634, %v1633
  %v1678 = vpack.c.b16 %v1636, %v1635
  %v1679 = vpack.c.b16 %v1638, %v1637
  %v1680 = vpack.c.b16 %v1640, %v1639
  %v1681 = vpack.c.b16 %v1642, %v1641
  %v1682 = vpack.c.b16 %v1644, %v1643
  %v1683 = vpack.c.b16 %v1646, %v1645
  %v1684 = vpack.c.b16 %v1648, %v1647
  %v1685 = vpack.c.b16 %v1650, %v1649
  %v1686 = vpack.c.b16 %v1652, %v1651
  %v1687 = vpack.c.b16 %v1654, %v1653
  %v1688 = vpack.c.b16 %v1656, %v1655
  %v1689 = vpack.c.b16 %v1658, %v1657
  %v1690 = vpack.c.b16 %v1660, %v1659
  %v1691 = vpack.c.b16 %v1662, %v1661
  %v1692 = vpack.c.b16 %v1664, %v1663
  %v1693 = vpack.c.b16 %v1666, %v1665
  %v1694 = vpack.c.b16 %v1668, %v1667
  %v1695 = vpack.c.b16 %v1670, %v1669
  %v1696 = vpack.c.b16 %v1671, %v1671
  %v1698 = vsel %vm203, %v1672, 0
  %v1701 = vsel %vm203, %v1673, 0
  %v1704 = vsel %vm203, %v1674, 0
  %v1707 = vsel %vm203, %v1675, 0
  %v1710 = vsel %vm203, %v1676, 0
  %v1713 = vsel %vm203, %v1677, 0
  %v1716 = vsel %vm203, %v1678, 0
  %v1719 = vsel %vm203, %v1679, 0
  %v1722 = vsel %vm203, %v1680, 0
  %v1725 = vsel %vm203, %v1681, 0
  %v1728 = vsel %vm203, %v1682, 0
  %v1731 = vsel %vm203, %v1683, 0
  %v1734 = vsel %vm203, %v1684, 0
  %v1737 = vsel %vm203, %v1685, 0
  %v1740 = vsel %vm203, %v1686, 0
  %v1743 = vsel %vm203, %v1687, 0
  %v1746 = vsel %vm203, %v1688, 0
  %v1749 = vsel %vm203, %v1689, 0
  %v1752 = vsel %vm203, %v1690, 0
  %v1755 = vsel %vm203, %v1691, 0
  %v1758 = vsel %vm203, %v1692, 0
  %v1761 = vsel %vm203, %v1693, 0
  %v1764 = vsel %vm203, %v1694, 0
  %v1767 = vsel %vm203, %v1695, 0
  %v1770 = vsel %vm203, %v1696, 0
  %1772 = vmatprep.subr.bf16.mxu0 0
  %1773 = vmatpush1.bf16.msra.mxu0 %v284
  %1774 = vmatprep.subr.bf16.mxu0 0
  %1775 = vmatpush1.bf16.msra.mxu0 0
  %1776 = vmatprep.subr.bf16.mxu0 0
  %1777 = vmatpush1.bf16.msra.mxu0 0
  %1778 = vmatprep.subr.bf16.mxu0 0
  %1779 = vmatpush1.bf16.msra.mxu0 0
  %1780 = vmatprep.subr.bf16.mxu0 0
  %1781 = vmatpush1.bf16.msra.mxu0 0
  %1782 = vmatprep.subr.bf16.mxu0 0
  %1783 = vmatpush1.bf16.msra.mxu0 0
  %1784 = vmatprep.subr.bf16.mxu0 0
  %1785 = vmatpush1.bf16.msra.mxu0 0
  %1786 = vmatprep.subr.bf16.mxu0 0
  %1787 = vmatpush1.bf16.msra.mxu0 0
  %1788 = vmatprep.subr.bf16.mxu0 0
  %1789 = vmatpush1.bf16.msra.mxu0 0
  %1790 = vmatprep.subr.bf16.mxu0 0
  %1791 = vmatpush1.bf16.msra.mxu0 0
  %1792 = vmatprep.subr.bf16.mxu0 0
  %1793 = vmatpush1.bf16.msra.mxu0 0
  %1794 = vmatprep.subr.bf16.mxu0 0
  %1795 = vmatpush1.bf16.msra.mxu0 0
  %1796 = vmatprep.subr.bf16.mxu0 0
  %1797 = vmatpush1.bf16.msra.mxu0 0
  %1798 = vmatprep.subr.bf16.mxu0 0
  %1799 = vmatpush1.bf16.msra.mxu0 0
  %1800 = vmatprep.subr.bf16.mxu0 0
  %1801 = vmatpush1.bf16.msra.mxu0 0
  %1802 = vmatprep.subr.bf16.mxu0 0
  %1803 = vmatpush1.bf16.msra.mxu0 0
  %1804 = vmatprep.mubr.bf16.mxu0 0
  %1805 = vmatmul.mubr.bf16.gmra.mrb[0].mxu0 %v1698
  %v1806 = vpop.f32.mrb[0].mxu0
  %v1807 = vadd.f32 0.0, %v1806
  %v1808 = vpop.f32.mrb[0].mxu0
  %v1809 = vpop.f32.mrb[0].mxu0
  %v1810 = vadd.f32 0.0, %v1809
  %v1811 = vpop.f32.mrb[0].mxu0
  %1812 = vmatprep.mubr.bf16.mxu0 0
  %1813 = vmatmul.mubr.bf16.gmra.mrb[0].mxu0 %v1701
  %v1814 = vpop.f32.mrb[0].mxu0
  %v1815 = vadd.f32 0.0, %v1814
  %v1816 = vpop.f32.mrb[0].mxu0
  %v1817 = vpop.f32.mrb[0].mxu0
  %v1818 = vadd.f32 0.0, %v1817
  %v1819 = vpop.f32.mrb[0].mxu0
  %1820 = vmatprep.mubr.bf16.mxu0 0
  %1821 = vmatmul.mubr.bf16.gmra.mrb[0].mxu0 %v1704
  %v1822 = vpop.f32.mrb[0].mxu0
  %v1823 = vadd.f32 0.0, %v1822
  %v1824 = vpop.f32.mrb[0].mxu0
  %v1825 = vpop.f32.mrb[0].mxu0
  %v1826 = vadd.f32 0.0, %v1825
  %v1827 = vpop.f32.mrb[0].mxu0
  %1828 = vmatprep.mubr.bf16.mxu0 0
  %1829 = vmatmul.mubr.bf16.gmra.mrb[0].mxu0 %v1707
  %v1830 = vpop.f32.mrb[0].mxu0
  %v1831 = vadd.f32 0.0, %v1830
  %v1832 = vpop.f32.mrb[0].mxu0
  %v1833 = vpop.f32.mrb[0].mxu0
  %v1834 = vadd.f32 0.0, %v1833
  %v1835 = vpop.f32.mrb[0].mxu0
  %1836 = vmatprep.mubr.bf16.mxu0 0
  %1837 = vmatmul.mubr.bf16.gmra.mrb[0].mxu0 %v1710
  %v1838 = vpop.f32.mrb[0].mxu0
  %v1839 = vadd.f32 0.0, %v1838
  %v1840 = vpop.f32.mrb[0].mxu0
  %v1841 = vpop.f32.mrb[0].mxu0
  %v1842 = vadd.f32 0.0, %v1841
  %v1843 = vpop.f32.mrb[0].mxu0
  %1844 = vmatprep.mubr.bf16.mxu0 0
  %1845 = vmatmul.mubr.bf16.gmra.mrb[0].mxu0 %v1713
  %v1846 = vpop.f32.mrb[0].mxu0
  %v1847 = vadd.f32 0.0, %v1846
  %v1848 = vpop.f32.mrb[0].mxu0
  %v1849 = vpop.f32.mrb[0].mxu0
  %v1850 = vadd.f32 0.0, %v1849
  %v1851 = vpop.f32.mrb[0].mxu0
  %1852 = vmatprep.mubr.bf16.mxu0 0
  %1853 = vmatmul.mubr.bf16.gmra.mrb[0].mxu0 %v1716
  %v1854 = vpop.f32.mrb[0].mxu0
  %v1855 = vadd.f32 0.0, %v1854
  %v1856 = vpop.f32.mrb[0].mxu0
  %v1857 = vpop.f32.mrb[0].mxu0
  %v1858 = vadd.f32 0.0, %v1857
  %v1859 = vpop.f32.mrb[0].mxu0
  %1860 = vmatprep.mubr.bf16.mxu0 0
  %1861 = vmatmul.mubr.bf16.gmra.mrb[0].mxu0 %v1719
  %v1862 = vpop.f32.mrb[0].mxu0
  %v1863 = vadd.f32 0.0, %v1862
  %v1864 = vpop.f32.mrb[0].mxu0
  %v1865 = vpop.f32.mrb[0].mxu0
  %v1866 = vadd.f32 0.0, %v1865
  %v1867 = vpop.f32.mrb[0].mxu0
  %1868 = vmatprep.mubr.bf16.mxu0 0
  %1869 = vmatmul.mubr.bf16.gmra.mrb[0].mxu0 %v1722
  %v1870 = vpop.f32.mrb[0].mxu0
  %v1871 = vadd.f32 0.0, %v1870
  %v1872 = vpop.f32.mrb[0].mxu0
  %v1873 = vpop.f32.mrb[0].mxu0
  %v1874 = vadd.f32 0.0, %v1873
  %v1875 = vpop.f32.mrb[0].mxu0
  %1876 = vmatprep.mubr.bf16.mxu0 0
  %1877 = vmatmul.mubr.bf16.gmra.mrb[0].mxu0 %v1725
  %v1878 = vpop.f32.mrb[0].mxu0
  %v1879 = vadd.f32 0.0, %v1878
  %v1880 = vpop.f32.mrb[0].mxu0
  %v1881 = vpop.f32.mrb[0].mxu0
  %v1882 = vadd.f32 0.0, %v1881
  %v1883 = vpop.f32.mrb[0].mxu0
  %1884 = vmatprep.mubr.bf16.mxu0 0
  %1885 = vmatmul.mubr.bf16.gmra.mrb[0].mxu0 %v1728
  %v1886 = vpop.f32.mrb[0].mxu0
  %v1887 = vadd.f32 0.0, %v1886
  %v1888 = vpop.f32.mrb[0].mxu0
  %v1889 = vpop.f32.mrb[0].mxu0
  %v1890 = vadd.f32 0.0, %v1889
  %v1891 = vpop.f32.mrb[0].mxu0
  %1892 = vmatprep.mubr.bf16.mxu0 0
  %1893 = vmatmul.mubr.bf16.gmra.mrb[0].mxu0 %v1731
  %v1894 = vpop.f32.mrb[0].mxu0
  %v1895 = vadd.f32 0.0, %v1894
  %v1896 = vpop.f32.mrb[0].mxu0
  %v1897 = vpop.f32.mrb[0].mxu0
  %v1898 = vadd.f32 0.0, %v1897
  %v1899 = vpop.f32.mrb[0].mxu0
  %1900 = vmatprep.mubr.bf16.mxu0 0
  %1901 = vmatmul.mubr.bf16.gmra.mrb[0].mxu0 %v1734
  %v1902 = vpop.f32.mrb[0].mxu0
  %v1903 = vadd.f32 0.0, %v1902
  %v1904 = vpop.f32.mrb[0].mxu0
  %v1905 = vpop.f32.mrb[0].mxu0
  %v1906 = vadd.f32 0.0, %v1905
  %v1907 = vpop.f32.mrb[0].mxu0
  %1908 = vmatprep.mubr.bf16.mxu0 0
  %1909 = vmatmul.mubr.bf16.gmra.mrb[0].mxu0 %v1737
  %v1910 = vpop.f32.mrb[0].mxu0
  %v1911 = vadd.f32 0.0, %v1910
  %v1912 = vpop.f32.mrb[0].mxu0
  %v1913 = vpop.f32.mrb[0].mxu0
  %v1914 = vadd.f32 0.0, %v1913
  %v1915 = vpop.f32.mrb[0].mxu0
  %1916 = vmatprep.mubr.bf16.mxu0 0
  %1917 = vmatmul.mubr.bf16.gmra.mrb[0].mxu0 %v1740
  %v1918 = vpop.f32.mrb[0].mxu0
  %v1919 = vadd.f32 0.0, %v1918
  %v1920 = vpop.f32.mrb[0].mxu0
  %v1921 = vpop.f32.mrb[0].mxu0
  %v1922 = vadd.f32 0.0, %v1921
  %v1923 = vpop.f32.mrb[0].mxu0
  %1924 = vmatprep.mubr.bf16.mxu0 0
  %1925 = vmatmul.mubr.bf16.gmra.mrb[0].mxu0 %v1743
  %v1926 = vpop.f32.mrb[0].mxu0
  %v1927 = vadd.f32 0.0, %v1926
  %v1928 = vpop.f32.mrb[0].mxu0
  %v1929 = vpop.f32.mrb[0].mxu0
  %v1930 = vadd.f32 0.0, %v1929
  %v1931 = vpop.f32.mrb[0].mxu0
  %1932 = vmatprep.mubr.bf16.mxu0 0
  %1933 = vmatmul.mubr.bf16.gmra.mrb[0].mxu0 %v1746
  %v1934 = vpop.f32.mrb[0].mxu0
  %v1935 = vadd.f32 0.0, %v1934
  %v1936 = vpop.f32.mrb[0].mxu0
  %v1937 = vpop.f32.mrb[0].mxu0
  %v1938 = vadd.f32 0.0, %v1937
  %v1939 = vpop.f32.mrb[0].mxu0
  %1940 = vmatprep.mubr.bf16.mxu0 0
  %1941 = vmatmul.mubr.bf16.gmra.mrb[0].mxu0 %v1749
  %v1942 = vpop.f32.mrb[0].mxu0
  %v1943 = vadd.f32 0.0, %v1942
  %v1944 = vpop.f32.mrb[0].mxu0
  %v1945 = vpop.f32.mrb[0].mxu0
  %v1946 = vadd.f32 0.0, %v1945
  %v1947 = vpop.f32.mrb[0].mxu0
  %1948 = vmatprep.mubr.bf16.mxu0 0
  %1949 = vmatmul.mubr.bf16.gmra.mrb[0].mxu0 %v1752
  %v1950 = vpop.f32.mrb[0].mxu0
  %v1951 = vadd.f32 0.0, %v1950
  %v1952 = vpop.f32.mrb[0].mxu0
  %v1953 = vpop.f32.mrb[0].mxu0
  %v1954 = vadd.f32 0.0, %v1953
  %v1955 = vpop.f32.mrb[0].mxu0
  %1956 = vmatprep.mubr.bf16.mxu0 0
  %1957 = vmatmul.mubr.bf16.gmra.mrb[0].mxu0 %v1755
  %v1958 = vpop.f32.mrb[0].mxu0
  %v1959 = vadd.f32 0.0, %v1958
  %v1960 = vpop.f32.mrb[0].mxu0
  %v1961 = vpop.f32.mrb[0].mxu0
  %v1962 = vadd.f32 0.0, %v1961
  %v1963 = vpop.f32.mrb[0].mxu0
  %1964 = vmatprep.mubr.bf16.mxu0 0
  %1965 = vmatmul.mubr.bf16.gmra.mrb[0].mxu0 %v1758
  %v1966 = vpop.f32.mrb[0].mxu0
  %v1967 = vadd.f32 0.0, %v1966
  %v1968 = vpop.f32.mrb[0].mxu0
  %v1969 = vpop.f32.mrb[0].mxu0
  %v1970 = vadd.f32 0.0, %v1969
  %v1971 = vpop.f32.mrb[0].mxu0
  %1972 = vmatprep.mubr.bf16.mxu0 0
  %1973 = vmatmul.mubr.bf16.gmra.mrb[0].mxu0 %v1761
  %v1974 = vpop.f32.mrb[0].mxu0
  %v1975 = vadd.f32 0.0, %v1974
  %v1976 = vpop.f32.mrb[0].mxu0
  %v1977 = vpop.f32.mrb[0].mxu0
  %v1978 = vadd.f32 0.0, %v1977
  %v1979 = vpop.f32.mrb[0].mxu0
  %1980 = vmatprep.mubr.bf16.mxu0 0
  %1981 = vmatmul.mubr.bf16.gmra.mrb[0].mxu0 %v1764
  %v1982 = vpop.f32.mrb[0].mxu0
  %v1983 = vadd.f32 0.0, %v1982
  %v1984 = vpop.f32.mrb[0].mxu0
  %v1985 = vpop.f32.mrb[0].mxu0
  %v1986 = vadd.f32 0.0, %v1985
  %v1987 = vpop.f32.mrb[0].mxu0
  %1988 = vmatprep.mubr.bf16.mxu0 0
  %1989 = vmatmul.mubr.bf16.gmra.mrb[0].mxu0 %v1767
  %v1990 = vpop.f32.mrb[0].mxu0
  %v1991 = vadd.f32 0.0, %v1990
  %v1992 = vpop.f32.mrb[0].mxu0
  %v1993 = vpop.f32.mrb[0].mxu0
  %v1994 = vadd.f32 0.0, %v1993
  %v1995 = vpop.f32.mrb[0].mxu0
  %1996 = vmatprep.mubr.bf16.mxu0 0
  %1997 = vmatmul.mubr.bf16.gmra.mrb[0].mxu0 %v1770
  %v1998 = vpop.f32.mrb[0].mxu0
  %v1999 = vadd.f32 0.0, %v1998
  %v2000 = vpop.f32.mrb[0].mxu0
  %v2001 = vpop.f32.mrb[0].mxu0
  %v2002 = vpop.f32.mrb[0].mxu0
  %2003 = vdwg.mxu0
  %v2004 = vmax.f32 %v1328, %v1807
  %v2005 = vmax.f32 %v1331, %v1810
  %v2006 = vmax.f32 %v1336, %v1815
  %v2007 = vmax.f32 %v1339, %v1818
  %v2008 = vmax.f32 %v1344, %v1823
  %v2009 = vmax.f32 %v1347, %v1826
  %v2010 = vmax.f32 %v1352, %v1831
  %v2011 = vmax.f32 %v1355, %v1834
  %v2012 = vmax.f32 %v1360, %v1839
  %v2013 = vmax.f32 %v1363, %v1842
  %v2014 = vmax.f32 %v1368, %v1847
  %v2015 = vmax.f32 %v1371, %v1850
  %v2016 = vmax.f32 %v1376, %v1855
  %v2017 = vmax.f32 %v1379, %v1858
  %v2018 = vmax.f32 %v1384, %v1863
  %v2019 = vmax.f32 %v1387, %v1866
  %v2020 = vmax.f32 %v1392, %v1871
  %v2021 = vmax.f32 %v1395, %v1874
  %v2022 = vmax.f32 %v1400, %v1879
  %v2023 = vmax.f32 %v1403, %v1882
  %v2024 = vmax.f32 %v1408, %v1887
  %v2025 = vmax.f32 %v1411, %v1890
  %v2026 = vmax.f32 %v1416, %v1895
  %v2027 = vmax.f32 %v1419, %v1898
  %v2028 = vmax.f32 %v1424, %v1903
  %v2029 = vmax.f32 %v1427, %v1906
  %v2030 = vmax.f32 %v1432, %v1911
  %v2031 = vmax.f32 %v1435, %v1914
  %v2032 = vmax.f32 %v1440, %v1919
  %v2033 = vmax.f32 %v1443, %v1922
  %v2034 = vmax.f32 %v1448, %v1927
  %v2035 = vmax.f32 %v1451, %v1930
  %v2036 = vmax.f32 %v1456, %v1935
  %v2037 = vmax.f32 %v1459, %v1938
  %v2038 = vmax.f32 %v1464, %v1943
  %v2039 = vmax.f32 %v1467, %v1946
  %v2040 = vmax.f32 %v1472, %v1951
  %v2041 = vmax.f32 %v1475, %v1954
  %v2042 = vmax.f32 %v1480, %v1959
  %v2043 = vmax.f32 %v1483, %v1962
  %v2044 = vmax.f32 %v1488, %v1967
  %v2045 = vmax.f32 %v1491, %v1970
  %v2046 = vmax.f32 %v1496, %v1975
  %v2047 = vmax.f32 %v1499, %v1978
  %v2048 = vmax.f32 %v1504, %v1983
  %v2049 = vmax.f32 %v1507, %v1986
  %v2050 = vmax.f32 %v1512, %v1991
  %v2051 = vmax.f32 %v1515, %v1994
  %v2052 = vmax.f32 %v1520, %v1999
  %v2053 = vmax.f32 %v997, %v2004
  %v2054 = vmax.f32 %v998, %v2005
  %v2055 = vmax.f32 %v999, %v2006
  %v2056 = vmax.f32 %v1000, %v2007
  %v2057 = vmax.f32 %v1001, %v2008
  %v2058 = vmax.f32 %v1002, %v2009
  %v2059 = vmax.f32 %v1003, %v2010
  %v2060 = vmax.f32 %v1004, %v2011
  %v2061 = vmax.f32 %v1005, %v2012
  %v2062 = vmax.f32 %v1006, %v2013
  %v2063 = vmax.f32 %v1007, %v2014
  %v2064 = vmax.f32 %v1008, %v2015
  %v2065 = vmax.f32 %v1009, %v2016
  %v2066 = vmax.f32 %v1010, %v2017
  %v2067 = vmax.f32 %v1011, %v2018
  %v2068 = vmax.f32 %v1012, %v2019
  %v2069 = vmax.f32 %v1013, %v2020
  %v2070 = vmax.f32 %v1014, %v2021
  %v2071 = vmax.f32 %v1015, %v2022
  %v2072 = vmax.f32 %v1016, %v2023
  %v2073 = vmax.f32 %v1017, %v2024
  %v2074 = vmax.f32 %v1018, %v2025
  %v2075 = vmax.f32 %v1019, %v2026
  %v2076 = vmax.f32 %v1020, %v2027
  %v2077 = vmax.f32 %v1021, %v2028
  %v2078 = vmax.f32 %v1022, %v2029
  %v2079 = vmax.f32 %v1023, %v2030
  %v2080 = vmax.f32 %v1024, %v2031
  %v2081 = vmax.f32 %v1025, %v2032
  %v2082 = vmax.f32 %v1026, %v2033
  %v2083 = vmax.f32 %v1027, %v2034
  %v2084 = vmax.f32 %v1028, %v2035
  %v2085 = vmax.f32 %v1029, %v2036
  %v2086 = vmax.f32 %v1030, %v2037
  %v2087 = vmax.f32 %v1031, %v2038
  %v2088 = vmax.f32 %v1032, %v2039
  %v2089 = vmax.f32 %v1033, %v2040
  %v2090 = vmax.f32 %v1034, %v2041
  %v2091 = vmax.f32 %v1035, %v2042
  %v2092 = vmax.f32 %v1036, %v2043
  %v2093 = vmax.f32 %v1037, %v2044
  %v2094 = vmax.f32 %v1038, %v2045
  %v2095 = vmax.f32 %v1039, %v2046
  %v2096 = vmax.f32 %v1040, %v2047
  %v2097 = vmax.f32 %v1041, %v2048
  %v2098 = vmax.f32 %v1042, %v2049
  %v2099 = vmax.f32 %v1043, %v2050
  %v2100 = vmax.f32 %v1044, %v2051
  %v2101 = vmax.f32 %v1045, %v2052
  %v2102 = vld [vmem:[%s5] sm:$0x1]
  %v2104 = vlaneseq
  %v2105 = vshrl.u32 %v2104, 7
  %v2106 = vsub.s32 0, %v2105
  %v2107 = vrot.slane %v2102, %v2106
  %v2109 = vadd.f32 %v2053, %v2107
  %v2110 = vadd.f32 %v2054, %v2107
  %v2111 = vadd.f32 %v2055, %v2107
  %v2112 = vadd.f32 %v2056, %v2107
  %v2113 = vadd.f32 %v2057, %v2107
  %v2114 = vadd.f32 %v2058, %v2107
  %v2115 = vadd.f32 %v2059, %v2107
  %v2116 = vadd.f32 %v2060, %v2107
  %v2117 = vadd.f32 %v2061, %v2107
  %v2118 = vadd.f32 %v2062, %v2107
  %v2119 = vadd.f32 %v2063, %v2107
  %v2120 = vadd.f32 %v2064, %v2107
  %v2121 = vadd.f32 %v2065, %v2107
  %v2122 = vadd.f32 %v2066, %v2107
  %v2123 = vadd.f32 %v2067, %v2107
  %v2124 = vadd.f32 %v2068, %v2107
  %v2125 = vadd.f32 %v2069, %v2107
  %v2126 = vadd.f32 %v2070, %v2107
  %v2127 = vadd.f32 %v2071, %v2107
  %v2128 = vadd.f32 %v2072, %v2107
  %v2129 = vadd.f32 %v2073, %v2107
  %v2130 = vadd.f32 %v2074, %v2107
  %v2131 = vadd.f32 %v2075, %v2107
  %v2132 = vadd.f32 %v2076, %v2107
  %v2133 = vadd.f32 %v2077, %v2107
  %v2134 = vadd.f32 %v2078, %v2107
  %v2135 = vadd.f32 %v2079, %v2107
  %v2136 = vadd.f32 %v2080, %v2107
  %v2137 = vadd.f32 %v2081, %v2107
  %v2138 = vadd.f32 %v2082, %v2107
  %v2139 = vadd.f32 %v2083, %v2107
  %v2140 = vadd.f32 %v2084, %v2107
  %v2141 = vadd.f32 %v2085, %v2107
  %v2142 = vadd.f32 %v2086, %v2107
  %v2143 = vadd.f32 %v2087, %v2107
  %v2144 = vadd.f32 %v2088, %v2107
  %v2145 = vadd.f32 %v2089, %v2107
  %v2146 = vadd.f32 %v2090, %v2107
  %v2147 = vadd.f32 %v2091, %v2107
  %v2148 = vadd.f32 %v2092, %v2107
  %v2149 = vadd.f32 %v2093, %v2107
  %v2150 = vadd.f32 %v2094, %v2107
  %v2151 = vadd.f32 %v2095, %v2107
  %v2152 = vadd.f32 %v2096, %v2107
  %v2153 = vadd.f32 %v2097, %v2107
  %v2154 = vadd.f32 %v2098, %v2107
  %v2155 = vadd.f32 %v2099, %v2107
  %v2156 = vadd.f32 %v2100, %v2107
  %v2157 = vadd.f32 %v2101, %v2107
  %v2158 = vmax.f32 %v2109, 0.0
  %v2159 = vmax.f32 %v2110, 0.0
  %v2160 = vmax.f32 %v2111, 0.0
  %v2161 = vmax.f32 %v2112, 0.0
  %v2162 = vmax.f32 %v2113, 0.0
  %v2163 = vmax.f32 %v2114, 0.0
  %v2164 = vmax.f32 %v2115, 0.0
  %v2165 = vmax.f32 %v2116, 0.0
  %v2166 = vmax.f32 %v2117, 0.0
  %v2167 = vmax.f32 %v2118, 0.0
  %v2168 = vmax.f32 %v2119, 0.0
  %v2169 = vmax.f32 %v2120, 0.0
  %v2170 = vmax.f32 %v2121, 0.0
  %v2171 = vmax.f32 %v2122, 0.0
  %v2172 = vmax.f32 %v2123, 0.0
  %v2173 = vmax.f32 %v2124, 0.0
  %v2174 = vmax.f32 %v2125, 0.0
  %v2175 = vmax.f32 %v2126, 0.0
  %v2176 = vmax.f32 %v2127, 0.0
  %v2177 = vmax.f32 %v2128, 0.0
  %v2178 = vmax.f32 %v2129, 0.0
  %v2179 = vmax.f32 %v2130, 0.0
  %v2180 = vmax.f32 %v2131, 0.0
  %v2181 = vmax.f32 %v2132, 0.0
  %v2182 = vmax.f32 %v2133, 0.0
  %v2183 = vmax.f32 %v2134, 0.0
  %v2184 = vmax.f32 %v2135, 0.0
  %v2185 = vmax.f32 %v2136, 0.0
  %v2186 = vmax.f32 %v2137, 0.0
  %v2187 = vmax.f32 %v2138, 0.0
  %v2188 = vmax.f32 %v2139, 0.0
  %v2189 = vmax.f32 %v2140, 0.0
  %v2190 = vmax.f32 %v2141, 0.0
  %v2191 = vmax.f32 %v2142, 0.0
  %v2192 = vmax.f32 %v2143, 0.0
  %v2193 = vmax.f32 %v2144, 0.0
  %v2194 = vmax.f32 %v2145, 0.0
  %v2195 = vmax.f32 %v2146, 0.0
  %v2196 = vmax.f32 %v2147, 0.0
  %v2197 = vmax.f32 %v2148, 0.0
  %v2198 = vmax.f32 %v2149, 0.0
  %v2199 = vmax.f32 %v2150, 0.0
  %v2200 = vmax.f32 %v2151, 0.0
  %v2201 = vmax.f32 %v2152, 0.0
  %v2202 = vmax.f32 %v2153, 0.0
  %v2203 = vmax.f32 %v2154, 0.0
  %v2204 = vmax.f32 %v2155, 0.0
  %v2205 = vmax.f32 %v2156, 0.0
  %v2206 = vmax.f32 %v2157, 0.0
  %v2207 = vpack.c.bf16 %v2159, %v2158
  %v2208 = vpack.c.bf16 %v2161, %v2160
  %v2209 = vpack.c.bf16 %v2163, %v2162
  %v2210 = vpack.c.bf16 %v2165, %v2164
  %v2211 = vpack.c.bf16 %v2167, %v2166
  %v2212 = vpack.c.bf16 %v2169, %v2168
  %v2213 = vpack.c.bf16 %v2171, %v2170
  %v2214 = vpack.c.bf16 %v2173, %v2172
  %v2215 = vpack.c.bf16 %v2175, %v2174
  %v2216 = vpack.c.bf16 %v2177, %v2176
  %v2217 = vpack.c.bf16 %v2179, %v2178
  %v2218 = vpack.c.bf16 %v2181, %v2180
  %v2219 = vpack.c.bf16 %v2183, %v2182
  %v2220 = vpack.c.bf16 %v2185, %v2184
  %v2221 = vpack.c.bf16 %v2187, %v2186
  %v2222 = vpack.c.bf16 %v2189, %v2188
  %v2223 = vpack.c.bf16 %v2191, %v2190
  %v2224 = vpack.c.bf16 %v2193, %v2192
  %v2225 = vpack.c.bf16 %v2195, %v2194
  %v2226 = vpack.c.bf16 %v2197, %v2196
  %v2227 = vpack.c.bf16 %v2199, %v2198
  %v2228 = vpack.c.bf16 %v2201, %v2200
  %v2229 = vpack.c.bf16 %v2203, %v2202
  %v2230 = vpack.c.bf16 %v2205, %v2204
  %v2231 = vpack.c.bf16 %v2206, %v2206
  %v2257 = vunpack.c.l.b16 %v2207
  %v2258 = vunpack.c.h.b16 %v2207
  %v2259 = vunpack.c.l.b16 %v2208
  %v2260 = vunpack.c.h.b16 %v2208
  %v2261 = vunpack.c.l.b16 %v2209
  %v2262 = vunpack.c.h.b16 %v2209
  %v2263 = vunpack.c.l.b16 %v2210
  %v2264 = vunpack.c.h.b16 %v2210
  %v2265 = vunpack.c.l.b16 %v2211
  %v2266 = vunpack.c.h.b16 %v2211
  %v2267 = vunpack.c.l.b16 %v2212
  %v2268 = vunpack.c.h.b16 %v2212
  %v2269 = vunpack.c.l.b16 %v2213
  %v2270 = vunpack.c.h.b16 %v2213
  %v2271 = vunpack.c.l.b16 %v2214
  %v2272 = vunpack.c.h.b16 %v2214
  %v2273 = vunpack.c.l.b16 %v2215
  %v2274 = vunpack.c.h.b16 %v2215
  %v2275 = vunpack.c.l.b16 %v2216
  %v2276 = vunpack.c.h.b16 %v2216
  %v2277 = vunpack.c.l.b16 %v2217
  %v2278 = vunpack.c.h.b16 %v2217
  %v2279 = vunpack.c.l.b16 %v2218
  %v2280 = vunpack.c.h.b16 %v2218
  %v2281 = vunpack.c.l.b16 %v2219
  %v2282 = vunpack.c.h.b16 %v2219
  %v2283 = vunpack.c.l.b16 %v2220
  %v2284 = vunpack.c.h.b16 %v2220
  %v2285 = vunpack.c.l.b16 %v2221
  %v2286 = vunpack.c.h.b16 %v2221
  %v2287 = vunpack.c.l.b16 %v2222
  %v2288 = vunpack.c.h.b16 %v2222
  %v2289 = vunpack.c.l.b16 %v2223
  %v2290 = vunpack.c.h.b16 %v2223
  %v2291 = vunpack.c.l.b16 %v2224
  %v2292 = vunpack.c.h.b16 %v2224
  %v2293 = vunpack.c.l.b16 %v2225
  %v2294 = vunpack.c.h.b16 %v2225
  %v2295 = vunpack.c.l.b16 %v2226
  %v2296 = vunpack.c.h.b16 %v2226
  %v2297 = vunpack.c.l.b16 %v2227
  %v2298 = vunpack.c.h.b16 %v2227
  %v2299 = vunpack.c.l.b16 %v2228
  %v2300 = vunpack.c.h.b16 %v2228
  %v2301 = vunpack.c.l.b16 %v2229
  %v2302 = vunpack.c.h.b16 %v2229
  %v2303 = vunpack.c.l.b16 %v2230
  %v2304 = vunpack.c.h.b16 %v2230
  %v2305 = vunpack.c.l.b16 %v2231
  %v2306 = vpack.c.b16 %v2257, %v2257
  %v2307 = vpack.c.b16 %v2258, %v2258
  %v2308 = vpack.c.b16 %v2259, %v2259
  %v2309 = vpack.c.b16 %v2260, %v2260
  %v2310 = vpack.c.b16 %v2261, %v2261
  %v2311 = vpack.c.b16 %v2262, %v2262
  %v2312 = vpack.c.b16 %v2263, %v2263
  %v2313 = vpack.c.b16 %v2264, %v2264
  %v2314 = vpack.c.b16 %v2265, %v2265
  %v2315 = vpack.c.b16 %v2266, %v2266
  %v2316 = vpack.c.b16 %v2267, %v2267
  %v2317 = vpack.c.b16 %v2268, %v2268
  %v2318 = vpack.c.b16 %v2269, %v2269
  %v2319 = vpack.c.b16 %v2270, %v2270
  %v2320 = vpack.c.b16 %v2271, %v2271
  %v2321 = vpack.c.b16 %v2272, %v2272
  %v2322 = vpack.c.b16 %v2273, %v2273
  %v2323 = vpack.c.b16 %v2274, %v2274
  %v2324 = vpack.c.b16 %v2275, %v2275
  %v2325 = vpack.c.b16 %v2276, %v2276
  %v2326 = vpack.c.b16 %v2277, %v2277
  %v2327 = vpack.c.b16 %v2278, %v2278
  %v2328 = vpack.c.b16 %v2279, %v2279
  %v2329 = vpack.c.b16 %v2280, %v2280
  %v2330 = vpack.c.b16 %v2281, %v2281
  %v2331 = vpack.c.b16 %v2282, %v2282
  %v2332 = vpack.c.b16 %v2283, %v2283
  %v2333 = vpack.c.b16 %v2284, %v2284
  %v2334 = vpack.c.b16 %v2285, %v2285
  %v2335 = vpack.c.b16 %v2286, %v2286
  %v2336 = vpack.c.b16 %v2287, %v2287
  %v2337 = vpack.c.b16 %v2288, %v2288
  %v2338 = vpack.c.b16 %v2289, %v2289
  %v2339 = vpack.c.b16 %v2290, %v2290
  %v2340 = vpack.c.b16 %v2291, %v2291
  %v2341 = vpack.c.b16 %v2292, %v2292
  %v2342 = vpack.c.b16 %v2293, %v2293
  %v2343 = vpack.c.b16 %v2294, %v2294
  %v2344 = vpack.c.b16 %v2295, %v2295
  %v2345 = vpack.c.b16 %v2296, %v2296
  %v2346 = vpack.c.b16 %v2297, %v2297
  %v2347 = vpack.c.b16 %v2298, %v2298
  %v2348 = vpack.c.b16 %v2299, %v2299
  %v2349 = vpack.c.b16 %v2300, %v2300
  %v2350 = vpack.c.b16 %v2301, %v2301
  %v2351 = vpack.c.b16 %v2302, %v2302
  %v2352 = vpack.c.b16 %v2303, %v2303
  %v2353 = vpack.c.b16 %v2304, %v2304
  %v2354 = vpack.c.b16 %v2305, %v2305
  %2404 = vst [vmem:[%s6] sm:$0xf] %v2306
  %2405 = vst [vmem:[%s6 + $0x4] sm:$0xf] %v2307
  %2406 = vst [vmem:[%s6 + $0x8] sm:$0xf] %v2308
  %2407 = vst [vmem:[%s6 + $0xc] sm:$0xf] %v2309
  %2408 = vst [vmem:[%s6 + $0x10] sm:$0xf] %v2310
  %2409 = vst [vmem:[%s6 + $0x14] sm:$0xf] %v2311
  %2410 = vst [vmem:[%s6 + $0x18] sm:$0xf] %v2312
  %2411 = vst [vmem:[%s6 + $0x1c] sm:$0xf] %v2313
  %2412 = vst [vmem:[%s6 + $0x20] sm:$0xf] %v2314
  %2413 = vst [vmem:[%s6 + $0x24] sm:$0xf] %v2315
  %2414 = vst [vmem:[%s6 + $0x28] sm:$0xf] %v2316
  %2415 = vst [vmem:[%s6 + $0x2c] sm:$0xf] %v2317
  %2416 = vst [vmem:[%s6 + $0x30] sm:$0xf] %v2318
  %2417 = vst [vmem:[%s6 + $0x34] sm:$0xf] %v2319
  %2418 = vst [vmem:[%s6 + $0x38] sm:$0xf] %v2320
  %2419 = vst [vmem:[%s6 + $0x3c] sm:$0xf] %v2321
  %2420 = vst [vmem:[%s6 + $0x40] sm:$0xf] %v2322
  %2421 = vst [vmem:[%s6 + $0x44] sm:$0xf] %v2323
  %2422 = vst [vmem:[%s6 + $0x48] sm:$0xf] %v2324
  %2423 = vst [vmem:[%s6 + $0x4c] sm:$0xf] %v2325
  %2424 = vst [vmem:[%s6 + $0x50] sm:$0xf] %v2326
  %2425 = vst [vmem:[%s6 + $0x54] sm:$0xf] %v2327
  %2426 = vst [vmem:[%s6 + $0x58] sm:$0xf] %v2328
  %2427 = vst [vmem:[%s6 + $0x5c] sm:$0xf] %v2329
  %2428 = vst [vmem:[%s6 + $0x60] sm:$0xf] %v2330
  %2429 = vst [vmem:[%s6 + $0x64] sm:$0xf] %v2331
  %2430 = vst [vmem:[%s6 + $0x68] sm:$0xf] %v2332
  %2431 = vst [vmem:[%s6 + $0x6c] sm:$0xf] %v2333
  %2432 = vst [vmem:[%s6 + $0x70] sm:$0xf] %v2334
  %2433 = vst [vmem:[%s6 + $0x74] sm:$0xf] %v2335
  %2434 = vst [vmem:[%s6 + $0x78] sm:$0xf] %v2336
  %2435 = vst [vmem:[%s6 + $0x7c] sm:$0xf] %v2337
  %2436 = vst [vmem:[%s6 + $0x80] sm:$0xf] %v2338
  %2437 = vst [vmem:[%s6 + $0x84] sm:$0xf] %v2339
  %2438 = vst [vmem:[%s6 + $0x88] sm:$0xf] %v2340
  %2439 = vst [vmem:[%s6 + $0x8c] sm:$0xf] %v2341
  %2440 = vst [vmem:[%s6 + $0x90] sm:$0xf] %v2342
  %2441 = vst [vmem:[%s6 + $0x94] sm:$0xf] %v2343
  %2442 = vst [vmem:[%s6 + $0x98] sm:$0xf] %v2344
  %2443 = vst [vmem:[%s6 + $0x9c] sm:$0xf] %v2345
  %2444 = vst [vmem:[%s6 + $0xa0] sm:$0xf] %v2346
  %2445 = vst [vmem:[%s6 + $0xa4] sm:$0xf] %v2347
  %2446 = vst [vmem:[%s6 + $0xa8] sm:$0xf] %v2348
  %2447 = vst [vmem:[%s6 + $0xac] sm:$0xf] %v2349
  %2448 = vst [vmem:[%s6 + $0xb0] sm:$0xf] %v2350
  %2449 = vst [vmem:[%s6 + $0xb4] sm:$0xf] %v2351
  %2450 = vst [vmem:[%s6 + $0xb8] sm:$0xf] %v2352
  %2451 = vst [vmem:[%s6 + $0xbc] sm:$0xf] %v2353
  %2452 = vst [vmem:[%s6 + $0xc0] sm:$0xf] %v2354
  // Predicated region
  $region26: #{convnn_forward.3} parent=0 // pred_check
    _
  $region27: #{convnn_forward.3} parent=0 // pred_check_branch
    %2454 = sbr.rel (0) target = $region29
  $region28: #{convnn_forward.3} parent=0 // pred_region
    _
  $region29: #{convnn_forward.3} parent=0 // pred_fallthru
    _
  // Predicated region
  $region30: #{convnn_forward.3} parent=0 // pred_check
    _
  $region31: #{convnn_forward.3} parent=0 // pred_check_branch
    %2456 = sbr.rel (0) target = $region33
  $region32: #{convnn_forward.3} parent=0 // pred_region
    _
  $region33: #{convnn_forward.3} parent=0 // pred_fallthru
    _

// kernel: convnn_forward.4
$region0: #{convnn_forward.4}
  #allocation0 [shape = 'u32[]', space=smem, size = 0x4, offset = 0x4, fixed_abs, tag = 'smem constant byte address 0x4 - core index']
  #allocation1 [shape = 'u32[144,128]{1,0:T(1,128)}', space=vmem, size = 0x12000, scoped, tag = 'internal scratch']
  %s0 = inlined_call_operand.vmem [shape: bf16[104,54], index: 0, kind: input, shape index: {}]
  %s1 = inlined_call_operand.vmem [shape: bf16[104,54], index: 1, kind: input, shape index: {}]
  %s2 = inlined_call_operand.vmem [shape: bf16[104,54], index: 2, kind: input, shape index: {}]
  %s3 = inlined_call_operand.vmem [shape: bf16[104,54], index: 3, kind: input, shape index: {}]
  %s4 = inlined_call_operand.vmem [shape: bf16[54,128], index: 4, kind: input, shape index: {}]
  %s5 = inlined_call_operand.vmem [shape: f32[1,128], index: 5, kind: input, shape index: {}]
  %s6 = inlined_call_operand.vmem [shape: bf16[104,128], index: 6, kind: output, shape index: {}]
  %s7 = sld [smem:[#allocation0]]
  $region34: #{convnn_forward.4} parent=0
    _
  %s9 = ssub.s32 1, %s7
  %s10 = scalar_select 0, %s9, %s7
  // Predicated region
  $region2: #{convnn_forward.4} parent=0 // pred_check
    _
  $region3: #{convnn_forward.4} parent=0 // pred_check_branch
    %12 = sbr.rel (0) target = $region5
  $region4: #{convnn_forward.4} parent=0 // pred_region
    _
  $region5: #{convnn_forward.4} parent=0 // pred_fallthru
    _
  // Predicated region
  $region6: #{convnn_forward.4} parent=0 // pred_check
    _
  $region7: #{convnn_forward.4} parent=0 // pred_check_branch
    %14 = sbr.rel (0) target = $region9
  $region8: #{convnn_forward.4} parent=0 // pred_region
    _
  $region9: #{convnn_forward.4} parent=0 // pred_fallthru
    _
  // Predicated region
  $region10: #{convnn_forward.4} parent=0 // pred_check
    _
  $region11: #{convnn_forward.4} parent=0 // pred_check_branch
    %16 = sbr.rel (0) target = $region13
  $region12: #{convnn_forward.4} parent=0 // pred_region
    _
  $region13: #{convnn_forward.4} parent=0 // pred_fallthru
    _
  // Predicated region
  $region14: #{convnn_forward.4} parent=0 // pred_check
    _
  $region15: #{convnn_forward.4} parent=0 // pred_check_branch
    %18 = sbr.rel (0) target = $region17
  $region16: #{convnn_forward.4} parent=0 // pred_region
    _
  $region17: #{convnn_forward.4} parent=0 // pred_fallthru
    _
  // Predicated region
  $region18: #{convnn_forward.4} parent=0 // pred_check
    _
  $region19: #{convnn_forward.4} parent=0 // pred_check_branch
    %20 = sbr.rel (0) target = $region21
  $region20: #{convnn_forward.4} parent=0 // pred_region
    _
  $region21: #{convnn_forward.4} parent=0 // pred_fallthru
    _
  // Predicated region
  $region22: #{convnn_forward.4} parent=0 // pred_check
    _
  $region23: #{convnn_forward.4} parent=0 // pred_check_branch
    %22 = sbr.rel (0) target = $region25
  $region24: #{convnn_forward.4} parent=0 // pred_region
    _
  $region25: #{convnn_forward.4} parent=0 // pred_fallthru
    _
  %v24 = vld [vmem:[%s4] sm:$0xf]
  %v25 = vld [vmem:[%s4 + $0x4] sm:$0xf]
  %v26 = vld [vmem:[%s4 + $0x8] sm:$0xf]
  %v27 = vld [vmem:[%s4 + $0xc] sm:$0xf]
  %v28 = vld [vmem:[%s4 + $0x10] sm:$0xf]
  %v29 = vld [vmem:[%s4 + $0x14] sm:$0xf]
  %v30 = vld [vmem:[%s4 + $0x18] sm:$0x7]
  %v31 = vld [vmem:[%s0] sm:$0xf]
  %v32 = vld [vmem:[%s0 + $0x4] sm:$0xf]
  %v33 = vld [vmem:[%s0 + $0x8] sm:$0xf]
  %v34 = vld [vmem:[%s0 + $0xc] sm:$0xf]
  %v35 = vld [vmem:[%s0 + $0x10] sm:$0xf]
  %v36 = vld [vmem:[%s0 + $0x14] sm:$0xf]
  %v37 = vld [vmem:[%s0 + $0x18] sm:$0xf]
  %v38 = vld [vmem:[%s0 + $0x1c] sm:$0xf]
  %v39 = vld [vmem:[%s0 + $0x20] sm:$0xf]
  %v40 = vld [vmem:[%s0 + $0x24] sm:$0xf]
  %v41 = vld [vmem:[%s0 + $0x28] sm:$0xf]
  %v42 = vld [vmem:[%s0 + $0x2c] sm:$0xf]
  %v43 = vld [vmem:[%s0 + $0x30] sm:$0xf]
  %v57 = vunpack.c.l.b16 %v31
  %v58 = vunpack.c.l.b16 %v32
  %v59 = vunpack.c.l.b16 %v33
  %v60 = vunpack.c.l.b16 %v34
  %v61 = vunpack.c.l.b16 %v35
  %v62 = vunpack.c.l.b16 %v36
  %v63 = vunpack.c.l.b16 %v37
  %v64 = vunpack.c.l.b16 %v38
  %v65 = vunpack.c.l.b16 %v39
  %v66 = vunpack.c.l.b16 %v40
  %v67 = vunpack.c.l.b16 %v41
  %v68 = vunpack.c.l.b16 %v42
  %v69 = vunpack.c.l.b16 %v43
  %v70 = vpack.c.b16 %v58, %v57
  %v71 = vpack.c.b16 %v60, %v59
  %v72 = vpack.c.b16 %v62, %v61
  %v73 = vpack.c.b16 %v64, %v63
  %v74 = vpack.c.b16 %v66, %v65
  %v75 = vpack.c.b16 %v68, %v67
  %v76 = vpack.c.b16 %v69, %v69
  %v84 = vunpack.c.l.b16 %v24
  %v85 = vunpack.c.l.b16 %v25
  %v86 = vunpack.c.l.b16 %v26
  %v87 = vunpack.c.l.b16 %v27
  %v88 = vunpack.c.l.b16 %v28
  %v89 = vunpack.c.l.b16 %v29
  %v90 = vunpack.c.l.b16 %v30
  %v91 = vpack.c.b16 %v85, %v84
  %v92 = vpack.c.b16 %v87, %v86
  %v93 = vpack.c.b16 %v89, %v88
  %v94 = vpack.c.b16 %v90, %v90
  %vm98 = vcmask 441344
  %v100 = vsel %vm98, %v70, 0
  %v103 = vsel %vm98, %v71, 0
  %v106 = vsel %vm98, %v72, 0
  %v109 = vsel %vm98, %v73, 0
  %v112 = vsel %vm98, %v74, 0
  %v115 = vsel %vm98, %v75, 0
  %v118 = vsel %vm98, %v76, 0
  %vm120 = vcmask 1042432
  %v122 = vsel %vm120, %v94, 0
  %124 = vmatprep.subr.bf16.mxu0 0
  %125 = vmatpush1.bf16.msra.mxu0 %v91
  %126 = vmatprep.subr.bf16.mxu0 0
  %127 = vmatpush1.bf16.msra.mxu0 %v92
  %128 = vmatprep.subr.bf16.mxu0 0
  %129 = vmatpush1.bf16.msra.mxu0 %v93
  %130 = vmatprep.subr.bf16.mxu0 0
  %131 = vmatpush1.bf16.msra.mxu0 %v122
  %132 = vmatprep.subr.bf16.mxu0 0
  %133 = vmatpush1.bf16.msra.mxu0 0
  %134 = vmatprep.subr.bf16.mxu0 0
  %135 = vmatpush1.bf16.msra.mxu0 0
  %136 = vmatprep.subr.bf16.mxu0 0
  %137 = vmatpush1.bf16.msra.mxu0 0
  %138 = vmatprep.subr.bf16.mxu0 0
  %139 = vmatpush1.bf16.msra.mxu0 0
  %140 = vmatprep.subr.bf16.mxu0 0
  %141 = vmatpush1.bf16.msra.mxu0 0
  %142 = vmatprep.subr.bf16.mxu0 0
  %143 = vmatpush1.bf16.msra.mxu0 0
  %144 = vmatprep.subr.bf16.mxu0 0
  %145 = vmatpush1.bf16.msra.mxu0 0
  %146 = vmatprep.subr.bf16.mxu0 0
  %147 = vmatpush1.bf16.msra.mxu0 0
  %148 = vmatprep.subr.bf16.mxu0 0
  %149 = vmatpush1.bf16.msra.mxu0 0
  %150 = vmatprep.subr.bf16.mxu0 0
  %151 = vmatpush1.bf16.msra.mxu0 0
  %152 = vmatprep.subr.bf16.mxu0 0
  %153 = vmatpush1.bf16.msra.mxu0 0
  %154 = vmatprep.subr.bf16.mxu0 0
  %155 = vmatpush1.bf16.msra.mxu0 0
  %156 = vmatprep.mubr.bf16.mxu0 0
  %157 = vmatmul.mubr.bf16.gmra.mrb[0].mxu0 %v100
  %v158 = vpop.f32.mrb[0].mxu0
  %v159 = vadd.f32 0.0, %v158
  %v160 = vpop.f32.mrb[0].mxu0
  %v161 = vpop.f32.mrb[0].mxu0
  %v162 = vadd.f32 0.0, %v161
  %v163 = vpop.f32.mrb[0].mxu0
  %164 = vmatprep.mubr.bf16.mxu0 0
  %165 = vmatmul.mubr.bf16.gmra.mrb[0].mxu0 %v103
  %v166 = vpop.f32.mrb[0].mxu0
  %v167 = vadd.f32 0.0, %v166
  %v168 = vpop.f32.mrb[0].mxu0
  %v169 = vpop.f32.mrb[0].mxu0
  %v170 = vadd.f32 0.0, %v169
  %v171 = vpop.f32.mrb[0].mxu0
  %172 = vmatprep.mubr.bf16.mxu0 0
  %173 = vmatmul.mubr.bf16.gmra.mrb[0].mxu0 %v106
  %v174 = vpop.f32.mrb[0].mxu0
  %v175 = vadd.f32 0.0, %v174
  %v176 = vpop.f32.mrb[0].mxu0
  %v177 = vpop.f32.mrb[0].mxu0
  %v178 = vadd.f32 0.0, %v177
  %v179 = vpop.f32.mrb[0].mxu0
  %180 = vmatprep.mubr.bf16.mxu0 0
  %181 = vmatmul.mubr.bf16.gmra.mrb[0].mxu0 %v109
  %v182 = vpop.f32.mrb[0].mxu0
  %v183 = vadd.f32 0.0, %v182
  %v184 = vpop.f32.mrb[0].mxu0
  %v185 = vpop.f32.mrb[0].mxu0
  %v186 = vadd.f32 0.0, %v185
  %v187 = vpop.f32.mrb[0].mxu0
  %188 = vmatprep.mubr.bf16.mxu0 0
  %189 = vmatmul.mubr.bf16.gmra.mrb[0].mxu0 %v112
  %v190 = vpop.f32.mrb[0].mxu0
  %v191 = vadd.f32 0.0, %v190
  %v192 = vpop.f32.mrb[0].mxu0
  %v193 = vpop.f32.mrb[0].mxu0
  %v194 = vadd.f32 0.0, %v193
  %v195 = vpop.f32.mrb[0].mxu0
  %196 = vmatprep.mubr.bf16.mxu0 0
  %197 = vmatmul.mubr.bf16.gmra.mrb[0].mxu0 %v115
  %v198 = vpop.f32.mrb[0].mxu0
  %v199 = vadd.f32 0.0, %v198
  %v200 = vpop.f32.mrb[0].mxu0
  %v201 = vpop.f32.mrb[0].mxu0
  %v202 = vadd.f32 0.0, %v201
  %v203 = vpop.f32.mrb[0].mxu0
  %204 = vmatprep.mubr.bf16.mxu0 0
  %205 = vmatmul.mubr.bf16.gmra.mrb[0].mxu0 %v118
  %v206 = vpop.f32.mrb[0].mxu0
  %v207 = vadd.f32 0.0, %v206
  %v208 = vpop.f32.mrb[0].mxu0
  %v209 = vpop.f32.mrb[0].mxu0
  %v210 = vpop.f32.mrb[0].mxu0
  %211 = vdwg.mxu0
  %v212 = vld [vmem:[%s1] sm:$0xf]
  %v213 = vld [vmem:[%s1 + $0x4] sm:$0xf]
  %v214 = vld [vmem:[%s1 + $0x8] sm:$0xf]
  %v215 = vld [vmem:[%s1 + $0xc] sm:$0xf]
  %v216 = vld [vmem:[%s1 + $0x10] sm:$0xf]
  %v217 = vld [vmem:[%s1 + $0x14] sm:$0xf]
  %v218 = vld [vmem:[%s1 + $0x18] sm:$0xf]
  %v219 = vld [vmem:[%s1 + $0x1c] sm:$0xf]
  %v220 = vld [vmem:[%s1 + $0x20] sm:$0xf]
  %v221 = vld [vmem:[%s1 + $0x24] sm:$0xf]
  %v222 = vld [vmem:[%s1 + $0x28] sm:$0xf]
  %v223 = vld [vmem:[%s1 + $0x2c] sm:$0xf]
  %v224 = vld [vmem:[%s1 + $0x30] sm:$0xf]
  %v238 = vunpack.c.l.b16 %v212
  %v239 = vunpack.c.l.b16 %v213
  %v240 = vunpack.c.l.b16 %v214
  %v241 = vunpack.c.l.b16 %v215
  %v242 = vunpack.c.l.b16 %v216
  %v243 = vunpack.c.l.b16 %v217
  %v244 = vunpack.c.l.b16 %v218
  %v245 = vunpack.c.l.b16 %v219
  %v246 = vunpack.c.l.b16 %v220
  %v247 = vunpack.c.l.b16 %v221
  %v248 = vunpack.c.l.b16 %v222
  %v249 = vunpack.c.l.b16 %v223
  %v250 = vunpack.c.l.b16 %v224
  %v251 = vpack.c.b16 %v239, %v238
  %v252 = vpack.c.b16 %v241, %v240
  %v253 = vpack.c.b16 %v243, %v242
  %v254 = vpack.c.b16 %v245, %v244
  %v255 = vpack.c.b16 %v247, %v246
  %v256 = vpack.c.b16 %v249, %v248
  %v257 = vpack.c.b16 %v250, %v250
  %v259 = vsel %vm98, %v251, 0
  %v262 = vsel %vm98, %v252, 0
  %v265 = vsel %vm98, %v253, 0
  %v268 = vsel %vm98, %v254, 0
  %v271 = vsel %vm98, %v255, 0
  %v274 = vsel %vm98, %v256, 0
  %v277 = vsel %vm98, %v257, 0
  %279 = vmatprep.subr.bf16.mxu0 0
  %280 = vmatpush1.bf16.msra.mxu0 %v91
  %281 = vmatprep.subr.bf16.mxu0 0
  %282 = vmatpush1.bf16.msra.mxu0 %v92
  %283 = vmatprep.subr.bf16.mxu0 0
  %284 = vmatpush1.bf16.msra.mxu0 %v93
  %285 = vmatprep.subr.bf16.mxu0 0
  %286 = vmatpush1.bf16.msra.mxu0 %v122
  %287 = vmatprep.subr.bf16.mxu0 0
  %288 = vmatpush1.bf16.msra.mxu0 0
  %289 = vmatprep.subr.bf16.mxu0 0
  %290 = vmatpush1.bf16.msra.mxu0 0
  %291 = vmatprep.subr.bf16.mxu0 0
  %292 = vmatpush1.bf16.msra.mxu0 0
  %293 = vmatprep.subr.bf16.mxu0 0
  %294 = vmatpush1.bf16.msra.mxu0 0
  %295 = vmatprep.subr.bf16.mxu0 0
  %296 = vmatpush1.bf16.msra.mxu0 0
  %297 = vmatprep.subr.bf16.mxu0 0
  %298 = vmatpush1.bf16.msra.mxu0 0
  %299 = vmatprep.subr.bf16.mxu0 0
  %300 = vmatpush1.bf16.msra.mxu0 0
  %301 = vmatprep.subr.bf16.mxu0 0
  %302 = vmatpush1.bf16.msra.mxu0 0
  %303 = vmatprep.subr.bf16.mxu0 0
  %304 = vmatpush1.bf16.msra.mxu0 0
  %305 = vmatprep.subr.bf16.mxu0 0
  %306 = vmatpush1.bf16.msra.mxu0 0
  %307 = vmatprep.subr.bf16.mxu0 0
  %308 = vmatpush1.bf16.msra.mxu0 0
  %309 = vmatprep.subr.bf16.mxu0 0
  %310 = vmatpush1.bf16.msra.mxu0 0
  %311 = vmatprep.mubr.bf16.mxu0 0
  %312 = vmatmul.mubr.bf16.gmra.mrb[0].mxu0 %v259
  %v313 = vpop.f32.mrb[0].mxu0
  %v314 = vadd.f32 0.0, %v313
  %v315 = vpop.f32.mrb[0].mxu0
  %v316 = vpop.f32.mrb[0].mxu0
  %v317 = vadd.f32 0.0, %v316
  %v318 = vpop.f32.mrb[0].mxu0
  %319 = vmatprep.mubr.bf16.mxu0 0
  %320 = vmatmul.mubr.bf16.gmra.mrb[0].mxu0 %v262
  %v321 = vpop.f32.mrb[0].mxu0
  %v322 = vadd.f32 0.0, %v321
  %v323 = vpop.f32.mrb[0].mxu0
  %v324 = vpop.f32.mrb[0].mxu0
  %v325 = vadd.f32 0.0, %v324
  %v326 = vpop.f32.mrb[0].mxu0
  %327 = vmatprep.mubr.bf16.mxu0 0
  %328 = vmatmul.mubr.bf16.gmra.mrb[0].mxu0 %v265
  %v329 = vpop.f32.mrb[0].mxu0
  %v330 = vadd.f32 0.0, %v329
  %v331 = vpop.f32.mrb[0].mxu0
  %v332 = vpop.f32.mrb[0].mxu0
  %v333 = vadd.f32 0.0, %v332
  %v334 = vpop.f32.mrb[0].mxu0
  %335 = vmatprep.mubr.bf16.mxu0 0
  %336 = vmatmul.mubr.bf16.gmra.mrb[0].mxu0 %v268
  %v337 = vpop.f32.mrb[0].mxu0
  %v338 = vadd.f32 0.0, %v337
  %v339 = vpop.f32.mrb[0].mxu0
  %v340 = vpop.f32.mrb[0].mxu0
  %v341 = vadd.f32 0.0, %v340
  %v342 = vpop.f32.mrb[0].mxu0
  %343 = vmatprep.mubr.bf16.mxu0 0
  %344 = vmatmul.mubr.bf16.gmra.mrb[0].mxu0 %v271
  %v345 = vpop.f32.mrb[0].mxu0
  %v346 = vadd.f32 0.0, %v345
  %v347 = vpop.f32.mrb[0].mxu0
  %v348 = vpop.f32.mrb[0].mxu0
  %v349 = vadd.f32 0.0, %v348
  %v350 = vpop.f32.mrb[0].mxu0
  %351 = vmatprep.mubr.bf16.mxu0 0
  %352 = vmatmul.mubr.bf16.gmra.mrb[0].mxu0 %v274
  %v353 = vpop.f32.mrb[0].mxu0
  %v354 = vadd.f32 0.0, %v353
  %v355 = vpop.f32.mrb[0].mxu0
  %v356 = vpop.f32.mrb[0].mxu0
  %v357 = vadd.f32 0.0, %v356
  %v358 = vpop.f32.mrb[0].mxu0
  %359 = vmatprep.mubr.bf16.mxu0 0
  %360 = vmatmul.mubr.bf16.gmra.mrb[0].mxu0 %v277
  %v361 = vpop.f32.mrb[0].mxu0
  %v362 = vadd.f32 0.0, %v361
  %v363 = vpop.f32.mrb[0].mxu0
  %v364 = vpop.f32.mrb[0].mxu0
  %v365 = vpop.f32.mrb[0].mxu0
  %366 = vdwg.mxu0
  %v367 = vmax.f32 %v159, %v314
  %v368 = vmax.f32 %v162, %v317
  %v369 = vmax.f32 %v167, %v322
  %v370 = vmax.f32 %v170, %v325
  %v371 = vmax.f32 %v175, %v330
  %v372 = vmax.f32 %v178, %v333
  %v373 = vmax.f32 %v183, %v338
  %v374 = vmax.f32 %v186, %v341
  %v375 = vmax.f32 %v191, %v346
  %v376 = vmax.f32 %v194, %v349
  %v377 = vmax.f32 %v199, %v354
  %v378 = vmax.f32 %v202, %v357
  %v379 = vmax.f32 %v207, %v362
  %v380 = vld [vmem:[%s2] sm:$0xf]
  %v381 = vld [vmem:[%s2 + $0x4] sm:$0xf]
  %v382 = vld [vmem:[%s2 + $0x8] sm:$0xf]
  %v383 = vld [vmem:[%s2 + $0xc] sm:$0xf]
  %v384 = vld [vmem:[%s2 + $0x10] sm:$0xf]
  %v385 = vld [vmem:[%s2 + $0x14] sm:$0xf]
  %v386 = vld [vmem:[%s2 + $0x18] sm:$0xf]
  %v387 = vld [vmem:[%s2 + $0x1c] sm:$0xf]
  %v388 = vld [vmem:[%s2 + $0x20] sm:$0xf]
  %v389 = vld [vmem:[%s2 + $0x24] sm:$0xf]
  %v390 = vld [vmem:[%s2 + $0x28] sm:$0xf]
  %v391 = vld [vmem:[%s2 + $0x2c] sm:$0xf]
  %v392 = vld [vmem:[%s2 + $0x30] sm:$0xf]
  %v406 = vunpack.c.l.b16 %v380
  %v407 = vunpack.c.l.b16 %v381
  %v408 = vunpack.c.l.b16 %v382
  %v409 = vunpack.c.l.b16 %v383
  %v410 = vunpack.c.l.b16 %v384
  %v411 = vunpack.c.l.b16 %v385
  %v412 = vunpack.c.l.b16 %v386
  %v413 = vunpack.c.l.b16 %v387
  %v414 = vunpack.c.l.b16 %v388
  %v415 = vunpack.c.l.b16 %v389
  %v416 = vunpack.c.l.b16 %v390
  %v417 = vunpack.c.l.b16 %v391
  %v418 = vunpack.c.l.b16 %v392
  %v419 = vpack.c.b16 %v407, %v406
  %v420 = vpack.c.b16 %v409, %v408
  %v421 = vpack.c.b16 %v411, %v410
  %v422 = vpack.c.b16 %v413, %v412
  %v423 = vpack.c.b16 %v415, %v414
  %v424 = vpack.c.b16 %v417, %v416
  %v425 = vpack.c.b16 %v418, %v418
  %v427 = vsel %vm98, %v419, 0
  %v430 = vsel %vm98, %v420, 0
  %v433 = vsel %vm98, %v421, 0
  %v436 = vsel %vm98, %v422, 0
  %v439 = vsel %vm98, %v423, 0
  %v442 = vsel %vm98, %v424, 0
  %v445 = vsel %vm98, %v425, 0
  %447 = vmatprep.subr.bf16.mxu0 0
  %448 = vmatpush1.bf16.msra.mxu0 %v91
  %449 = vmatprep.subr.bf16.mxu0 0
  %450 = vmatpush1.bf16.msra.mxu0 %v92
  %451 = vmatprep.subr.bf16.mxu0 0
  %452 = vmatpush1.bf16.msra.mxu0 %v93
  %453 = vmatprep.subr.bf16.mxu0 0
  %454 = vmatpush1.bf16.msra.mxu0 %v122
  %455 = vmatprep.subr.bf16.mxu0 0
  %456 = vmatpush1.bf16.msra.mxu0 0
  %457 = vmatprep.subr.bf16.mxu0 0
  %458 = vmatpush1.bf16.msra.mxu0 0
  %459 = vmatprep.subr.bf16.mxu0 0
  %460 = vmatpush1.bf16.msra.mxu0 0
  %461 = vmatprep.subr.bf16.mxu0 0
  %462 = vmatpush1.bf16.msra.mxu0 0
  %463 = vmatprep.subr.bf16.mxu0 0
  %464 = vmatpush1.bf16.msra.mxu0 0
  %465 = vmatprep.subr.bf16.mxu0 0
  %466 = vmatpush1.bf16.msra.mxu0 0
  %467 = vmatprep.subr.bf16.mxu0 0
  %468 = vmatpush1.bf16.msra.mxu0 0
  %469 = vmatprep.subr.bf16.mxu0 0
  %470 = vmatpush1.bf16.msra.mxu0 0
  %471 = vmatprep.subr.bf16.mxu0 0
  %472 = vmatpush1.bf16.msra.mxu0 0
  %473 = vmatprep.subr.bf16.mxu0 0
  %474 = vmatpush1.bf16.msra.mxu0 0
  %475 = vmatprep.subr.bf16.mxu0 0
  %476 = vmatpush1.bf16.msra.mxu0 0
  %477 = vmatprep.subr.bf16.mxu0 0
  %478 = vmatpush1.bf16.msra.mxu0 0
  %479 = vmatprep.mubr.bf16.mxu0 0
  %480 = vmatmul.mubr.bf16.gmra.mrb[0].mxu0 %v427
  %v481 = vpop.f32.mrb[0].mxu0
  %v482 = vadd.f32 0.0, %v481
  %v483 = vpop.f32.mrb[0].mxu0
  %v484 = vpop.f32.mrb[0].mxu0
  %v485 = vadd.f32 0.0, %v484
  %v486 = vpop.f32.mrb[0].mxu0
  %487 = vmatprep.mubr.bf16.mxu0 0
  %488 = vmatmul.mubr.bf16.gmra.mrb[0].mxu0 %v430
  %v489 = vpop.f32.mrb[0].mxu0
  %v490 = vadd.f32 0.0, %v489
  %v491 = vpop.f32.mrb[0].mxu0
  %v492 = vpop.f32.mrb[0].mxu0
  %v493 = vadd.f32 0.0, %v492
  %v494 = vpop.f32.mrb[0].mxu0
  %495 = vmatprep.mubr.bf16.mxu0 0
  %496 = vmatmul.mubr.bf16.gmra.mrb[0].mxu0 %v433
  %v497 = vpop.f32.mrb[0].mxu0
  %v498 = vadd.f32 0.0, %v497
  %v499 = vpop.f32.mrb[0].mxu0
  %v500 = vpop.f32.mrb[0].mxu0
  %v501 = vadd.f32 0.0, %v500
  %v502 = vpop.f32.mrb[0].mxu0
  %503 = vmatprep.mubr.bf16.mxu0 0
  %504 = vmatmul.mubr.bf16.gmra.mrb[0].mxu0 %v436
  %v505 = vpop.f32.mrb[0].mxu0
  %v506 = vadd.f32 0.0, %v505
  %v507 = vpop.f32.mrb[0].mxu0
  %v508 = vpop.f32.mrb[0].mxu0
  %v509 = vadd.f32 0.0, %v508
  %v510 = vpop.f32.mrb[0].mxu0
  %511 = vmatprep.mubr.bf16.mxu0 0
  %512 = vmatmul.mubr.bf16.gmra.mrb[0].mxu0 %v439
  %v513 = vpop.f32.mrb[0].mxu0
  %v514 = vadd.f32 0.0, %v513
  %v515 = vpop.f32.mrb[0].mxu0
  %v516 = vpop.f32.mrb[0].mxu0
  %v517 = vadd.f32 0.0, %v516
  %v518 = vpop.f32.mrb[0].mxu0
  %519 = vmatprep.mubr.bf16.mxu0 0
  %520 = vmatmul.mubr.bf16.gmra.mrb[0].mxu0 %v442
  %v521 = vpop.f32.mrb[0].mxu0
  %v522 = vadd.f32 0.0, %v521
  %v523 = vpop.f32.mrb[0].mxu0
  %v524 = vpop.f32.mrb[0].mxu0
  %v525 = vadd.f32 0.0, %v524
  %v526 = vpop.f32.mrb[0].mxu0
  %527 = vmatprep.mubr.bf16.mxu0 0
  %528 = vmatmul.mubr.bf16.gmra.mrb[0].mxu0 %v445
  %v529 = vpop.f32.mrb[0].mxu0
  %v530 = vadd.f32 0.0, %v529
  %v531 = vpop.f32.mrb[0].mxu0
  %v532 = vpop.f32.mrb[0].mxu0
  %v533 = vpop.f32.mrb[0].mxu0
  %534 = vdwg.mxu0
  %v535 = vld [vmem:[%s3] sm:$0xf]
  %v536 = vld [vmem:[%s3 + $0x4] sm:$0xf]
  %v537 = vld [vmem:[%s3 + $0x8] sm:$0xf]
  %v538 = vld [vmem:[%s3 + $0xc] sm:$0xf]
  %v539 = vld [vmem:[%s3 + $0x10] sm:$0xf]
  %v540 = vld [vmem:[%s3 + $0x14] sm:$0xf]
  %v541 = vld [vmem:[%s3 + $0x18] sm:$0xf]
  %v542 = vld [vmem:[%s3 + $0x1c] sm:$0xf]
  %v543 = vld [vmem:[%s3 + $0x20] sm:$0xf]
  %v544 = vld [vmem:[%s3 + $0x24] sm:$0xf]
  %v545 = vld [vmem:[%s3 + $0x28] sm:$0xf]
  %v546 = vld [vmem:[%s3 + $0x2c] sm:$0xf]
  %v547 = vld [vmem:[%s3 + $0x30] sm:$0xf]
  %v561 = vunpack.c.l.b16 %v535
  %v562 = vunpack.c.l.b16 %v536
  %v563 = vunpack.c.l.b16 %v537
  %v564 = vunpack.c.l.b16 %v538
  %v565 = vunpack.c.l.b16 %v539
  %v566 = vunpack.c.l.b16 %v540
  %v567 = vunpack.c.l.b16 %v541
  %v568 = vunpack.c.l.b16 %v542
  %v569 = vunpack.c.l.b16 %v543
  %v570 = vunpack.c.l.b16 %v544
  %v571 = vunpack.c.l.b16 %v545
  %v572 = vunpack.c.l.b16 %v546
  %v573 = vunpack.c.l.b16 %v547
  %v574 = vpack.c.b16 %v562, %v561
  %v575 = vpack.c.b16 %v564, %v563
  %v576 = vpack.c.b16 %v566, %v565
  %v577 = vpack.c.b16 %v568, %v567
  %v578 = vpack.c.b16 %v570, %v569
  %v579 = vpack.c.b16 %v572, %v571
  %v580 = vpack.c.b16 %v573, %v573
  %v582 = vsel %vm98, %v574, 0
  %v585 = vsel %vm98, %v575, 0
  %v588 = vsel %vm98, %v576, 0
  %v591 = vsel %vm98, %v577, 0
  %v594 = vsel %vm98, %v578, 0
  %v597 = vsel %vm98, %v579, 0
  %v600 = vsel %vm98, %v580, 0
  %602 = vmatprep.subr.bf16.mxu0 0
  %603 = vmatpush1.bf16.msra.mxu0 %v91
  %604 = vmatprep.subr.bf16.mxu0 0
  %605 = vmatpush1.bf16.msra.mxu0 %v92
  %606 = vmatprep.subr.bf16.mxu0 0
  %607 = vmatpush1.bf16.msra.mxu0 %v93
  %608 = vmatprep.subr.bf16.mxu0 0
  %609 = vmatpush1.bf16.msra.mxu0 %v122
  %610 = vmatprep.subr.bf16.mxu0 0
  %611 = vmatpush1.bf16.msra.mxu0 0
  %612 = vmatprep.subr.bf16.mxu0 0
  %613 = vmatpush1.bf16.msra.mxu0 0
  %614 = vmatprep.subr.bf16.mxu0 0
  %615 = vmatpush1.bf16.msra.mxu0 0
  %616 = vmatprep.subr.bf16.mxu0 0
  %617 = vmatpush1.bf16.msra.mxu0 0
  %618 = vmatprep.subr.bf16.mxu0 0
  %619 = vmatpush1.bf16.msra.mxu0 0
  %620 = vmatprep.subr.bf16.mxu0 0
  %621 = vmatpush1.bf16.msra.mxu0 0
  %622 = vmatprep.subr.bf16.mxu0 0
  %623 = vmatpush1.bf16.msra.mxu0 0
  %624 = vmatprep.subr.bf16.mxu0 0
  %625 = vmatpush1.bf16.msra.mxu0 0
  %626 = vmatprep.subr.bf16.mxu0 0
  %627 = vmatpush1.bf16.msra.mxu0 0
  %628 = vmatprep.subr.bf16.mxu0 0
  %629 = vmatpush1.bf16.msra.mxu0 0
  %630 = vmatprep.subr.bf16.mxu0 0
  %631 = vmatpush1.bf16.msra.mxu0 0
  %632 = vmatprep.subr.bf16.mxu0 0
  %633 = vmatpush1.bf16.msra.mxu0 0
  %634 = vmatprep.mubr.bf16.mxu0 0
  %635 = vmatmul.mubr.bf16.gmra.mrb[0].mxu0 %v582
  %v636 = vpop.f32.mrb[0].mxu0
  %v637 = vadd.f32 0.0, %v636
  %v638 = vpop.f32.mrb[0].mxu0
  %v639 = vpop.f32.mrb[0].mxu0
  %v640 = vadd.f32 0.0, %v639
  %v641 = vpop.f32.mrb[0].mxu0
  %642 = vmatprep.mubr.bf16.mxu0 0
  %643 = vmatmul.mubr.bf16.gmra.mrb[0].mxu0 %v585
  %v644 = vpop.f32.mrb[0].mxu0
  %v645 = vadd.f32 0.0, %v644
  %v646 = vpop.f32.mrb[0].mxu0
  %v647 = vpop.f32.mrb[0].mxu0
  %v648 = vadd.f32 0.0, %v647
  %v649 = vpop.f32.mrb[0].mxu0
  %650 = vmatprep.mubr.bf16.mxu0 0
  %651 = vmatmul.mubr.bf16.gmra.mrb[0].mxu0 %v588
  %v652 = vpop.f32.mrb[0].mxu0
  %v653 = vadd.f32 0.0, %v652
  %v654 = vpop.f32.mrb[0].mxu0
  %v655 = vpop.f32.mrb[0].mxu0
  %v656 = vadd.f32 0.0, %v655
  %v657 = vpop.f32.mrb[0].mxu0
  %658 = vmatprep.mubr.bf16.mxu0 0
  %659 = vmatmul.mubr.bf16.gmra.mrb[0].mxu0 %v591
  %v660 = vpop.f32.mrb[0].mxu0
  %v661 = vadd.f32 0.0, %v660
  %v662 = vpop.f32.mrb[0].mxu0
  %v663 = vpop.f32.mrb[0].mxu0
  %v664 = vadd.f32 0.0, %v663
  %v665 = vpop.f32.mrb[0].mxu0
  %666 = vmatprep.mubr.bf16.mxu0 0
  %667 = vmatmul.mubr.bf16.gmra.mrb[0].mxu0 %v594
  %v668 = vpop.f32.mrb[0].mxu0
  %v669 = vadd.f32 0.0, %v668
  %v670 = vpop.f32.mrb[0].mxu0
  %v671 = vpop.f32.mrb[0].mxu0
  %v672 = vadd.f32 0.0, %v671
  %v673 = vpop.f32.mrb[0].mxu0
  %674 = vmatprep.mubr.bf16.mxu0 0
  %675 = vmatmul.mubr.bf16.gmra.mrb[0].mxu0 %v597
  %v676 = vpop.f32.mrb[0].mxu0
  %v677 = vadd.f32 0.0, %v676
  %v678 = vpop.f32.mrb[0].mxu0
  %v679 = vpop.f32.mrb[0].mxu0
  %v680 = vadd.f32 0.0, %v679
  %v681 = vpop.f32.mrb[0].mxu0
  %682 = vmatprep.mubr.bf16.mxu0 0
  %683 = vmatmul.mubr.bf16.gmra.mrb[0].mxu0 %v600
  %v684 = vpop.f32.mrb[0].mxu0
  %v685 = vadd.f32 0.0, %v684
  %v686 = vpop.f32.mrb[0].mxu0
  %v687 = vpop.f32.mrb[0].mxu0
  %v688 = vpop.f32.mrb[0].mxu0
  %689 = vdwg.mxu0
  %v690 = vmax.f32 %v482, %v637
  %v691 = vmax.f32 %v485, %v640
  %v692 = vmax.f32 %v490, %v645
  %v693 = vmax.f32 %v493, %v648
  %v694 = vmax.f32 %v498, %v653
  %v695 = vmax.f32 %v501, %v656
  %v696 = vmax.f32 %v506, %v661
  %v697 = vmax.f32 %v509, %v664
  %v698 = vmax.f32 %v514, %v669
  %v699 = vmax.f32 %v517, %v672
  %v700 = vmax.f32 %v522, %v677
  %v701 = vmax.f32 %v525, %v680
  %v702 = vmax.f32 %v530, %v685
  %v703 = vmax.f32 %v367, %v690
  %v704 = vmax.f32 %v368, %v691
  %v705 = vmax.f32 %v369, %v692
  %v706 = vmax.f32 %v370, %v693
  %v707 = vmax.f32 %v371, %v694
  %v708 = vmax.f32 %v372, %v695
  %v709 = vmax.f32 %v373, %v696
  %v710 = vmax.f32 %v374, %v697
  %v711 = vmax.f32 %v375, %v698
  %v712 = vmax.f32 %v376, %v699
  %v713 = vmax.f32 %v377, %v700
  %v714 = vmax.f32 %v378, %v701
  %v715 = vmax.f32 %v379, %v702
  %v716 = vld [vmem:[%s5] sm:$0x1]
  %v718 = vlaneseq
  %v719 = vshrl.u32 %v718, 7
  %v720 = vsub.s32 0, %v719
  %v721 = vrot.slane %v716, %v720
  %v723 = vadd.f32 %v703, %v721
  %v724 = vadd.f32 %v704, %v721
  %v725 = vadd.f32 %v705, %v721
  %v726 = vadd.f32 %v706, %v721
  %v727 = vadd.f32 %v707, %v721
  %v728 = vadd.f32 %v708, %v721
  %v729 = vadd.f32 %v709, %v721
  %v730 = vadd.f32 %v710, %v721
  %v731 = vadd.f32 %v711, %v721
  %v732 = vadd.f32 %v712, %v721
  %v733 = vadd.f32 %v713, %v721
  %v734 = vadd.f32 %v714, %v721
  %v735 = vadd.f32 %v715, %v721
  %v736 = vmax.f32 %v723, 0.0
  %v737 = vmax.f32 %v724, 0.0
  %v738 = vmax.f32 %v725, 0.0
  %v739 = vmax.f32 %v726, 0.0
  %v740 = vmax.f32 %v727, 0.0
  %v741 = vmax.f32 %v728, 0.0
  %v742 = vmax.f32 %v729, 0.0
  %v743 = vmax.f32 %v730, 0.0
  %v744 = vmax.f32 %v731, 0.0
  %v745 = vmax.f32 %v732, 0.0
  %v746 = vmax.f32 %v733, 0.0
  %v747 = vmax.f32 %v734, 0.0
  %v748 = vmax.f32 %v735, 0.0
  %v749 = vpack.c.bf16 %v737, %v736
  %v750 = vpack.c.bf16 %v739, %v738
  %v751 = vpack.c.bf16 %v741, %v740
  %v752 = vpack.c.bf16 %v743, %v742
  %v753 = vpack.c.bf16 %v745, %v744
  %v754 = vpack.c.bf16 %v747, %v746
  %v755 = vpack.c.bf16 %v748, %v748
  %v763 = vunpack.c.l.b16 %v749
  %v764 = vunpack.c.h.b16 %v749
  %v765 = vunpack.c.l.b16 %v750
  %v766 = vunpack.c.h.b16 %v750
  %v767 = vunpack.c.l.b16 %v751
  %v768 = vunpack.c.h.b16 %v751
  %v769 = vunpack.c.l.b16 %v752
  %v770 = vunpack.c.h.b16 %v752
  %v771 = vunpack.c.l.b16 %v753
  %v772 = vunpack.c.h.b16 %v753
  %v773 = vunpack.c.l.b16 %v754
  %v774 = vunpack.c.h.b16 %v754
  %v775 = vunpack.c.l.b16 %v755
  %v776 = vpack.c.b16 %v763, %v763
  %v777 = vpack.c.b16 %v764, %v764
  %v778 = vpack.c.b16 %v765, %v765
  %v779 = vpack.c.b16 %v766, %v766
  %v780 = vpack.c.b16 %v767, %v767
  %v781 = vpack.c.b16 %v768, %v768
  %v782 = vpack.c.b16 %v769, %v769
  %v783 = vpack.c.b16 %v770, %v770
  %v784 = vpack.c.b16 %v771, %v771
  %v785 = vpack.c.b16 %v772, %v772
  %v786 = vpack.c.b16 %v773, %v773
  %v787 = vpack.c.b16 %v774, %v774
  %v788 = vpack.c.b16 %v775, %v775
  %802 = vst [vmem:[%s6] sm:$0xf] %v776
  %803 = vst [vmem:[%s6 + $0x4] sm:$0xf] %v777
  %804 = vst [vmem:[%s6 + $0x8] sm:$0xf] %v778
  %805 = vst [vmem:[%s6 + $0xc] sm:$0xf] %v779
  %806 = vst [vmem:[%s6 + $0x10] sm:$0xf] %v780
  %807 = vst [vmem:[%s6 + $0x14] sm:$0xf] %v781
  %808 = vst [vmem:[%s6 + $0x18] sm:$0xf] %v782
  %809 = vst [vmem:[%s6 + $0x1c] sm:$0xf] %v783
  %810 = vst [vmem:[%s6 + $0x20] sm:$0xf] %v784
  %811 = vst [vmem:[%s6 + $0x24] sm:$0xf] %v785
  %812 = vst [vmem:[%s6 + $0x28] sm:$0xf] %v786
  %813 = vst [vmem:[%s6 + $0x2c] sm:$0xf] %v787
  %814 = vst [vmem:[%s6 + $0x30] sm:$0xf] %v788
  // Predicated region
  $region26: #{convnn_forward.4} parent=0 // pred_check
    _
  $region27: #{convnn_forward.4} parent=0 // pred_check_branch
    %816 = sbr.rel (0) target = $region29
  $region28: #{convnn_forward.4} parent=0 // pred_region
    _
  $region29: #{convnn_forward.4} parent=0 // pred_fallthru
    _
  // Predicated region
  $region30: #{convnn_forward.4} parent=0 // pred_check
    _
  $region31: #{convnn_forward.4} parent=0 // pred_check_branch
    %818 = sbr.rel (0) target = $region33
  $region32: #{convnn_forward.4} parent=0 // pred_region
    _
  $region33: #{convnn_forward.4} parent=0 // pred_fallthru
    _

// kernel: convnn_forward.5
$region0: #{convnn_forward.5}
  #allocation0 [shape = 'u32[]', space=smem, size = 0x4, offset = 0x4, fixed_abs, tag = 'smem constant byte address 0x4 - core index']
  #allocation1 [shape = 'u32[144,128]{1,0:T(1,128)}', space=vmem, size = 0x12000, scoped, tag = 'internal scratch']
  %s0 = inlined_call_operand.vmem [shape: bf16[8,784], index: 0, kind: input, shape index: {}]
  %s1 = inlined_call_operand.vmem [shape: bf16[784,128], index: 1, kind: input, shape index: {}]
  %s2 = inlined_call_operand.vmem [shape: f32[1,128], index: 2, kind: input, shape index: {}]
  %s3 = inlined_call_operand.vmem [shape: bf16[128,128], index: 3, kind: input, shape index: {}]
  %s4 = inlined_call_operand.vmem [shape: f32[1,128], index: 4, kind: input, shape index: {}]
  %s5 = inlined_call_operand.vmem [shape: bf16[128,128], index: 5, kind: input, shape index: {}]
  %s6 = inlined_call_operand.vmem [shape: f32[1,128], index: 6, kind: input, shape index: {}]
  %s7 = inlined_call_operand.vmem [shape: f32[8,128], index: 7, kind: output, shape index: {}]
  %s8 = sld [smem:[#allocation0]]
  $region38: #{convnn_forward.5} parent=0
    _
  %s10 = ssub.s32 1, %s8
  %s11 = scalar_select 0, %s10, %s8
  // Predicated region
  $region2: #{convnn_forward.5} parent=0 // pred_check
    _
  $region3: #{convnn_forward.5} parent=0 // pred_check_branch
    %13 = sbr.rel (0) target = $region5
  $region4: #{convnn_forward.5} parent=0 // pred_region
    _
  $region5: #{convnn_forward.5} parent=0 // pred_fallthru
    _
  // Predicated region
  $region6: #{convnn_forward.5} parent=0 // pred_check
    _
  $region7: #{convnn_forward.5} parent=0 // pred_check_branch
    %15 = sbr.rel (0) target = $region9
  $region8: #{convnn_forward.5} parent=0 // pred_region
    _
  $region9: #{convnn_forward.5} parent=0 // pred_fallthru
    _
  // Predicated region
  $region10: #{convnn_forward.5} parent=0 // pred_check
    _
  $region11: #{convnn_forward.5} parent=0 // pred_check_branch
    %17 = sbr.rel (0) target = $region13
  $region12: #{convnn_forward.5} parent=0 // pred_region
    _
  $region13: #{convnn_forward.5} parent=0 // pred_fallthru
    _
  // Predicated region
  $region14: #{convnn_forward.5} parent=0 // pred_check
    _
  $region15: #{convnn_forward.5} parent=0 // pred_check_branch
    %19 = sbr.rel (0) target = $region17
  $region16: #{convnn_forward.5} parent=0 // pred_region
    _
  $region17: #{convnn_forward.5} parent=0 // pred_fallthru
    _
  // Predicated region
  $region18: #{convnn_forward.5} parent=0 // pred_check
    _
  $region19: #{convnn_forward.5} parent=0 // pred_check_branch
    %21 = sbr.rel (0) target = $region21
  $region20: #{convnn_forward.5} parent=0 // pred_region
    _
  $region21: #{convnn_forward.5} parent=0 // pred_fallthru
    _
  // Predicated region
  $region22: #{convnn_forward.5} parent=0 // pred_check
    _
  $region23: #{convnn_forward.5} parent=0 // pred_check_branch
    %23 = sbr.rel (0) target = $region25
  $region24: #{convnn_forward.5} parent=0 // pred_region
    _
  $region25: #{convnn_forward.5} parent=0 // pred_fallthru
    _
  // Predicated region
  $region26: #{convnn_forward.5} parent=0 // pred_check
    _
  $region27: #{convnn_forward.5} parent=0 // pred_check_branch
    %25 = sbr.rel (0) target = $region29
  $region28: #{convnn_forward.5} parent=0 // pred_region
    _
  $region29: #{convnn_forward.5} parent=0 // pred_fallthru
    _
  %v27 = vld [vmem:[%s0] sm:$0xff]
  %v28 = vld [vmem:[%s0 + $0x8] sm:$0xff]
  %v29 = vld [vmem:[%s0 + $0x10] sm:$0xff]
  %v30 = vld [vmem:[%s0 + $0x18] sm:$0xf]
  %v31 = vld [vmem:[%s1] sm:$0xf]
  %v32 = vld [vmem:[%s1 + $0x4] sm:$0xf]
  %v33 = vld [vmem:[%s1 + $0x8] sm:$0xf]
  %v34 = vld [vmem:[%s1 + $0xc] sm:$0xf]
  %v35 = vld [vmem:[%s1 + $0x10] sm:$0xf]
  %v36 = vld [vmem:[%s1 + $0x14] sm:$0xf]
  %v37 = vld [vmem:[%s1 + $0x18] sm:$0xf]
  %v38 = vld [vmem:[%s1 + $0x1c] sm:$0xf]
  %v39 = vld [vmem:[%s1 + $0x20] sm:$0xf]
  %v40 = vld [vmem:[%s1 + $0x24] sm:$0xf]
  %v41 = vld [vmem:[%s1 + $0x28] sm:$0xf]
  %v42 = vld [vmem:[%s1 + $0x2c] sm:$0xf]
  %v43 = vld [vmem:[%s1 + $0x30] sm:$0xf]
  %v44 = vld [vmem:[%s1 + $0x34] sm:$0xf]
  %v45 = vld [vmem:[%s1 + $0x38] sm:$0xf]
  %v46 = vld [vmem:[%s1 + $0x3c] sm:$0xf]
  %v47 = vld [vmem:[%s1 + $0x40] sm:$0xf]
  %v48 = vld [vmem:[%s1 + $0x44] sm:$0xf]
  %v49 = vld [vmem:[%s1 + $0x48] sm:$0xf]
  %v50 = vld [vmem:[%s1 + $0x4c] sm:$0xf]
  %v51 = vld [vmem:[%s1 + $0x50] sm:$0xf]
  %v52 = vld [vmem:[%s1 + $0x54] sm:$0xf]
  %v53 = vld [vmem:[%s1 + $0x58] sm:$0xf]
  %v54 = vld [vmem:[%s1 + $0x5c] sm:$0xf]
  %v55 = vld [vmem:[%s1 + $0x60] sm:$0xf]
  %v56 = vld [vmem:[%s1 + $0x64] sm:$0xf]
  %v57 = vld [vmem:[%s1 + $0x68] sm:$0xf]
  %v58 = vld [vmem:[%s1 + $0x6c] sm:$0xf]
  %v59 = vld [vmem:[%s1 + $0x70] sm:$0xf]
  %v60 = vld [vmem:[%s1 + $0x74] sm:$0xf]
  %v61 = vld [vmem:[%s1 + $0x78] sm:$0xf]
  %v62 = vld [vmem:[%s1 + $0x7c] sm:$0xf]
  %v63 = vld [vmem:[%s1 + $0x80] sm:$0xf]
  %v64 = vld [vmem:[%s1 + $0x84] sm:$0xf]
  %v65 = vld [vmem:[%s1 + $0x88] sm:$0xf]
  %v66 = vld [vmem:[%s1 + $0x8c] sm:$0xf]
  %v67 = vld [vmem:[%s1 + $0x90] sm:$0xf]
  %v68 = vld [vmem:[%s1 + $0x94] sm:$0xf]
  %v69 = vld [vmem:[%s1 + $0x98] sm:$0xf]
  %v70 = vld [vmem:[%s1 + $0x9c] sm:$0xf]
  %v71 = vld [vmem:[%s1 + $0xa0] sm:$0xf]
  %v72 = vld [vmem:[%s1 + $0xa4] sm:$0xf]
  %v73 = vld [vmem:[%s1 + $0xa8] sm:$0xf]
  %v74 = vld [vmem:[%s1 + $0xac] sm:$0xf]
  %v75 = vld [vmem:[%s1 + $0xb0] sm:$0xf]
  %v76 = vld [vmem:[%s1 + $0xb4] sm:$0xf]
  %v77 = vld [vmem:[%s1 + $0xb8] sm:$0xf]
  %v78 = vld [vmem:[%s1 + $0xbc] sm:$0xf]
  %v79 = vld [vmem:[%s1 + $0xc0] sm:$0xf]
  %v80 = vld [vmem:[%s1 + $0xc4] sm:$0xf]
  %v81 = vld [vmem:[%s1 + $0xc8] sm:$0xf]
  %v82 = vld [vmem:[%s1 + $0xcc] sm:$0xf]
  %v83 = vld [vmem:[%s1 + $0xd0] sm:$0xf]
  %v84 = vld [vmem:[%s1 + $0xd4] sm:$0xf]
  %v85 = vld [vmem:[%s1 + $0xd8] sm:$0xf]
  %v86 = vld [vmem:[%s1 + $0xdc] sm:$0xf]
  %v87 = vld [vmem:[%s1 + $0xe0] sm:$0xf]
  %v88 = vld [vmem:[%s1 + $0xe4] sm:$0xf]
  %v89 = vld [vmem:[%s1 + $0xe8] sm:$0xf]
  %v90 = vld [vmem:[%s1 + $0xec] sm:$0xf]
  %v91 = vld [vmem:[%s1 + $0xf0] sm:$0xf]
  %v92 = vld [vmem:[%s1 + $0xf4] sm:$0xf]
  %v93 = vld [vmem:[%s1 + $0xf8] sm:$0xf]
  %v94 = vld [vmem:[%s1 + $0xfc] sm:$0xf]
  %v95 = vld [vmem:[%s1 + $0x100] sm:$0xf]
  %v96 = vld [vmem:[%s1 + $0x104] sm:$0xf]
  %v97 = vld [vmem:[%s1 + $0x108] sm:$0xf]
  %v98 = vld [vmem:[%s1 + $0x10c] sm:$0xf]
  %v99 = vld [vmem:[%s1 + $0x110] sm:$0xf]
  %v100 = vld [vmem:[%s1 + $0x114] sm:$0xf]
  %v101 = vld [vmem:[%s1 + $0x118] sm:$0xf]
  %v102 = vld [vmem:[%s1 + $0x11c] sm:$0xf]
  %v103 = vld [vmem:[%s1 + $0x120] sm:$0xf]
  %v104 = vld [vmem:[%s1 + $0x124] sm:$0xf]
  %v105 = vld [vmem:[%s1 + $0x128] sm:$0xf]
  %v106 = vld [vmem:[%s1 + $0x12c] sm:$0xf]
  %v107 = vld [vmem:[%s1 + $0x130] sm:$0xf]
  %v108 = vld [vmem:[%s1 + $0x134] sm:$0xf]
  %v109 = vld [vmem:[%s1 + $0x138] sm:$0xf]
  %v110 = vld [vmem:[%s1 + $0x13c] sm:$0xf]
  %v111 = vld [vmem:[%s1 + $0x140] sm:$0xf]
  %v112 = vld [vmem:[%s1 + $0x144] sm:$0xf]
  %v113 = vld [vmem:[%s1 + $0x148] sm:$0xf]
  %v114 = vld [vmem:[%s1 + $0x14c] sm:$0xf]
  %v115 = vld [vmem:[%s1 + $0x150] sm:$0xf]
  %v116 = vld [vmem:[%s1 + $0x154] sm:$0xf]
  %v117 = vld [vmem:[%s1 + $0x158] sm:$0xf]
  %v118 = vld [vmem:[%s1 + $0x15c] sm:$0xf]
  %v119 = vld [vmem:[%s1 + $0x160] sm:$0xf]
  %v120 = vld [vmem:[%s1 + $0x164] sm:$0xf]
  %v121 = vld [vmem:[%s1 + $0x168] sm:$0xf]
  %v122 = vld [vmem:[%s1 + $0x16c] sm:$0xf]
  %v123 = vld [vmem:[%s1 + $0x170] sm:$0xf]
  %v124 = vld [vmem:[%s1 + $0x174] sm:$0xf]
  %v125 = vld [vmem:[%s1 + $0x178] sm:$0xf]
  %v126 = vld [vmem:[%s1 + $0x17c] sm:$0xf]
  %v127 = vld [vmem:[%s1 + $0x180] sm:$0xf]
  %v128 = vld [vmem:[%s1 + $0x184] sm:$0xf]
  %v129 = vld [vmem:[%s2] sm:$0x1]
  %v131 = vlaneseq
  %v132 = vshrl.u32 %v131, 7
  %v133 = vsub.s32 0, %v132
  %v134 = vrot.slane %v129, %v133
  %v140 = vunpack.c.l.b16 %v27
  %v141 = vunpack.c.h.b16 %v27
  %v142 = vunpack.c.l.b16 %v28
  %v143 = vunpack.c.h.b16 %v28
  %v144 = vunpack.c.l.b16 %v29
  %v145 = vunpack.c.h.b16 %v29
  %v146 = vunpack.c.l.b16 %v30
  %v147 = vpack.c.b16 %v140, %v140
  %v148 = vpack.c.b16 %v141, %v141
  %v149 = vpack.c.b16 %v142, %v142
  %v150 = vpack.c.b16 %v143, %v143
  %v151 = vpack.c.b16 %v144, %v144
  %v152 = vpack.c.b16 %v145, %v145
  %v153 = vpack.c.b16 %v146, %v146
  %v258 = vunpack.c.l.b16 %v31
  %v259 = vunpack.c.l.b16 %v32
  %v260 = vunpack.c.l.b16 %v33
  %v261 = vunpack.c.l.b16 %v34
  %v262 = vunpack.c.l.b16 %v35
  %v263 = vunpack.c.l.b16 %v36
  %v264 = vunpack.c.l.b16 %v37
  %v265 = vunpack.c.l.b16 %v38
  %v266 = vunpack.c.l.b16 %v39
  %v267 = vunpack.c.l.b16 %v40
  %v268 = vunpack.c.l.b16 %v41
  %v269 = vunpack.c.l.b16 %v42
  %v270 = vunpack.c.l.b16 %v43
  %v271 = vunpack.c.l.b16 %v44
  %v272 = vunpack.c.l.b16 %v45
  %v273 = vunpack.c.l.b16 %v46
  %v274 = vunpack.c.l.b16 %v47
  %v275 = vunpack.c.l.b16 %v48
  %v276 = vunpack.c.l.b16 %v49
  %v277 = vunpack.c.l.b16 %v50
  %v278 = vunpack.c.l.b16 %v51
  %v279 = vunpack.c.l.b16 %v52
  %v280 = vunpack.c.l.b16 %v53
  %v281 = vunpack.c.l.b16 %v54
  %v282 = vunpack.c.l.b16 %v55
  %v283 = vunpack.c.l.b16 %v56
  %v284 = vunpack.c.l.b16 %v57
  %v285 = vunpack.c.l.b16 %v58
  %v286 = vunpack.c.l.b16 %v59
  %v287 = vunpack.c.l.b16 %v60
  %v288 = vunpack.c.l.b16 %v61
  %v289 = vunpack.c.l.b16 %v62
  %v290 = vunpack.c.l.b16 %v63
  %v291 = vunpack.c.l.b16 %v64
  %v292 = vunpack.c.l.b16 %v65
  %v293 = vunpack.c.l.b16 %v66
  %v294 = vunpack.c.l.b16 %v67
  %v295 = vunpack.c.l.b16 %v68
  %v296 = vunpack.c.l.b16 %v69
  %v297 = vunpack.c.l.b16 %v70
  %v298 = vunpack.c.l.b16 %v71
  %v299 = vunpack.c.l.b16 %v72
  %v300 = vunpack.c.l.b16 %v73
  %v301 = vunpack.c.l.b16 %v74
  %v302 = vunpack.c.l.b16 %v75
  %v303 = vunpack.c.l.b16 %v76
  %v304 = vunpack.c.l.b16 %v77
  %v305 = vunpack.c.l.b16 %v78
  %v306 = vunpack.c.l.b16 %v79
  %v307 = vunpack.c.l.b16 %v80
  %v308 = vunpack.c.l.b16 %v81
  %v309 = vunpack.c.l.b16 %v82
  %v310 = vunpack.c.l.b16 %v83
  %v311 = vunpack.c.l.b16 %v84
  %v312 = vunpack.c.l.b16 %v85
  %v313 = vunpack.c.l.b16 %v86
  %v314 = vunpack.c.l.b16 %v87
  %v315 = vunpack.c.l.b16 %v88
  %v316 = vunpack.c.l.b16 %v89
  %v317 = vunpack.c.l.b16 %v90
  %v318 = vunpack.c.l.b16 %v91
  %v319 = vunpack.c.l.b16 %v92
  %v320 = vunpack.c.l.b16 %v93
  %v321 = vunpack.c.l.b16 %v94
  %v322 = vunpack.c.l.b16 %v95
  %v323 = vunpack.c.l.b16 %v96
  %v324 = vunpack.c.l.b16 %v97
  %v325 = vunpack.c.l.b16 %v98
  %v326 = vunpack.c.l.b16 %v99
  %v327 = vunpack.c.l.b16 %v100
  %v328 = vunpack.c.l.b16 %v101
  %v329 = vunpack.c.l.b16 %v102
  %v330 = vunpack.c.l.b16 %v103
  %v331 = vunpack.c.l.b16 %v104
  %v332 = vunpack.c.l.b16 %v105
  %v333 = vunpack.c.l.b16 %v106
  %v334 = vunpack.c.l.b16 %v107
  %v335 = vunpack.c.l.b16 %v108
  %v336 = vunpack.c.l.b16 %v109
  %v337 = vunpack.c.l.b16 %v110
  %v338 = vunpack.c.l.b16 %v111
  %v339 = vunpack.c.l.b16 %v112
  %v340 = vunpack.c.l.b16 %v113
  %v341 = vunpack.c.l.b16 %v114
  %v342 = vunpack.c.l.b16 %v115
  %v343 = vunpack.c.l.b16 %v116
  %v344 = vunpack.c.l.b16 %v117
  %v345 = vunpack.c.l.b16 %v118
  %v346 = vunpack.c.l.b16 %v119
  %v347 = vunpack.c.l.b16 %v120
  %v348 = vunpack.c.l.b16 %v121
  %v349 = vunpack.c.l.b16 %v122
  %v350 = vunpack.c.l.b16 %v123
  %v351 = vunpack.c.l.b16 %v124
  %v352 = vunpack.c.l.b16 %v125
  %v353 = vunpack.c.l.b16 %v126
  %v354 = vunpack.c.l.b16 %v127
  %v355 = vunpack.c.l.b16 %v128
  %v356 = vpack.c.b16 %v259, %v258
  %v357 = vpack.c.b16 %v261, %v260
  %v358 = vpack.c.b16 %v263, %v262
  %v359 = vpack.c.b16 %v265, %v264
  %v360 = vpack.c.b16 %v267, %v266
  %v361 = vpack.c.b16 %v269, %v268
  %v362 = vpack.c.b16 %v271, %v270
  %v363 = vpack.c.b16 %v273, %v272
  %v364 = vpack.c.b16 %v275, %v274
  %v365 = vpack.c.b16 %v277, %v276
  %v366 = vpack.c.b16 %v279, %v278
  %v367 = vpack.c.b16 %v281, %v280
  %v368 = vpack.c.b16 %v283, %v282
  %v369 = vpack.c.b16 %v285, %v284
  %v370 = vpack.c.b16 %v287, %v286
  %v371 = vpack.c.b16 %v289, %v288
  %v372 = vpack.c.b16 %v291, %v290
  %v373 = vpack.c.b16 %v293, %v292
  %v374 = vpack.c.b16 %v295, %v294
  %v375 = vpack.c.b16 %v297, %v296
  %v376 = vpack.c.b16 %v299, %v298
  %v377 = vpack.c.b16 %v301, %v300
  %v378 = vpack.c.b16 %v303, %v302
  %v379 = vpack.c.b16 %v305, %v304
  %v380 = vpack.c.b16 %v307, %v306
  %v381 = vpack.c.b16 %v309, %v308
  %v382 = vpack.c.b16 %v311, %v310
  %v383 = vpack.c.b16 %v313, %v312
  %v384 = vpack.c.b16 %v315, %v314
  %v385 = vpack.c.b16 %v317, %v316
  %v386 = vpack.c.b16 %v319, %v318
  %v387 = vpack.c.b16 %v321, %v320
  %v388 = vpack.c.b16 %v323, %v322
  %v389 = vpack.c.b16 %v325, %v324
  %v390 = vpack.c.b16 %v327, %v326
  %v391 = vpack.c.b16 %v329, %v328
  %v392 = vpack.c.b16 %v331, %v330
  %v393 = vpack.c.b16 %v333, %v332
  %v394 = vpack.c.b16 %v335, %v334
  %v395 = vpack.c.b16 %v337, %v336
  %v396 = vpack.c.b16 %v339, %v338
  %v397 = vpack.c.b16 %v341, %v340
  %v398 = vpack.c.b16 %v343, %v342
  %v399 = vpack.c.b16 %v345, %v344
  %v400 = vpack.c.b16 %v347, %v346
  %v401 = vpack.c.b16 %v349, %v348
  %v402 = vpack.c.b16 %v351, %v350
  %v403 = vpack.c.b16 %v353, %v352
  %v404 = vpack.c.b16 %v355, %v354
  %vm454 = vcmask 130048
  %v456 = vsel %vm454, %v153, 0
  %458 = vmatprep.subr.bf16.mxu0 0
  %459 = vmatpush1.bf16.msra.mxu0 %v356
  %460 = vmatprep.subr.bf16.mxu0 0
  %461 = vmatpush1.bf16.msra.mxu0 %v357
  %462 = vmatprep.subr.bf16.mxu0 0
  %463 = vmatpush1.bf16.msra.mxu0 %v358
  %464 = vmatprep.subr.bf16.mxu0 0
  %465 = vmatpush1.bf16.msra.mxu0 %v359
  %466 = vmatprep.subr.bf16.mxu0 0
  %467 = vmatpush1.bf16.msra.mxu0 %v360
  %468 = vmatprep.subr.bf16.mxu0 0
  %469 = vmatpush1.bf16.msra.mxu0 %v361
  %470 = vmatprep.subr.bf16.mxu0 0
  %471 = vmatpush1.bf16.msra.mxu0 %v362
  %472 = vmatprep.subr.bf16.mxu0 0
  %473 = vmatpush1.bf16.msra.mxu0 %v363
  %474 = vmatprep.subr.bf16.mxu0 0
  %475 = vmatpush1.bf16.msra.mxu0 %v364
  %476 = vmatprep.subr.bf16.mxu0 0
  %477 = vmatpush1.bf16.msra.mxu0 %v365
  %478 = vmatprep.subr.bf16.mxu0 0
  %479 = vmatpush1.bf16.msra.mxu0 %v366
  %480 = vmatprep.subr.bf16.mxu0 0
  %481 = vmatpush1.bf16.msra.mxu0 %v367
  %482 = vmatprep.subr.bf16.mxu0 0
  %483 = vmatpush1.bf16.msra.mxu0 %v368
  %484 = vmatprep.subr.bf16.mxu0 0
  %485 = vmatpush1.bf16.msra.mxu0 %v369
  %486 = vmatprep.subr.bf16.mxu0 0
  %487 = vmatpush1.bf16.msra.mxu0 %v370
  %488 = vmatprep.subr.bf16.mxu0 0
  %489 = vmatpush1.bf16.msra.mxu0 %v371
  %490 = vmatprep.mubr.bf16.mxu0 %v148
  %491 = vmatmul.mubr.bf16.gmra.mrb[0].mxu0 %v147
  %v492 = vpop.f32.mrb[0].mxu0
  %v493 = vadd.f32 %v134, %v492
  %v494 = vpop.f32.mrb[0].mxu0
  %v495 = vpop.f32.mrb[0].mxu0
  %v496 = vpop.f32.mrb[0].mxu0
  %497 = vdwg.mxu0
  %498 = vmatprep.subr.bf16.mxu0 0
  %499 = vmatpush1.bf16.msra.mxu0 %v372
  %500 = vmatprep.subr.bf16.mxu0 0
  %501 = vmatpush1.bf16.msra.mxu0 %v373
  %502 = vmatprep.subr.bf16.mxu0 0
  %503 = vmatpush1.bf16.msra.mxu0 %v374
  %504 = vmatprep.subr.bf16.mxu0 0
  %505 = vmatpush1.bf16.msra.mxu0 %v375
  %506 = vmatprep.subr.bf16.mxu0 0
  %507 = vmatpush1.bf16.msra.mxu0 %v376
  %508 = vmatprep.subr.bf16.mxu0 0
  %509 = vmatpush1.bf16.msra.mxu0 %v377
  %510 = vmatprep.subr.bf16.mxu0 0
  %511 = vmatpush1.bf16.msra.mxu0 %v378
  %512 = vmatprep.subr.bf16.mxu0 0
  %513 = vmatpush1.bf16.msra.mxu0 %v379
  %514 = vmatprep.subr.bf16.mxu0 0
  %515 = vmatpush1.bf16.msra.mxu0 %v380
  %516 = vmatprep.subr.bf16.mxu0 0
  %517 = vmatpush1.bf16.msra.mxu0 %v381
  %518 = vmatprep.subr.bf16.mxu0 0
  %519 = vmatpush1.bf16.msra.mxu0 %v382
  %520 = vmatprep.subr.bf16.mxu0 0
  %521 = vmatpush1.bf16.msra.mxu0 %v383
  %522 = vmatprep.subr.bf16.mxu0 0
  %523 = vmatpush1.bf16.msra.mxu0 %v384
  %524 = vmatprep.subr.bf16.mxu0 0
  %525 = vmatpush1.bf16.msra.mxu0 %v385
  %526 = vmatprep.subr.bf16.mxu0 0
  %527 = vmatpush1.bf16.msra.mxu0 %v386
  %528 = vmatprep.subr.bf16.mxu0 0
  %529 = vmatpush1.bf16.msra.mxu0 %v387
  %530 = vmatprep.mubr.bf16.mxu0 %v150
  %531 = vmatmul.mubr.bf16.gmra.mrb[0].mxu0 %v149
  %v532 = vpop.f32.mrb[0].mxu0
  %v533 = vadd.f32 %v493, %v532
  %v534 = vpop.f32.mrb[0].mxu0
  %v535 = vpop.f32.mrb[0].mxu0
  %v536 = vpop.f32.mrb[0].mxu0
  %537 = vdwg.mxu0
  %538 = vmatprep.subr.bf16.mxu0 0
  %539 = vmatpush1.bf16.msra.mxu0 %v388
  %540 = vmatprep.subr.bf16.mxu0 0
  %541 = vmatpush1.bf16.msra.mxu0 %v389
  %542 = vmatprep.subr.bf16.mxu0 0
  %543 = vmatpush1.bf16.msra.mxu0 %v390
  %544 = vmatprep.subr.bf16.mxu0 0
  %545 = vmatpush1.bf16.msra.mxu0 %v391
  %546 = vmatprep.subr.bf16.mxu0 0
  %547 = vmatpush1.bf16.msra.mxu0 %v392
  %548 = vmatprep.subr.bf16.mxu0 0
  %549 = vmatpush1.bf16.msra.mxu0 %v393
  %550 = vmatprep.subr.bf16.mxu0 0
  %551 = vmatpush1.bf16.msra.mxu0 %v394
  %552 = vmatprep.subr.bf16.mxu0 0
  %553 = vmatpush1.bf16.msra.mxu0 %v395
  %554 = vmatprep.subr.bf16.mxu0 0
  %555 = vmatpush1.bf16.msra.mxu0 %v396
  %556 = vmatprep.subr.bf16.mxu0 0
  %557 = vmatpush1.bf16.msra.mxu0 %v397
  %558 = vmatprep.subr.bf16.mxu0 0
  %559 = vmatpush1.bf16.msra.mxu0 %v398
  %560 = vmatprep.subr.bf16.mxu0 0
  %561 = vmatpush1.bf16.msra.mxu0 %v399
  %562 = vmatprep.subr.bf16.mxu0 0
  %563 = vmatpush1.bf16.msra.mxu0 %v400
  %564 = vmatprep.subr.bf16.mxu0 0
  %565 = vmatpush1.bf16.msra.mxu0 %v401
  %566 = vmatprep.subr.bf16.mxu0 0
  %567 = vmatpush1.bf16.msra.mxu0 %v402
  %568 = vmatprep.subr.bf16.mxu0 0
  %569 = vmatpush1.bf16.msra.mxu0 %v403
  %570 = vmatprep.mubr.bf16.mxu0 %v152
  %571 = vmatmul.mubr.bf16.gmra.mrb[0].mxu0 %v151
  %v572 = vpop.f32.mrb[0].mxu0
  %v573 = vadd.f32 %v533, %v572
  %v574 = vpop.f32.mrb[0].mxu0
  %v575 = vpop.f32.mrb[0].mxu0
  %v576 = vpop.f32.mrb[0].mxu0
  %577 = vdwg.mxu0
  %578 = vmatprep.subr.bf16.mxu0 0
  %579 = vmatpush1.bf16.msra.mxu0 %v404
  %580 = vmatprep.subr.bf16.mxu0 0
  %581 = vmatpush1.bf16.msra.mxu0 0
  %582 = vmatprep.subr.bf16.mxu0 0
  %583 = vmatpush1.bf16.msra.mxu0 0
  %584 = vmatprep.subr.bf16.mxu0 0
  %585 = vmatpush1.bf16.msra.mxu0 0
  %586 = vmatprep.subr.bf16.mxu0 0
  %587 = vmatpush1.bf16.msra.mxu0 0
  %588 = vmatprep.subr.bf16.mxu0 0
  %589 = vmatpush1.bf16.msra.mxu0 0
  %590 = vmatprep.subr.bf16.mxu0 0
  %591 = vmatpush1.bf16.msra.mxu0 0
  %592 = vmatprep.subr.bf16.mxu0 0
  %593 = vmatpush1.bf16.msra.mxu0 0
  %594 = vmatprep.subr.bf16.mxu0 0
  %595 = vmatpush1.bf16.msra.mxu0 0
  %596 = vmatprep.subr.bf16.mxu0 0
  %597 = vmatpush1.bf16.msra.mxu0 0
  %598 = vmatprep.subr.bf16.mxu0 0
  %599 = vmatpush1.bf16.msra.mxu0 0
  %600 = vmatprep.subr.bf16.mxu0 0
  %601 = vmatpush1.bf16.msra.mxu0 0
  %602 = vmatprep.subr.bf16.mxu0 0
  %603 = vmatpush1.bf16.msra.mxu0 0
  %604 = vmatprep.subr.bf16.mxu0 0
  %605 = vmatpush1.bf16.msra.mxu0 0
  %606 = vmatprep.subr.bf16.mxu0 0
  %607 = vmatpush1.bf16.msra.mxu0 0
  %608 = vmatprep.subr.bf16.mxu0 0
  %609 = vmatpush1.bf16.msra.mxu0 0
  %610 = vmatprep.mubr.bf16.mxu0 0
  %611 = vmatmul.mubr.bf16.gmra.mrb[0].mxu0 %v456
  %v612 = vpop.f32.mrb[0].mxu0
  %v613 = vadd.f32 %v573, %v612
  %v614 = vpop.f32.mrb[0].mxu0
  %v615 = vpop.f32.mrb[0].mxu0
  %v616 = vpop.f32.mrb[0].mxu0
  %617 = vdwg.mxu0
  %v618 = vmax.f32 %v613, 0.0
  %v619 = vpack.c.bf16 %v618, %v618
  %v620 = vld [vmem:[%s3] sm:$0xf]
  %v621 = vld [vmem:[%s3 + $0x4] sm:$0xf]
  %v622 = vld [vmem:[%s3 + $0x8] sm:$0xf]
  %v623 = vld [vmem:[%s3 + $0xc] sm:$0xf]
  %v624 = vld [vmem:[%s3 + $0x10] sm:$0xf]
  %v625 = vld [vmem:[%s3 + $0x14] sm:$0xf]
  %v626 = vld [vmem:[%s3 + $0x18] sm:$0xf]
  %v627 = vld [vmem:[%s3 + $0x1c] sm:$0xf]
  %v628 = vld [vmem:[%s3 + $0x20] sm:$0xf]
  %v629 = vld [vmem:[%s3 + $0x24] sm:$0xf]
  %v630 = vld [vmem:[%s3 + $0x28] sm:$0xf]
  %v631 = vld [vmem:[%s3 + $0x2c] sm:$0xf]
  %v632 = vld [vmem:[%s3 + $0x30] sm:$0xf]
  %v633 = vld [vmem:[%s3 + $0x34] sm:$0xf]
  %v634 = vld [vmem:[%s3 + $0x38] sm:$0xf]
  %v635 = vld [vmem:[%s3 + $0x3c] sm:$0xf]
  %v636 = vld [vmem:[%s4] sm:$0x1]
  %v638 = vlaneseq
  %v639 = vshrl.u32 %v638, 7
  %v640 = vsub.s32 0, %v639
  %v641 = vrot.slane %v636, %v640
  %v659 = vunpack.c.l.b16 %v620
  %v660 = vunpack.c.l.b16 %v621
  %v661 = vunpack.c.l.b16 %v622
  %v662 = vunpack.c.l.b16 %v623
  %v663 = vunpack.c.l.b16 %v624
  %v664 = vunpack.c.l.b16 %v625
  %v665 = vunpack.c.l.b16 %v626
  %v666 = vunpack.c.l.b16 %v627
  %v667 = vunpack.c.l.b16 %v628
  %v668 = vunpack.c.l.b16 %v629
  %v669 = vunpack.c.l.b16 %v630
  %v670 = vunpack.c.l.b16 %v631
  %v671 = vunpack.c.l.b16 %v632
  %v672 = vunpack.c.l.b16 %v633
  %v673 = vunpack.c.l.b16 %v634
  %v674 = vunpack.c.l.b16 %v635
  %v675 = vpack.c.b16 %v660, %v659
  %v676 = vpack.c.b16 %v662, %v661
  %v677 = vpack.c.b16 %v664, %v663
  %v678 = vpack.c.b16 %v666, %v665
  %v679 = vpack.c.b16 %v668, %v667
  %v680 = vpack.c.b16 %v670, %v669
  %v681 = vpack.c.b16 %v672, %v671
  %v682 = vpack.c.b16 %v674, %v673
  %691 = vmatprep.subr.bf16.mxu0 0
  %692 = vmatpush1.bf16.msra.mxu0 %v675
  %693 = vmatprep.subr.bf16.mxu0 0
  %694 = vmatpush1.bf16.msra.mxu0 %v676
  %695 = vmatprep.subr.bf16.mxu0 0
  %696 = vmatpush1.bf16.msra.mxu0 %v677
  %697 = vmatprep.subr.bf16.mxu0 0
  %698 = vmatpush1.bf16.msra.mxu0 %v678
  %699 = vmatprep.subr.bf16.mxu0 0
  %700 = vmatpush1.bf16.msra.mxu0 %v679
  %701 = vmatprep.subr.bf16.mxu0 0
  %702 = vmatpush1.bf16.msra.mxu0 %v680
  %703 = vmatprep.subr.bf16.mxu0 0
  %704 = vmatpush1.bf16.msra.mxu0 %v681
  %705 = vmatprep.subr.bf16.mxu0 0
  %706 = vmatpush1.bf16.msra.mxu0 %v682
  %707 = vmatprep.subr.bf16.mxu0 0
  %708 = vmatpush1.bf16.msra.mxu0 0
  %709 = vmatprep.subr.bf16.mxu0 0
  %710 = vmatpush1.bf16.msra.mxu0 0
  %711 = vmatprep.subr.bf16.mxu0 0
  %712 = vmatpush1.bf16.msra.mxu0 0
  %713 = vmatprep.subr.bf16.mxu0 0
  %714 = vmatpush1.bf16.msra.mxu0 0
  %715 = vmatprep.subr.bf16.mxu0 0
  %716 = vmatpush1.bf16.msra.mxu0 0
  %717 = vmatprep.subr.bf16.mxu0 0
  %718 = vmatpush1.bf16.msra.mxu0 0
  %719 = vmatprep.subr.bf16.mxu0 0
  %720 = vmatpush1.bf16.msra.mxu0 0
  %721 = vmatprep.subr.bf16.mxu0 0
  %722 = vmatpush1.bf16.msra.mxu0 0
  %723 = vmatprep.mubr.bf16.mxu0 0
  %724 = vmatmul.mubr.bf16.gmra.mrb[0].mxu0 %v619
  %v725 = vpop.f32.mrb[0].mxu0
  %v726 = vadd.f32 %v641, %v725
  %v727 = vpop.f32.mrb[0].mxu0
  %v728 = vpop.f32.mrb[0].mxu0
  %v729 = vpop.f32.mrb[0].mxu0
  %730 = vdwg.mxu0
  %v731 = vmax.f32 %v726, 0.0
  %v732 = vpack.c.bf16 %v731, %v731
  %v733 = vld [vmem:[%s5] sm:$0xf]
  %v734 = vld [vmem:[%s5 + $0x4] sm:$0xf]
  %v735 = vld [vmem:[%s5 + $0x8] sm:$0xf]
  %v736 = vld [vmem:[%s5 + $0xc] sm:$0xf]
  %v737 = vld [vmem:[%s5 + $0x10] sm:$0xf]
  %v738 = vld [vmem:[%s5 + $0x14] sm:$0xf]
  %v739 = vld [vmem:[%s5 + $0x18] sm:$0xf]
  %v740 = vld [vmem:[%s5 + $0x1c] sm:$0xf]
  %v741 = vld [vmem:[%s5 + $0x20] sm:$0xf]
  %v742 = vld [vmem:[%s5 + $0x24] sm:$0xf]
  %v743 = vld [vmem:[%s5 + $0x28] sm:$0xf]
  %v744 = vld [vmem:[%s5 + $0x2c] sm:$0xf]
  %v745 = vld [vmem:[%s5 + $0x30] sm:$0xf]
  %v746 = vld [vmem:[%s5 + $0x34] sm:$0xf]
  %v747 = vld [vmem:[%s5 + $0x38] sm:$0xf]
  %v748 = vld [vmem:[%s5 + $0x3c] sm:$0xf]
  %v749 = vld [vmem:[%s6] sm:$0x1]
  %v751 = vlaneseq
  %v752 = vshrl.u32 %v751, 7
  %v753 = vsub.s32 0, %v752
  %v754 = vrot.slane %v749, %v753
  %v772 = vunpack.c.l.b16 %v733
  %v773 = vunpack.c.l.b16 %v734
  %v774 = vunpack.c.l.b16 %v735
  %v775 = vunpack.c.l.b16 %v736
  %v776 = vunpack.c.l.b16 %v737
  %v777 = vunpack.c.l.b16 %v738
  %v778 = vunpack.c.l.b16 %v739
  %v779 = vunpack.c.l.b16 %v740
  %v780 = vunpack.c.l.b16 %v741
  %v781 = vunpack.c.l.b16 %v742
  %v782 = vunpack.c.l.b16 %v743
  %v783 = vunpack.c.l.b16 %v744
  %v784 = vunpack.c.l.b16 %v745
  %v785 = vunpack.c.l.b16 %v746
  %v786 = vunpack.c.l.b16 %v747
  %v787 = vunpack.c.l.b16 %v748
  %v788 = vpack.c.b16 %v773, %v772
  %v789 = vpack.c.b16 %v775, %v774
  %v790 = vpack.c.b16 %v777, %v776
  %v791 = vpack.c.b16 %v779, %v778
  %v792 = vpack.c.b16 %v781, %v780
  %v793 = vpack.c.b16 %v783, %v782
  %v794 = vpack.c.b16 %v785, %v784
  %v795 = vpack.c.b16 %v787, %v786
  %804 = vmatprep.subr.bf16.mxu0 0
  %805 = vmatpush1.bf16.msra.mxu0 %v788
  %806 = vmatprep.subr.bf16.mxu0 0
  %807 = vmatpush1.bf16.msra.mxu0 %v789
  %808 = vmatprep.subr.bf16.mxu0 0
  %809 = vmatpush1.bf16.msra.mxu0 %v790
  %810 = vmatprep.subr.bf16.mxu0 0
  %811 = vmatpush1.bf16.msra.mxu0 %v791
  %812 = vmatprep.subr.bf16.mxu0 0
  %813 = vmatpush1.bf16.msra.mxu0 %v792
  %814 = vmatprep.subr.bf16.mxu0 0
  %815 = vmatpush1.bf16.msra.mxu0 %v793
  %816 = vmatprep.subr.bf16.mxu0 0
  %817 = vmatpush1.bf16.msra.mxu0 %v794
  %818 = vmatprep.subr.bf16.mxu0 0
  %819 = vmatpush1.bf16.msra.mxu0 %v795
  %820 = vmatprep.subr.bf16.mxu0 0
  %821 = vmatpush1.bf16.msra.mxu0 0
  %822 = vmatprep.subr.bf16.mxu0 0
  %823 = vmatpush1.bf16.msra.mxu0 0
  %824 = vmatprep.subr.bf16.mxu0 0
  %825 = vmatpush1.bf16.msra.mxu0 0
  %826 = vmatprep.subr.bf16.mxu0 0
  %827 = vmatpush1.bf16.msra.mxu0 0
  %828 = vmatprep.subr.bf16.mxu0 0
  %829 = vmatpush1.bf16.msra.mxu0 0
  %830 = vmatprep.subr.bf16.mxu0 0
  %831 = vmatpush1.bf16.msra.mxu0 0
  %832 = vmatprep.subr.bf16.mxu0 0
  %833 = vmatpush1.bf16.msra.mxu0 0
  %834 = vmatprep.subr.bf16.mxu0 0
  %835 = vmatpush1.bf16.msra.mxu0 0
  %836 = vmatprep.mubr.bf16.mxu0 0
  %837 = vmatmul.mubr.bf16.gmra.mrb[0].mxu0 %v732
  %v838 = vpop.f32.mrb[0].mxu0
  %v839 = vadd.f32 %v754, %v838
  %v840 = vpop.f32.mrb[0].mxu0
  %v841 = vpop.f32.mrb[0].mxu0
  %v842 = vpop.f32.mrb[0].mxu0
  %843 = vdwg.mxu0
  %844 = vst [vmem:[%s7] sm:$0xff] %v839
  // Predicated region
  $region30: #{convnn_forward.5} parent=0 // pred_check
    _
  $region31: #{convnn_forward.5} parent=0 // pred_check_branch
    %846 = sbr.rel (0) target = $region33
  $region32: #{convnn_forward.5} parent=0 // pred_region
    _
  $region33: #{convnn_forward.5} parent=0 // pred_fallthru
    _
  // Predicated region
  $region34: #{convnn_forward.5} parent=0 // pred_check
    _
  $region35: #{convnn_forward.5} parent=0 // pred_check_branch
    %848 = sbr.rel (0) target = $region37
  $region36: #{convnn_forward.5} parent=0 // pred_region
    _
  $region37: #{convnn_forward.5} parent=0 // pred_fallthru
    _

</llo_original>
